<compile_context>
chip_gen: v7x
topology: tpu7x:2x2x1
jax: 0.10.0
libtpu: 0.0.40
codegen_flags: <defaults>
</compile_context>

<pallas_src>
import functools

import jax
import jax.numpy as jnp
from jax.experimental import pallas as pl
from jax.experimental.pallas import tpu as pltpu

KH, KW = 5, 5
PAD = 2


def _relu_dwconv_kernel(x_ref, w_ref, o_ref, xpad_ref, wpad_ref,
                        k0_ref, k1_ref, k2_ref, k3_ref, k4_ref,
                        *, width, s, off, racc):
    """One (batch, channel-block) grid step.

    x_ref:    (CB, S)      pre-ReLU input block, channels on sublanes (NCHW layout)
    w_ref:    (CB, 25)     per-channel 5x5 taps
    o_ref:    (CB, S)      output block (NCHW layout)
    xpad_ref: (CB, SSTAGE) staging buffer -> transpose operand is an exact (8,128) multiple
    wpad_ref: (CB, 128)    staging buffer for the weight relayout
    k*_ref:   (SPAD, CB)   5 kw-masked, halo-padded copies of relu(x), spatial on SUBLANES
    """
    kw_refs = (k0_ref, k1_ref, k2_ref, k3_ref, k4_ref)
    cb = x_ref.shape[0]
    spad = k0_ref.shape[0]

    # --- fused ReLU + one-time relayout (channels, spatial) -> (spatial, channels) -----
    # The staging buffer's tail columns are never read after the slice below.
    xpad_ref[:, :s] = jnp.maximum(x_ref[...], 0.0).astype(jnp.float32)
    xt = xpad_ref[...].T[:s, :]                        # (S, CB): spatial rows, channel lanes

    # --- weights relaid to (tap, channel): per-tap rows broadcast over sublanes ---------
    wpad_ref[:, :KH * KW] = w_ref[...].astype(jnp.float32)
    wt = wpad_ref[...].T[:KH * KW, :]                  # (25, CB)

    # --- build the 5 kw-masked copies; zero halo rows supply the conv's h zero-padding --
    col = jax.lax.broadcasted_iota(jnp.int32, (s, 1), 0) % width
    zeros_lo = jnp.zeros((off, cb), jnp.float32)
    zeros_hi = jnp.zeros((spad - off - s, cb), jnp.float32)
    for kw in range(KW):
        ref = kw_refs[kw]
        ref[:off, :] = zeros_lo                        # halo rows (cheap: ~45 stores/step)
        ref[off + s:, :] = zeros_hi
        dw = kw - PAD
        if dw == 0:                                    # kw == 2: mask is all-true, skip it
            ref[off:off + s, :] = xt
        else:
            valid = (col >= dw) & (col <= (width - 1) + dw)
            ref[off:off + s, :] = jnp.where(valid, xt, 0.0)

    # --- 25-tap shifted multiply-accumulate; every shift is a sublane (row) offset ------
    acc = None
    for kh in range(KH):
        for kw in range(KW):
            lo = off + (kh - PAD) * width + (kw - PAD)         # static row offset
            win = kw_refs[kw][lo:lo + racc, :]                 # (RACC, CB) aligned load
            wk = wt[kh * KW + kw:kh * KW + kw + 1, :]          # (1, CB) sublane broadcast
            term = win * wk
            acc = term if acc is None else acc + term

    # --- back to (channels, spatial) and store ------------------------------------------
    o_ref[...] = acc.T[:, :s].astype(o_ref.dtype)


def relu_dwconv2d(x_nchw, w_oihw, *, block_c=128):
    """ReLU + depthwise 5x5 conv (stride 1, pad 2, groups=C, no bias). NCHW in / NCHW out."""
    n, c, h, w = x_nchw.shape
    assert w_oihw.shape == (c, 1, KH, KW)
    assert block_c % 8 == 0 and c % 8 == 0
    s = h * w
    halo = PAD * w + PAD                          # largest |row shift| of any tap
    off = ((halo + 7) // 8) * 8                   # data starts at this scratch row
    racc = ((s + 7) // 8) * 8                     # accumulate a few extra (discarded) rows
    spad = ((off + halo + racc + 7) // 8) * 8     # scratch rows
    sstage = ((s + 127) // 128) * 128             # staging width for the aligned transpose

    c_blocks = pl.cdiv(c, block_c)                # ragged last block handled by Pallas
    grid = (n, c_blocks)

    # Free reshapes only -- no wrapper transpose / pad / extra HBM passes.
    x2 = x_nchw.reshape(n, c, s)
    w2 = w_oihw.reshape(c, KH * KW)

    kernel = functools.partial(_relu_dwconv_kernel, width=w, s=s, off=off, racc=racc)

    out = pl.pallas_call(
        kernel,
        out_shape=jax.ShapeDtypeStruct((n, c, s), x_nchw.dtype),
        grid=grid,
        in_specs=[
            pl.BlockSpec((None, block_c, s), lambda b, i: (b, i, 0)),
            pl.BlockSpec((block_c, KH * KW), lambda b, i: (i, 0)),
        ],
        out_specs=pl.BlockSpec((None, block_c, s), lambda b, i: (b, i, 0)),
        scratch_shapes=(
            [pltpu.VMEM((block_c, sstage), jnp.float32),   # x relayout staging
             pltpu.VMEM((block_c, 128), jnp.float32)]      # w relayout staging
            + [pltpu.VMEM((spad, block_c), jnp.float32) for _ in range(KW)]),
        compiler_params=pltpu.CompilerParams(
            dimension_semantics=("parallel", "parallel")),  # independent blocks -> megacore
    )(x2, w2)
    return out.reshape(n, c, h, w)


def _reference(x_nchw, w_oihw):
    """Pure-JAX reference: ReLU + depthwise conv via lax.conv_general_dilated."""
    c = x_nchw.shape[1]
    x = jnp.maximum(x_nchw, 0.0)
    return jax.lax.conv_general_dilated(
        x, w_oihw,
        window_strides=(1, 1),
        padding=((PAD, PAD), (PAD, PAD)),
        dimension_numbers=("NCHW", "OIHW", "NCHW"),
        feature_group_count=c,
        precision=jax.lax.Precision.HIGHEST,
    )


if __name__ == "__main__":
    key = jax.random.PRNGKey(0)
    kx, kwgt = jax.random.split(key)

    N, C, H, W = 1, 288, 14, 14  # shapes implied by the module
    x = jax.random.normal(kx, (N, C, H, W), dtype=jnp.float32)
    wgt = jax.random.normal(kwgt, (C, 1, KH, KW), dtype=jnp.float32) * 0.05

    out = jax.block_until_ready(relu_dwconv2d(x, wgt))
    ref = jax.block_until_ready(_reference(x, wgt))

    assert out.shape == (N, C, H, W)
    err = float(jnp.max(jnp.abs(out - ref)))
    assert err < 2e-4, f"mismatch vs reference: max abs err = {err}"

    print("KERNEL_OK")
</pallas_src>

<mosaic_0001>
module attributes {stable_mosaic.version = 11 : i64} {
  func.func @_relu_dwconv_kernel(%arg0: i32, %arg1: i32, %arg2: memref<1x128x196xf32, #tpu.memory_space<vmem>>, %arg3: memref<128x25xf32, #tpu.memory_space<vmem>>, %arg4: memref<1x128x196xf32, #tpu.memory_space<vmem>>, %arg5: memref<128x256xf32, #tpu.memory_space<vmem>>, %arg6: memref<128x128xf32, #tpu.memory_space<vmem>>, %arg7: memref<264x128xf32, #tpu.memory_space<vmem>>, %arg8: memref<264x128xf32, #tpu.memory_space<vmem>>, %arg9: memref<264x128xf32, #tpu.memory_space<vmem>>, %arg10: memref<264x128xf32, #tpu.memory_space<vmem>>, %arg11: memref<264x128xf32, #tpu.memory_space<vmem>>) attributes {dimension_semantics = [#tpu.dimension_semantics<parallel>, #tpu.dimension_semantics<parallel>], iteration_bounds = array<i64: 1, 3>, scalar_prefetch = 0 : i64, scratch_operands = 7 : i64, tpu.core_type = #tpu.core_type<tc>, window_params = [{transform_indices = @transform_0, window_bounds = array<i64: 1, 128, 196>}, {transform_indices = @transform_1, window_bounds = array<i64: 128, 25>}, {transform_indices = @transform_2, window_bounds = array<i64: 1, 128, 196>}]} {
    %c0 = arith.constant 0 : index
    %c0_0 = arith.constant 0 : index
    %c0_1 = arith.constant 0 : index
    %0 = vector.load %arg2[%c0, %c0_0, %c0_1] : memref<1x128x196xf32, #tpu.memory_space<vmem>>, vector<1x128x196xf32>
    %1 = vector.shape_cast %0 : vector<1x128x196xf32> to vector<128x196xf32>
    %cst = arith.constant 0.000000e+00 : f32
    %2 = vector.broadcast %cst : f32 to vector<128x196xf32>
    %3 = arith.maximumf %1, %2 : vector<128x196xf32>
    %c0_2 = arith.constant 0 : index
    %c0_3 = arith.constant 0 : index
    %4 = vector.load %arg5[%c0_2, %c0_3] : memref<128x256xf32, #tpu.memory_space<vmem>>, vector<128x196xf32>
    tpu.vector_store %arg5[%c0_2, %c0_3], %3 {strides = array<i32>} : memref<128x256xf32, #tpu.memory_space<vmem>>, vector<128x196xf32>,
    %c0_4 = arith.constant 0 : index
    %c0_5 = arith.constant 0 : index
    %5 = vector.load %arg5[%c0_4, %c0_5] : memref<128x256xf32, #tpu.memory_space<vmem>>, vector<128x256xf32>
    %6 = tpu.transpose %5, [1, 0] : vector<128x256xf32> -> vector<256x128xf32>
    %7 = vector.extract_strided_slice %6 {offsets = [0, 0], sizes = [196, 128], strides = [1, 1]} : vector<256x128xf32> to vector<196x128xf32>
    %c0_6 = arith.constant 0 : index
    %c0_7 = arith.constant 0 : index
    %8 = vector.load %arg3[%c0_6, %c0_7] : memref<128x25xf32, #tpu.memory_space<vmem>>, vector<128x25xf32>
    %c0_8 = arith.constant 0 : index
    %c0_9 = arith.constant 0 : index
    %9 = vector.load %arg6[%c0_8, %c0_9] : memref<128x128xf32, #tpu.memory_space<vmem>>, vector<128x25xf32>
    tpu.vector_store %arg6[%c0_8, %c0_9], %8 {strides = array<i32>} : memref<128x128xf32, #tpu.memory_space<vmem>>, vector<128x25xf32>,
    %c0_10 = arith.constant 0 : index
    %c0_11 = arith.constant 0 : index
    %10 = vector.load %arg6[%c0_10, %c0_11] : memref<128x128xf32, #tpu.memory_space<vmem>>, vector<128x128xf32>
    %11 = tpu.transpose %10, [1, 0] : vector<128x128xf32> -> vector<128x128xf32>
    %12 = vector.extract_strided_slice %11 {offsets = [0, 0], sizes = [25, 128], strides = [1, 1]} : vector<128x128xf32> to vector<25x128xf32>
    %13 = tpu.iota {dimensions = array<i32: 0>} : vector<196x1xi32>
    %c14_i32 = arith.constant 14 : i32
    %c0_i32 = arith.constant 0 : i32
    %14 = arith.cmpi eq, %c14_i32, %c0_i32 : i32
    %c1_i32 = arith.constant 1 : i32
    %15 = arith.select %14, %c1_i32, %c14_i32 : i32
    %16 = vector.broadcast %15 : i32 to vector<196x1xi32>
    %17 = arith.remsi %13, %16 : vector<196x1xi32>
    %c0_i32_12 = arith.constant 0 : i32
    %18 = vector.broadcast %c0_i32_12 : i32 to vector<196x1xi32>
    %19 = arith.cmpi ne, %17, %18 : vector<196x1xi32>
    %c0_i32_13 = arith.constant 0 : i32
    %20 = vector.broadcast %c0_i32_13 : i32 to vector<196x1xi32>
    %21 = arith.cmpi slt, %17, %20 : vector<196x1xi32>
    %c0_i32_14 = arith.constant 0 : i32
    %22 = arith.cmpi slt, %15, %c0_i32_14 : i32
    %23 = vector.broadcast %22 : i1 to vector<196x1xi1>
    %24 = vector.broadcast %23 : vector<196x1xi1> to vector<196x1xi1>
    %25 = arith.xori %21, %24 : vector<196x1xi1>
    %26 = arith.andi %25, %19 : vector<196x1xi1>
    %27 = vector.broadcast %15 : i32 to vector<196x1xi32>
    %28 = arith.addi %17, %27 : vector<196x1xi32>
    %29 = arith.select %26, %28, %17 : vector<196x1xi1>, vector<196x1xi32>
    %cst_15 = arith.constant 0.000000e+00 : f32
    %30 = vector.broadcast %cst_15 : f32 to vector<32x128xf32>
    %cst_16 = arith.constant 0.000000e+00 : f32
    %31 = vector.broadcast %cst_16 : f32 to vector<36x128xf32>
    %c0_17 = arith.constant 0 : index
    %c0_18 = arith.constant 0 : index
    %32 = vector.load %arg7[%c0_17, %c0_18] : memref<264x128xf32, #tpu.memory_space<vmem>>, vector<32x128xf32>
    tpu.vector_store %arg7[%c0_17, %c0_18], %30 {strides = array<i32>} : memref<264x128xf32, #tpu.memory_space<vmem>>, vector<32x128xf32>,
    %c228 = arith.constant 228 : index
    %c0_19 = arith.constant 0 : index
    %33 = vector.load %arg7[%c228, %c0_19] : memref<264x128xf32, #tpu.memory_space<vmem>>, vector<36x128xf32>
    tpu.vector_store %arg7[%c228, %c0_19], %31 {strides = array<i32>} : memref<264x128xf32, #tpu.memory_space<vmem>>, vector<36x128xf32>,
    %c-2_i32 = arith.constant -2 : i32
    %34 = vector.broadcast %c-2_i32 : i32 to vector<196x1xi32>
    %35 = arith.cmpi sge, %29, %34 : vector<196x1xi32>
    %c11_i32 = arith.constant 11 : i32
    %36 = vector.broadcast %c11_i32 : i32 to vector<196x1xi32>
    %37 = arith.cmpi sle, %29, %36 : vector<196x1xi32>
    %38 = arith.andi %35, %37 : vector<196x1xi1>
    %cst_20 = arith.constant 0.000000e+00 : f32
    %39 = vector.shape_cast %38 : vector<196x1xi1> to vector<196x1xi1>
    %40 = vector.broadcast %39 : vector<196x1xi1> to vector<196x128xi1>
    %41 = vector.broadcast %cst_20 : f32 to vector<196x128xf32>
    %42 = arith.select %40, %7, %41 : vector<196x128xi1>, vector<196x128xf32>
    %c32 = arith.constant 32 : index
    %c0_21 = arith.constant 0 : index
    %43 = vector.load %arg7[%c32, %c0_21] : memref<264x128xf32, #tpu.memory_space<vmem>>, vector<196x128xf32>
    tpu.vector_store %arg7[%c32, %c0_21], %42 {strides = array<i32>} : memref<264x128xf32, #tpu.memory_space<vmem>>, vector<196x128xf32>,
    %c0_22 = arith.constant 0 : index
    %c0_23 = arith.constant 0 : index
    %44 = vector.load %arg8[%c0_22, %c0_23] : memref<264x128xf32, #tpu.memory_space<vmem>>, vector<32x128xf32>
    tpu.vector_store %arg8[%c0_22, %c0_23], %30 {strides = array<i32>} : memref<264x128xf32, #tpu.memory_space<vmem>>, vector<32x128xf32>,
    %c228_24 = arith.constant 228 : index
    %c0_25 = arith.constant 0 : index
    %45 = vector.load %arg8[%c228_24, %c0_25] : memref<264x128xf32, #tpu.memory_space<vmem>>, vector<36x128xf32>
    tpu.vector_store %arg8[%c228_24, %c0_25], %31 {strides = array<i32>} : memref<264x128xf32, #tpu.memory_space<vmem>>, vector<36x128xf32>,
    %c-1_i32 = arith.constant -1 : i32
    %46 = vector.broadcast %c-1_i32 : i32 to vector<196x1xi32>
    %47 = arith.cmpi sge, %29, %46 : vector<196x1xi32>
    %c12_i32 = arith.constant 12 : i32
    %48 = vector.broadcast %c12_i32 : i32 to vector<196x1xi32>
    %49 = arith.cmpi sle, %29, %48 : vector<196x1xi32>
    %50 = arith.andi %47, %49 : vector<196x1xi1>
    %cst_26 = arith.constant 0.000000e+00 : f32
    %51 = vector.shape_cast %50 : vector<196x1xi1> to vector<196x1xi1>
    %52 = vector.broadcast %51 : vector<196x1xi1> to vector<196x128xi1>
    %53 = vector.broadcast %cst_26 : f32 to vector<196x128xf32>
    %54 = arith.select %52, %7, %53 : vector<196x128xi1>, vector<196x128xf32>
    %c32_27 = arith.constant 32 : index
    %c0_28 = arith.constant 0 : index
    %55 = vector.load %arg8[%c32_27, %c0_28] : memref<264x128xf32, #tpu.memory_space<vmem>>, vector<196x128xf32>
    tpu.vector_store %arg8[%c32_27, %c0_28], %54 {strides = array<i32>} : memref<264x128xf32, #tpu.memory_space<vmem>>, vector<196x128xf32>,
    %c0_29 = arith.constant 0 : index
    %c0_30 = arith.constant 0 : index
    %56 = vector.load %arg9[%c0_29, %c0_30] : memref<264x128xf32, #tpu.memory_space<vmem>>, vector<32x128xf32>
    tpu.vector_store %arg9[%c0_29, %c0_30], %30 {strides = array<i32>} : memref<264x128xf32, #tpu.memory_space<vmem>>, vector<32x128xf32>,
    %c228_31 = arith.constant 228 : index
    %c0_32 = arith.constant 0 : index
    %57 = vector.load %arg9[%c228_31, %c0_32] : memref<264x128xf32, #tpu.memory_space<vmem>>, vector<36x128xf32>
    tpu.vector_store %arg9[%c228_31, %c0_32], %31 {strides = array<i32>} : memref<264x128xf32, #tpu.memory_space<vmem>>, vector<36x128xf32>,
    %c32_33 = arith.constant 32 : index
    %c0_34 = arith.constant 0 : index
    %58 = vector.load %arg9[%c32_33, %c0_34] : memref<264x128xf32, #tpu.memory_space<vmem>>, vector<196x128xf32>
    tpu.vector_store %arg9[%c32_33, %c0_34], %7 {strides = array<i32>} : memref<264x128xf32, #tpu.memory_space<vmem>>, vector<196x128xf32>,
    %c0_35 = arith.constant 0 : index
    %c0_36 = arith.constant 0 : index
    %59 = vector.load %arg10[%c0_35, %c0_36] : memref<264x128xf32, #tpu.memory_space<vmem>>, vector<32x128xf32>
    tpu.vector_store %arg10[%c0_35, %c0_36], %30 {strides = array<i32>} : memref<264x128xf32, #tpu.memory_space<vmem>>, vector<32x128xf32>,
    %c228_37 = arith.constant 228 : index
    %c0_38 = arith.constant 0 : index
    %60 = vector.load %arg10[%c228_37, %c0_38] : memref<264x128xf32, #tpu.memory_space<vmem>>, vector<36x128xf32>
    tpu.vector_store %arg10[%c228_37, %c0_38], %31 {strides = array<i32>} : memref<264x128xf32, #tpu.memory_space<vmem>>, vector<36x128xf32>,
    %c1_i32_39 = arith.constant 1 : i32
    %61 = vector.broadcast %c1_i32_39 : i32 to vector<196x1xi32>
    %62 = arith.cmpi sge, %29, %61 : vector<196x1xi32>
    %c14_i32_40 = arith.constant 14 : i32
    %63 = vector.broadcast %c14_i32_40 : i32 to vector<196x1xi32>
    %64 = arith.cmpi sle, %29, %63 : vector<196x1xi32>
    %65 = arith.andi %62, %64 : vector<196x1xi1>
    %cst_41 = arith.constant 0.000000e+00 : f32
    %66 = vector.shape_cast %65 : vector<196x1xi1> to vector<196x1xi1>
    %67 = vector.broadcast %66 : vector<196x1xi1> to vector<196x128xi1>
    %68 = vector.broadcast %cst_41 : f32 to vector<196x128xf32>
    %69 = arith.select %67, %7, %68 : vector<196x128xi1>, vector<196x128xf32>
    %c32_42 = arith.constant 32 : index
    %c0_43 = arith.constant 0 : index
    %70 = vector.load %arg10[%c32_42, %c0_43] : memref<264x128xf32, #tpu.memory_space<vmem>>, vector<196x128xf32>
    tpu.vector_store %arg10[%c32_42, %c0_43], %69 {strides = array<i32>} : memref<264x128xf32, #tpu.memory_space<vmem>>, vector<196x128xf32>,
    %c0_44 = arith.constant 0 : index
    %c0_45 = arith.constant 0 : index
    %71 = vector.load %arg11[%c0_44, %c0_45] : memref<264x128xf32, #tpu.memory_space<vmem>>, vector<32x128xf32>
    tpu.vector_store %arg11[%c0_44, %c0_45], %30 {strides = array<i32>} : memref<264x128xf32, #tpu.memory_space<vmem>>, vector<32x128xf32>,
    %c228_46 = arith.constant 228 : index
    %c0_47 = arith.constant 0 : index
    %72 = vector.load %arg11[%c228_46, %c0_47] : memref<264x128xf32, #tpu.memory_space<vmem>>, vector<36x128xf32>
    tpu.vector_store %arg11[%c228_46, %c0_47], %31 {strides = array<i32>} : memref<264x128xf32, #tpu.memory_space<vmem>>, vector<36x128xf32>,
    %c2_i32 = arith.constant 2 : i32
    %73 = vector.broadcast %c2_i32 : i32 to vector<196x1xi32>
    %74 = arith.cmpi sge, %29, %73 : vector<196x1xi32>
    %c15_i32 = arith.constant 15 : i32
    %75 = vector.broadcast %c15_i32 : i32 to vector<196x1xi32>
    %76 = arith.cmpi sle, %29, %75 : vector<196x1xi32>
    %77 = arith.andi %74, %76 : vector<196x1xi1>
    %cst_48 = arith.constant 0.000000e+00 : f32
    %78 = vector.shape_cast %77 : vector<196x1xi1> to vector<196x1xi1>
    %79 = vector.broadcast %78 : vector<196x1xi1> to vector<196x128xi1>
    %80 = vector.broadcast %cst_48 : f32 to vector<196x128xf32>
    %81 = arith.select %79, %7, %80 : vector<196x128xi1>, vector<196x128xf32>
    %c32_49 = arith.constant 32 : index
    %c0_50 = arith.constant 0 : index
    %82 = vector.load %arg11[%c32_49, %c0_50] : memref<264x128xf32, #tpu.memory_space<vmem>>, vector<196x128xf32>
    tpu.vector_store %arg11[%c32_49, %c0_50], %81 {strides = array<i32>} : memref<264x128xf32, #tpu.memory_space<vmem>>, vector<196x128xf32>,
    %c2 = arith.constant 2 : index
    %c0_51 = arith.constant 0 : index
    %83 = vector.load %arg7[%c2, %c0_51] : memref<264x128xf32, #tpu.memory_space<vmem>>, vector<200x128xf32>
    %84 = vector.extract_strided_slice %12 {offsets = [0, 0], sizes = [1, 128], strides = [1, 1]} : vector<25x128xf32> to vector<1x128xf32>
    %85 = vector.broadcast %84 : vector<1x128xf32> to vector<200x128xf32>
    %86 = arith.mulf %83, %85 : vector<200x128xf32>
    %c3 = arith.constant 3 : index
    %c0_52 = arith.constant 0 : index
    %87 = vector.load %arg8[%c3, %c0_52] : memref<264x128xf32, #tpu.memory_space<vmem>>, vector<200x128xf32>
    %88 = vector.extract_strided_slice %12 {offsets = [1, 0], sizes = [1, 128], strides = [1, 1]} : vector<25x128xf32> to vector<1x128xf32>
    %89 = vector.broadcast %88 : vector<1x128xf32> to vector<200x128xf32>
    %90 = arith.mulf %87, %89 : vector<200x128xf32>
    %91 = arith.addf %86, %90 : vector<200x128xf32>
    %c4 = arith.constant 4 : index
    %c0_53 = arith.constant 0 : index
    %92 = vector.load %arg9[%c4, %c0_53] : memref<264x128xf32, #tpu.memory_space<vmem>>, vector<200x128xf32>
    %93 = vector.extract_strided_slice %12 {offsets = [2, 0], sizes = [1, 128], strides = [1, 1]} : vector<25x128xf32> to vector<1x128xf32>
    %94 = vector.broadcast %93 : vector<1x128xf32> to vector<200x128xf32>
    %95 = arith.mulf %92, %94 : vector<200x128xf32>
    %96 = arith.addf %91, %95 : vector<200x128xf32>
    %c5 = arith.constant 5 : index
    %c0_54 = arith.constant 0 : index
    %97 = vector.load %arg10[%c5, %c0_54] : memref<264x128xf32, #tpu.memory_space<vmem>>, vector<200x128xf32>
    %98 = vector.extract_strided_slice %12 {offsets = [3, 0], sizes = [1, 128], strides = [1, 1]} : vector<25x128xf32> to vector<1x128xf32>
    %99 = vector.broadcast %98 : vector<1x128xf32> to vector<200x128xf32>
    %100 = arith.mulf %97, %99 : vector<200x128xf32>
    %101 = arith.addf %96, %100 : vector<200x128xf32>
    %c6 = arith.constant 6 : index
    %c0_55 = arith.constant 0 : index
    %102 = vector.load %arg11[%c6, %c0_55] : memref<264x128xf32, #tpu.memory_space<vmem>>, vector<200x128xf32>
    %103 = vector.extract_strided_slice %12 {offsets = [4, 0], sizes = [1, 128], strides = [1, 1]} : vector<25x128xf32> to vector<1x128xf32>
    %104 = vector.broadcast %103 : vector<1x128xf32> to vector<200x128xf32>
    %105 = arith.mulf %102, %104 : vector<200x128xf32>
    %106 = arith.addf %101, %105 : vector<200x128xf32>
    %c16 = arith.constant 16 : index
    %c0_56 = arith.constant 0 : index
    %107 = vector.load %arg7[%c16, %c0_56] : memref<264x128xf32, #tpu.memory_space<vmem>>, vector<200x128xf32>
    %108 = vector.extract_strided_slice %12 {offsets = [5, 0], sizes = [1, 128], strides = [1, 1]} : vector<25x128xf32> to vector<1x128xf32>
    %109 = vector.broadcast %108 : vector<1x128xf32> to vector<200x128xf32>
    %110 = arith.mulf %107, %109 : vector<200x128xf32>
    %111 = arith.addf %106, %110 : vector<200x128xf32>
    %c17 = arith.constant 17 : index
    %c0_57 = arith.constant 0 : index
    %112 = vector.load %arg8[%c17, %c0_57] : memref<264x128xf32, #tpu.memory_space<vmem>>, vector<200x128xf32>
    %113 = vector.extract_strided_slice %12 {offsets = [6, 0], sizes = [1, 128], strides = [1, 1]} : vector<25x128xf32> to vector<1x128xf32>
    %114 = vector.broadcast %113 : vector<1x128xf32> to vector<200x128xf32>
    %115 = arith.mulf %112, %114 : vector<200x128xf32>
    %116 = arith.addf %111, %115 : vector<200x128xf32>
    %c18 = arith.constant 18 : index
    %c0_58 = arith.constant 0 : index
    %117 = vector.load %arg9[%c18, %c0_58] : memref<264x128xf32, #tpu.memory_space<vmem>>, vector<200x128xf32>
    %118 = vector.extract_strided_slice %12 {offsets = [7, 0], sizes = [1, 128], strides = [1, 1]} : vector<25x128xf32> to vector<1x128xf32>
    %119 = vector.broadcast %118 : vector<1x128xf32> to vector<200x128xf32>
    %120 = arith.mulf %117, %119 : vector<200x128xf32>
    %121 = arith.addf %116, %120 : vector<200x128xf32>
    %c19 = arith.constant 19 : index
    %c0_59 = arith.constant 0 : index
    %122 = vector.load %arg10[%c19, %c0_59] : memref<264x128xf32, #tpu.memory_space<vmem>>, vector<200x128xf32>
    %123 = vector.extract_strided_slice %12 {offsets = [8, 0], sizes = [1, 128], strides = [1, 1]} : vector<25x128xf32> to vector<1x128xf32>
    %124 = vector.broadcast %123 : vector<1x128xf32> to vector<200x128xf32>
    %125 = arith.mulf %122, %124 : vector<200x128xf32>
    %126 = arith.addf %121, %125 : vector<200x128xf32>
    %c20 = arith.constant 20 : index
    %c0_60 = arith.constant 0 : index
    %127 = vector.load %arg11[%c20, %c0_60] : memref<264x128xf32, #tpu.memory_space<vmem>>, vector<200x128xf32>
    %128 = vector.extract_strided_slice %12 {offsets = [9, 0], sizes = [1, 128], strides = [1, 1]} : vector<25x128xf32> to vector<1x128xf32>
    %129 = vector.broadcast %128 : vector<1x128xf32> to vector<200x128xf32>
    %130 = arith.mulf %127, %129 : vector<200x128xf32>
    %131 = arith.addf %126, %130 : vector<200x128xf32>
    %c30 = arith.constant 30 : index
    %c0_61 = arith.constant 0 : index
    %132 = vector.load %arg7[%c30, %c0_61] : memref<264x128xf32, #tpu.memory_space<vmem>>, vector<200x128xf32>
    %133 = vector.extract_strided_slice %12 {offsets = [10, 0], sizes = [1, 128], strides = [1, 1]} : vector<25x128xf32> to vector<1x128xf32>
    %134 = vector.broadcast %133 : vector<1x128xf32> to vector<200x128xf32>
    %135 = arith.mulf %132, %134 : vector<200x128xf32>
    %136 = arith.addf %131, %135 : vector<200x128xf32>
    %c31 = arith.constant 31 : index
    %c0_62 = arith.constant 0 : index
    %137 = vector.load %arg8[%c31, %c0_62] : memref<264x128xf32, #tpu.memory_space<vmem>>, vector<200x128xf32>
    %138 = vector.extract_strided_slice %12 {offsets = [11, 0], sizes = [1, 128], strides = [1, 1]} : vector<25x128xf32> to vector<1x128xf32>
    %139 = vector.broadcast %138 : vector<1x128xf32> to vector<200x128xf32>
    %140 = arith.mulf %137, %139 : vector<200x128xf32>
    %141 = arith.addf %136, %140 : vector<200x128xf32>
    %c32_63 = arith.constant 32 : index
    %c0_64 = arith.constant 0 : index
    %142 = vector.load %arg9[%c32_63, %c0_64] : memref<264x128xf32, #tpu.memory_space<vmem>>, vector<200x128xf32>
    %143 = vector.extract_strided_slice %12 {offsets = [12, 0], sizes = [1, 128], strides = [1, 1]} : vector<25x128xf32> to vector<1x128xf32>
    %144 = vector.broadcast %143 : vector<1x128xf32> to vector<200x128xf32>
    %145 = arith.mulf %142, %144 : vector<200x128xf32>
    %146 = arith.addf %141, %145 : vector<200x128xf32>
    %c33 = arith.constant 33 : index
    %c0_65 = arith.constant 0 : index
    %147 = vector.load %arg10[%c33, %c0_65] : memref<264x128xf32, #tpu.memory_space<vmem>>, vector<200x128xf32>
    %148 = vector.extract_strided_slice %12 {offsets = [13, 0], sizes = [1, 128], strides = [1, 1]} : vector<25x128xf32> to vector<1x128xf32>
    %149 = vector.broadcast %148 : vector<1x128xf32> to vector<200x128xf32>
    %150 = arith.mulf %147, %149 : vector<200x128xf32>
    %151 = arith.addf %146, %150 : vector<200x128xf32>
    %c34 = arith.constant 34 : index
    %c0_66 = arith.constant 0 : index
    %152 = vector.load %arg11[%c34, %c0_66] : memref<264x128xf32, #tpu.memory_space<vmem>>, vector<200x128xf32>
    %153 = vector.extract_strided_slice %12 {offsets = [14, 0], sizes = [1, 128], strides = [1, 1]} : vector<25x128xf32> to vector<1x128xf32>
    %154 = vector.broadcast %153 : vector<1x128xf32> to vector<200x128xf32>
    %155 = arith.mulf %152, %154 : vector<200x128xf32>
    %156 = arith.addf %151, %155 : vector<200x128xf32>
    %c44 = arith.constant 44 : index
    %c0_67 = arith.constant 0 : index
    %157 = vector.load %arg7[%c44, %c0_67] : memref<264x128xf32, #tpu.memory_space<vmem>>, vector<200x128xf32>
    %158 = vector.extract_strided_slice %12 {offsets = [15, 0], sizes = [1, 128], strides = [1, 1]} : vector<25x128xf32> to vector<1x128xf32>
    %159 = vector.broadcast %158 : vector<1x128xf32> to vector<200x128xf32>
    %160 = arith.mulf %157, %159 : vector<200x128xf32>
    %161 = arith.addf %156, %160 : vector<200x128xf32>
    %c45 = arith.constant 45 : index
    %c0_68 = arith.constant 0 : index
    %162 = vector.load %arg8[%c45, %c0_68] : memref<264x128xf32, #tpu.memory_space<vmem>>, vector<200x128xf32>
    %163 = vector.extract_strided_slice %12 {offsets = [16, 0], sizes = [1, 128], strides = [1, 1]} : vector<25x128xf32> to vector<1x128xf32>
    %164 = vector.broadcast %163 : vector<1x128xf32> to vector<200x128xf32>
    %165 = arith.mulf %162, %164 : vector<200x128xf32>
    %166 = arith.addf %161, %165 : vector<200x128xf32>
    %c46 = arith.constant 46 : index
    %c0_69 = arith.constant 0 : index
    %167 = vector.load %arg9[%c46, %c0_69] : memref<264x128xf32, #tpu.memory_space<vmem>>, vector<200x128xf32>
    %168 = vector.extract_strided_slice %12 {offsets = [17, 0], sizes = [1, 128], strides = [1, 1]} : vector<25x128xf32> to vector<1x128xf32>
    %169 = vector.broadcast %168 : vector<1x128xf32> to vector<200x128xf32>
    %170 = arith.mulf %167, %169 : vector<200x128xf32>
    %171 = arith.addf %166, %170 : vector<200x128xf32>
    %c47 = arith.constant 47 : index
    %c0_70 = arith.constant 0 : index
    %172 = vector.load %arg10[%c47, %c0_70] : memref<264x128xf32, #tpu.memory_space<vmem>>, vector<200x128xf32>
    %173 = vector.extract_strided_slice %12 {offsets = [18, 0], sizes = [1, 128], strides = [1, 1]} : vector<25x128xf32> to vector<1x128xf32>
    %174 = vector.broadcast %173 : vector<1x128xf32> to vector<200x128xf32>
    %175 = arith.mulf %172, %174 : vector<200x128xf32>
    %176 = arith.addf %171, %175 : vector<200x128xf32>
    %c48 = arith.constant 48 : index
    %c0_71 = arith.constant 0 : index
    %177 = vector.load %arg11[%c48, %c0_71] : memref<264x128xf32, #tpu.memory_space<vmem>>, vector<200x128xf32>
    %178 = vector.extract_strided_slice %12 {offsets = [19, 0], sizes = [1, 128], strides = [1, 1]} : vector<25x128xf32> to vector<1x128xf32>
    %179 = vector.broadcast %178 : vector<1x128xf32> to vector<200x128xf32>
    %180 = arith.mulf %177, %179 : vector<200x128xf32>
    %181 = arith.addf %176, %180 : vector<200x128xf32>
    %c58 = arith.constant 58 : index
    %c0_72 = arith.constant 0 : index
    %182 = vector.load %arg7[%c58, %c0_72] : memref<264x128xf32, #tpu.memory_space<vmem>>, vector<200x128xf32>
    %183 = vector.extract_strided_slice %12 {offsets = [20, 0], sizes = [1, 128], strides = [1, 1]} : vector<25x128xf32> to vector<1x128xf32>
    %184 = vector.broadcast %183 : vector<1x128xf32> to vector<200x128xf32>
    %185 = arith.mulf %182, %184 : vector<200x128xf32>
    %186 = arith.addf %181, %185 : vector<200x128xf32>
    %c59 = arith.constant 59 : index
    %c0_73 = arith.constant 0 : index
    %187 = vector.load %arg8[%c59, %c0_73] : memref<264x128xf32, #tpu.memory_space<vmem>>, vector<200x128xf32>
    %188 = vector.extract_strided_slice %12 {offsets = [21, 0], sizes = [1, 128], strides = [1, 1]} : vector<25x128xf32> to vector<1x128xf32>
    %189 = vector.broadcast %188 : vector<1x128xf32> to vector<200x128xf32>
    %190 = arith.mulf %187, %189 : vector<200x128xf32>
    %191 = arith.addf %186, %190 : vector<200x128xf32>
    %c60 = arith.constant 60 : index
    %c0_74 = arith.constant 0 : index
    %192 = vector.load %arg9[%c60, %c0_74] : memref<264x128xf32, #tpu.memory_space<vmem>>, vector<200x128xf32>
    %193 = vector.extract_strided_slice %12 {offsets = [22, 0], sizes = [1, 128], strides = [1, 1]} : vector<25x128xf32> to vector<1x128xf32>
    %194 = vector.broadcast %193 : vector<1x128xf32> to vector<200x128xf32>
    %195 = arith.mulf %192, %194 : vector<200x128xf32>
    %196 = arith.addf %191, %195 : vector<200x128xf32>
    %c61 = arith.constant 61 : index
    %c0_75 = arith.constant 0 : index
    %197 = vector.load %arg10[%c61, %c0_75] : memref<264x128xf32, #tpu.memory_space<vmem>>, vector<200x128xf32>
    %198 = vector.extract_strided_slice %12 {offsets = [23, 0], sizes = [1, 128], strides = [1, 1]} : vector<25x128xf32> to vector<1x128xf32>
    %199 = vector.broadcast %198 : vector<1x128xf32> to vector<200x128xf32>
    %200 = arith.mulf %197, %199 : vector<200x128xf32>
    %201 = arith.addf %196, %200 : vector<200x128xf32>
    %c62 = arith.constant 62 : index
    %c0_76 = arith.constant 0 : index
    %202 = vector.load %arg11[%c62, %c0_76] : memref<264x128xf32, #tpu.memory_space<vmem>>, vector<200x128xf32>
    %203 = vector.extract_strided_slice %12 {offsets = [24, 0], sizes = [1, 128], strides = [1, 1]} : vector<25x128xf32> to vector<1x128xf32>
    %204 = vector.broadcast %203 : vector<1x128xf32> to vector<200x128xf32>
    %205 = arith.mulf %202, %204 : vector<200x128xf32>
    %206 = arith.addf %201, %205 : vector<200x128xf32>
    %207 = tpu.transpose %206, [1, 0] : vector<200x128xf32> -> vector<128x200xf32>
    %208 = vector.extract_strided_slice %207 {offsets = [0, 0], sizes = [128, 196], strides = [1, 1]} : vector<128x200xf32> to vector<128x196xf32>
    %c0_77 = arith.constant 0 : index
    %c0_78 = arith.constant 0 : index
    %c0_79 = arith.constant 0 : index
    %209 = vector.load %arg4[%c0_77, %c0_78, %c0_79] : memref<1x128x196xf32, #tpu.memory_space<vmem>>, vector<1x128x196xf32>
    %210 = vector.shape_cast %209 : vector<1x128x196xf32> to vector<128x196xf32>
    %211 = vector.shape_cast %208 : vector<128x196xf32> to vector<1x128x196xf32>
    tpu.vector_store %arg4[%c0_77, %c0_78, %c0_79], %211 {strides = array<i32>} : memref<1x128x196xf32, #tpu.memory_space<vmem>>, vector<1x128x196xf32>,
    return
  }
  func.func @transform_0(%arg0: i32, %arg1: i32) -> (i32, i32, i32) {
    %c0_i32 = arith.constant 0 : i32
    %c0_i32_0 = arith.constant 0 : i32
    return %arg0, %arg1, %c0_i32 : i32, i32, i32
  }
  func.func @transform_1(%arg0: i32, %arg1: i32) -> (i32, i32) {
    %c0_i32 = arith.constant 0 : i32
    %c0_i32_0 = arith.constant 0 : i32
    return %arg1, %c0_i32 : i32, i32
  }
  func.func @transform_2(%arg0: i32, %arg1: i32) -> (i32, i32, i32) {
    %c0_i32 = arith.constant 0 : i32
    %c0_i32_0 = arith.constant 0 : i32
    return %arg0, %arg1, %c0_i32 : i32, i32, i32
  }
}

</mosaic_0001>

<llo_original>
// kernel: tpu_custom_call.1
$region0: #{tpu_custom_call.1}
  #allocation0 [shape = 'u32[]', space=smem, size = 0x4, offset = 0x4, fixed_abs, tag = 'smem constant byte address 0x4 - core index']
  #allocation1 [shape = 'u32[144,128]{1,0:T(1,128)}', space=vmem, size = 0x12000, scoped, tag = 'internal scratch']
  #allocation2 [shape = 'f32[128,256]{1,0:T(8,128)}', space=vmem, size = 0x20000, scoped, tag = 'scratch operand']
  #allocation3 [shape = 'f32[128,128]{1,0:T(8,128)}', space=vmem, size = 0x10000, scoped, tag = 'scratch operand']
  #allocation4 [shape = 'f32[264,128]{1,0:T(8,128)}', space=vmem, size = 0x21000, scoped, tag = 'scratch operand']
  #allocation5 [shape = 'f32[264,128]{1,0:T(8,128)}', space=vmem, size = 0x21000, scoped, tag = 'scratch operand']
  #allocation6 [shape = 'f32[264,128]{1,0:T(8,128)}', space=vmem, size = 0x21000, scoped, tag = 'scratch operand']
  #allocation7 [shape = 'f32[264,128]{1,0:T(8,128)}', space=vmem, size = 0x21000, scoped, tag = 'scratch operand']
  #allocation8 [shape = 'f32[264,128]{1,0:T(8,128)}', space=vmem, size = 0x21000, scoped, tag = 'scratch operand']
  %s0 = inlined_call_operand.hbm [shape: f32[1,288,196], index: 0, kind: input, shape index: {}]
  %s1 = inlined_call_operand.vmem [shape: f32[288,25], index: 1, kind: input, shape index: {}]
  %s2 = inlined_call_operand.hbm [shape: f32[1,288,196], index: 2, kind: output, shape index: {}]
  %s3 = sld [smem:[#allocation0]]
  $region45: #{tpu_custom_call.1} parent=0
    _
  %s5 = ssub.s32 1, %s3
  %s6 = scalar_select 0, %s5, %s3
  $region1: #{tpu_custom_call.1} parent=0
    #allocation9 [shape = 'u8[262144]{0}', space=vmem, size = 0x40000, scoped, tag = 'input window, operand 0']
    #allocation10 [shape = 's32[2]{0}', space=sflag, size = 0x8, scoped, tag = 'scoped memory for tpu_custom_call.1']
    #allocation11 [shape = 's32[2]{0}', space=sflag, size = 0x8, scoped, tag = 'scoped memory for tpu_custom_call.1']
    #allocation12 [shape = 'u8[262144]{0}', space=vmem, size = 0x40000, scoped, tag = 'output window, operand 0']
    %7 = vsyncpa [#allocation10], 0
    %s8 = scalar_lea.sflag [#allocation10], 1
    %9 = vsyncpa %s8, 0
    %10 = vsyncpa [#allocation11], 0
    %s11 = scalar_lea.sflag [#allocation11], 1
    %12 = vsyncpa %s11, 0
    loop: start=0, step=1, limit=5
    $region2: #{tpu_custom_call.1} parent=1 // loop_pre_header
      _
    $region3: #{tpu_custom_call.1} parent=1 // loop_header
      %s14 = sphi 0, %s18
      %p15 = scmp.ge.s32.totalorder %s14, 5
      %s21 = sphi 0, %s33
      %s22 = sphi 0, %s29
      %s23 = sphi 0, %s21
      %s24 = sphi 0, %s22
      %s25 = sphi 0, %s23
      %s26 = sphi 0, %s24
      %s38 = sphi 0, %s40
      %s41 = sphi 0, %s38
      %s42 = sphi 0, %s41
      %s58 = sphi 0, %s42
      %s64 = sphi 0, %s66
      %s67 = sphi 0, %s64
      %s68 = sphi 0, %s67
      %s84 = sphi 0, %s68
      %s92 = sphi 0, %s94
      %s95 = sphi 0, %s92
      %s96 = sphi 0, %s95
      %s112 = sphi 0, %s96
    $region4: #{tpu_custom_call.1} parent=1 // loop_header_branch
      %17 = sbr.rel (%p15) target = $region8
    $region5: #{tpu_custom_call.1} parent=1 // loop_body
      %s19 = ssub.s32 %s14, 1
      %s20 = ssub.s32 %s14, 2
      %s27 = sadd.s32 1, %s22
      %p28 = scmp.ge.s32.totalorder %s27, 3
      %s29 = scalar_select %p28, 0, %s27
      %s30 = sadd.s32 1, %s21
      %s31 = scalar_select %p28, %s30, %s21
      %p32 = scmp.ge.s32.totalorder %s31, 1
      %s33 = scalar_select %p32, 0, %s31
      %s34 = ssub.s32 %s21, %s33
      %s35 = ssub.s32 %s22, %s29
      %s36 = sor.u32 %s34, %s35
      %p37 = scmp.eq.s32.totalorder %s36, 0
      %s39 = sadd.s32 %s38, 1
      %s40 = scalar_select %p37, %s38, %s39
      %p43 = pneg %p37
      %p44 = scmp.eq.s32.totalorder %s14, 2
      %p45 = por %p43, %p44
      %p46 = scmp.ne.s32.totalorder %s38, %s41
      %p47 = scmp.eq.s32.totalorder %s14, 0
      %p48 = por %p46, %p47
      %p49 = scmp.ne.s32.totalorder %s38, %s41
      %p50 = scmp.eq.s32.totalorder %s19, 2
      %p51 = por %p49, %p50
      %p52 = scmp.ne.s32.totalorder %s41, %s42
      %p53 = scmp.eq.s32.totalorder %s19, 0
      %p54 = por %p52, %p53
      %p55 = scmp.ne.s32.totalorder %s41, %s42
      %p56 = scmp.eq.s32.totalorder %s20, 2
      %p57 = por %p55, %p56
      %p59 = scmp.ne.s32.totalorder %s42, %s58
      %p60 = scmp.eq.s32.totalorder %s20, 0
      %p61 = por %p59, %p60
      %s62 = ssub.s32 %s22, %s29
      %p63 = scmp.eq.s32.totalorder %s62, 0
      %s65 = sadd.s32 %s64, 1
      %s66 = scalar_select %p63, %s64, %s65
      %p69 = pneg %p63
      %p70 = scmp.eq.s32.totalorder %s14, 2
      %p71 = por %p69, %p70
      %p72 = scmp.ne.s32.totalorder %s64, %s67
      %p73 = scmp.eq.s32.totalorder %s14, 0
      %p74 = por %p72, %p73
      %p75 = scmp.ne.s32.totalorder %s64, %s67
      %p76 = scmp.eq.s32.totalorder %s19, 2
      %p77 = por %p75, %p76
      %p78 = scmp.ne.s32.totalorder %s67, %s68
      %p79 = scmp.eq.s32.totalorder %s19, 0
      %p80 = por %p78, %p79
      %p81 = scmp.ne.s32.totalorder %s67, %s68
      %p82 = scmp.eq.s32.totalorder %s20, 2
      %p83 = por %p81, %p82
      %p85 = scmp.ne.s32.totalorder %s68, %s84
      %p86 = scmp.eq.s32.totalorder %s20, 0
      %p87 = por %p85, %p86
      %s88 = ssub.s32 %s21, %s33
      %s89 = ssub.s32 %s22, %s29
      %s90 = sor.u32 %s88, %s89
      %p91 = scmp.eq.s32.totalorder %s90, 0
      %s93 = sadd.s32 %s92, 1
      %s94 = scalar_select %p91, %s92, %s93
      %p97 = pneg %p91
      %p98 = scmp.eq.s32.totalorder %s14, 2
      %p99 = por %p97, %p98
      %p100 = scmp.ne.s32.totalorder %s92, %s95
      %p101 = scmp.eq.s32.totalorder %s14, 0
      %p102 = por %p100, %p101
      %p103 = scmp.ne.s32.totalorder %s92, %s95
      %p104 = scmp.eq.s32.totalorder %s19, 2
      %p105 = por %p103, %p104
      %p106 = scmp.ne.s32.totalorder %s95, %s96
      %p107 = scmp.eq.s32.totalorder %s19, 0
      %p108 = por %p106, %p107
      %p109 = scmp.ne.s32.totalorder %s95, %s96
      %p110 = scmp.eq.s32.totalorder %s20, 2
      %p111 = por %p109, %p110
      %p113 = scmp.ne.s32.totalorder %s96, %s112
      %p114 = scmp.eq.s32.totalorder %s20, 0
      %p115 = por %p113, %p114
      %p116 = scmp.le.s32.totalorder 1, %s14
      %p117 = scmp.lt.s32.totalorder %s14, 4
      %p118 = pnand %p116, %p117
      %p119 = pneg %p118
      // Predicated region
      $region9: #{tpu_custom_call.1} parent=5 // pred_check
        _
      $region10: #{tpu_custom_call.1} parent=5 // pred_check_branch
        %121 = sbr.rel (%p118) target = $region12
      $region11: #{tpu_custom_call.1} parent=5 // pred_region
        %s122 = ssub.s32 %s14, 1
      $region12: #{tpu_custom_call.1} parent=5 // pred_fallthru
        _
      %p123 = scmp.lt.s32.totalorder %s14, 3
      // Predicated region
      $region13: #{tpu_custom_call.1} parent=5 // pred_check
        %p124 = pneg %p123
      $region14: #{tpu_custom_call.1} parent=5 // pred_check_branch
        %126 = sbr.rel (%p124) target = $region16
      $region15: #{tpu_custom_call.1} parent=5 // pred_region
        // Predicated region
        $region17: #{tpu_custom_call.1} parent=15 // pred_check
          %p127 = pneg %p48
        $region18: #{tpu_custom_call.1} parent=15 // pred_check_branch
          %129 = sbr.rel (%p127) target = $region20
        $region19: #{tpu_custom_call.1} parent=15 // pred_region
          %s130 = sand.u32 %s38, 1
          %s131 = scalar_lea.sflag [#allocation10], %s130
          %s132 = sand.u32 %s38, 1
          %s133 = smul.addr %s132, 256
          %s134 = scalar_lea.vmem [#allocation9], %s133
          %s135 = smul.u32 16, %s22
          %s136 = ssub.s32 36, %s135
          %p137 = scmp.lt.s32.totalorder %s136, 16
          %s138 = scalar_select %p137, %s136, 16
          %s139 = smul.u32 128, %s138
          %s140 = smul.u32 %s139, 2
          %s142 = ssub.s32 4096, %s140
          %143 = vsyncadd %s131, %s142
          %p144 = scmp.ne.s32.totalorder 0, %s140
          %s145 = smul.addr %s135, 2
          %s146 = smul.addr %s21, 72
          %s147 = sadd.s32 %s145, %s146
          %s148 = smul.addr %s147, 128
          %s149 = scalar_lea.hbm %s0, %s148
          %s150 = smul.u32 16, %s138
          %s151 = sshll.u32 %s134, 4
          %s152 = int_to_ptr.vmem [resolvable:$true] %s151
          %s153 = sshll.u32 %s150, 4
          %157 = dma.hbm_to_vmem [thread:$0]  (%p144), %s149, %s153, %s152, %s131, 256, 256, 16
        $region20: #{tpu_custom_call.1} parent=15 // pred_fallthru
          _
        // Predicated region
        $region21: #{tpu_custom_call.1} parent=15 // pred_check
          %p158 = pneg %p74
        $region22: #{tpu_custom_call.1} parent=15 // pred_check_branch
          %160 = sbr.rel (%p158) target = $region24
        $region23: #{tpu_custom_call.1} parent=15 // pred_region
          %s161 = smul.u32 16, %s22
          %s162 = ssub.s32 36, %s161
          %p163 = scmp.lt.s32.totalorder %s162, 16
          %s164 = scalar_select %p163, %s162, 16
          %s165 = smul.u32 128, %s164
          %p166 = scmp.lt.s32.totalorder %s161, 35
          %s167 = scalar_select %p166, %s161, 35
          %s168 = smul.addr %s167, 8
          %s169 = scalar_lea.vmem %s1, %s168
          %s170 = smul.u32 16, %s22
          %s171 = ssub.s32 36, %s170
          %p172 = scmp.lt.s32.totalorder %s171, 16
          %s173 = scalar_select %p172, %s171, 16
          %s174 = smul.u32 128, %s173
        $region24: #{tpu_custom_call.1} parent=15 // pred_fallthru
          _
      $region16: #{tpu_custom_call.1} parent=5 // pred_fallthru
        _
      %p175 = scmp.le.s32.totalorder 1, %s14
      %p176 = scmp.lt.s32.totalorder %s14, 4
      %p177 = pnand %p175, %p176
      %p178 = pneg %p177
      // Predicated region
      $region25: #{tpu_custom_call.1} parent=5 // pred_check
        _
      $region26: #{tpu_custom_call.1} parent=5 // pred_check_branch
        %180 = sbr.rel (%p177) target = $region28
      $region27: #{tpu_custom_call.1} parent=5 // pred_region
        %s181 = ssub.s32 %s14, 1
        %s182 = sand.u32 %s41, 1
        %s183 = scalar_lea.sflag [#allocation10], %s182
        %s184 = sand.u32 %s41, 1
        %s185 = smul.addr %s184, 256
        %s186 = scalar_lea.vmem [#allocation9], %s185
        // Predicated region
        $region29: #{tpu_custom_call.1} parent=27 // pred_check
          %p187 = pneg %p54
        $region30: #{tpu_custom_call.1} parent=27 // pred_check_branch
          %189 = sbr.rel (%p187) target = $region32
        $region31: #{tpu_custom_call.1} parent=27 // pred_region
          %190 = dma.done %s183, 4096
        $region32: #{tpu_custom_call.1} parent=27 // pred_fallthru
          _
        %s191 = sand.u32 %s41, 1
        %s192 = scalar_lea.sflag [#allocation10], %s191
        %s193 = sand.u32 %s41, 1
        %s194 = smul.addr %s193, 256
        %s195 = scalar_lea.vmem [#allocation9], %s194
        %p196 = pneg %p54
        %p197 = pneg %p51
        %s198 = smul.u32 16, %s24
        %s199 = ssub.s32 36, %s198
        %p200 = scmp.lt.s32.totalorder %s199, 16
        %s201 = scalar_select %p200, %s199, 16
        %s202 = smul.u32 128, %s201
        %p203 = scmp.lt.s32.totalorder %s198, 35
        %s204 = scalar_select %p203, %s198, 35
        %s205 = smul.addr %s204, 8
        %s206 = scalar_lea.vmem %s1, %s205
        %p207 = pneg %p80
        %p208 = pneg %p77
        %p209 = pneg %p108
        %p210 = pneg %p105
        %s211 = sand.u32 %s95, 1
        %s212 = scalar_lea.sflag [#allocation11], %s211
        %s213 = sand.u32 %s95, 1
        %s214 = smul.addr %s213, 256
        %s215 = scalar_lea.vmem [#allocation12], %s214
        %s216 = smul.u32 16, %s24
        %s217 = ssub.s32 36, %s216
        %p218 = scmp.lt.s32.totalorder %s217, 16
        %s219 = scalar_select %p218, %s217, 16
        %s220 = smul.u32 128, %s219
        %s221 = smul.u32 %s220, 2
        %s222 = smul.u32 16, %s24
        %s223 = ssub.s32 36, %s222
        %p224 = scmp.lt.s32.totalorder %s223, 16
        %s225 = scalar_select %p224, %s223, 16
        %s226 = smul.u32 128, %s225
        %p227 = scmp.lt.s32.totalorder %s222, 35
        %s228 = scalar_select %p227, %s222, 35
        %s229 = smul.addr %s228, 8
        %s230 = scalar_lea.vmem %s1, %s229
        %s231 = smul.u32 16, %s24
        %s232 = ssub.s32 36, %s231
        %p233 = scmp.lt.s32.totalorder %s232, 16
        %s234 = scalar_select %p233, %s232, 16
        %s235 = smul.u32 128, %s234
        %s236 = smul.u32 16, %s24
        %s237 = ssub.s32 36, %s236
        %p238 = scmp.lt.s32.totalorder %s237, 16
        %s239 = scalar_select %p238, %s237, 16
        %s240 = smul.u32 128, %s239
        %s241 = smul.u32 %s240, 2
        %v242 = vld [vmem:[%s186] sm:$0xff]
        %v243 = vld [vmem:[%s186 + $0x8] sm:$0xff]
        %v244 = vld [vmem:[%s186 + $0x10] sm:$0xff]
        %v245 = vld [vmem:[%s186 + $0x18] sm:$0xff]
        %v246 = vld [vmem:[%s186 + $0x20] sm:$0xff]
        %v247 = vld [vmem:[%s186 + $0x28] sm:$0xff]
        %v248 = vld [vmem:[%s186 + $0x30] sm:$0xff]
        %v249 = vld [vmem:[%s186 + $0x38] sm:$0xff]
        %v250 = vld [vmem:[%s186 + $0x40] sm:$0xff]
        %v251 = vld [vmem:[%s186 + $0x48] sm:$0xff]
        %v252 = vld [vmem:[%s186 + $0x50] sm:$0xff]
        %v253 = vld [vmem:[%s186 + $0x58] sm:$0xff]
        %v254 = vld [vmem:[%s186 + $0x60] sm:$0xff]
        %v255 = vld [vmem:[%s186 + $0x68] sm:$0xff]
        %v256 = vld [vmem:[%s186 + $0x70] sm:$0xff]
        %v257 = vld [vmem:[%s186 + $0x78] sm:$0xff]
        %v258 = vld [vmem:[%s186 + $0x80] sm:$0xff]
        %v259 = vld [vmem:[%s186 + $0x88] sm:$0xff]
        %v260 = vld [vmem:[%s186 + $0x90] sm:$0xff]
        %v261 = vld [vmem:[%s186 + $0x98] sm:$0xff]
        %v262 = vld [vmem:[%s186 + $0xa0] sm:$0xff]
        %v263 = vld [vmem:[%s186 + $0xa8] sm:$0xff]
        %v264 = vld [vmem:[%s186 + $0xb0] sm:$0xff]
        %v265 = vld [vmem:[%s186 + $0xb8] sm:$0xff]
        %v266 = vld [vmem:[%s186 + $0xc0] sm:$0xff]
        %v267 = vld [vmem:[%s186 + $0xc8] sm:$0xff]
        %v268 = vld [vmem:[%s186 + $0xd0] sm:$0xff]
        %v269 = vld [vmem:[%s186 + $0xd8] sm:$0xff]
        %v270 = vld [vmem:[%s186 + $0xe0] sm:$0xff]
        %v271 = vld [vmem:[%s186 + $0xe8] sm:$0xff]
        %v272 = vld [vmem:[%s186 + $0xf0] sm:$0xff]
        %v273 = vld [vmem:[%s186 + $0xf8] sm:$0xff]
        %v274 = vmax.f32 %v242, 0.0
        %v275 = vmax.f32 %v243, 0.0
        %v276 = vmax.f32 %v244, 0.0
        %v277 = vmax.f32 %v245, 0.0
        %v278 = vmax.f32 %v246, 0.0
        %v279 = vmax.f32 %v247, 0.0
        %v280 = vmax.f32 %v248, 0.0
        %v281 = vmax.f32 %v249, 0.0
        %v282 = vmax.f32 %v250, 0.0
        %v283 = vmax.f32 %v251, 0.0
        %v284 = vmax.f32 %v252, 0.0
        %v285 = vmax.f32 %v253, 0.0
        %v286 = vmax.f32 %v254, 0.0
        %v287 = vmax.f32 %v255, 0.0
        %v288 = vmax.f32 %v256, 0.0
        %v289 = vmax.f32 %v257, 0.0
        %v290 = vmax.f32 %v258, 0.0
        %v291 = vmax.f32 %v259, 0.0
        %v292 = vmax.f32 %v260, 0.0
        %v293 = vmax.f32 %v261, 0.0
        %v294 = vmax.f32 %v262, 0.0
        %v295 = vmax.f32 %v263, 0.0
        %v296 = vmax.f32 %v264, 0.0
        %v297 = vmax.f32 %v265, 0.0
        %v298 = vmax.f32 %v266, 0.0
        %v299 = vmax.f32 %v267, 0.0
        %v300 = vmax.f32 %v268, 0.0
        %v301 = vmax.f32 %v269, 0.0
        %v302 = vmax.f32 %v270, 0.0
        %v303 = vmax.f32 %v271, 0.0
        %v304 = vmax.f32 %v272, 0.0
        %v305 = vmax.f32 %v273, 0.0
        %306 = vst [vmem:[#allocation2] sm:$0xff] %v274
        %vm307 = vcmask 556032
        %308 = vst.msk [vmem:[#allocation2 + $0x8] sm:$0xff] %vm307, %v275
        %309 = vst [vmem:[#allocation2 + $0x10] sm:$0xff] %v276
        %310 = vst.msk [vmem:[#allocation2 + $0x18] sm:$0xff] %vm307, %v277
        %311 = vst [vmem:[#allocation2 + $0x20] sm:$0xff] %v278
        %312 = vst.msk [vmem:[#allocation2 + $0x28] sm:$0xff] %vm307, %v279
        %313 = vst [vmem:[#allocation2 + $0x30] sm:$0xff] %v280
        %314 = vst.msk [vmem:[#allocation2 + $0x38] sm:$0xff] %vm307, %v281
        %315 = vst [vmem:[#allocation2 + $0x40] sm:$0xff] %v282
        %316 = vst.msk [vmem:[#allocation2 + $0x48] sm:$0xff] %vm307, %v283
        %317 = vst [vmem:[#allocation2 + $0x50] sm:$0xff] %v284
        %318 = vst.msk [vmem:[#allocation2 + $0x58] sm:$0xff] %vm307, %v285
        %319 = vst [vmem:[#allocation2 + $0x60] sm:$0xff] %v286
        %320 = vst.msk [vmem:[#allocation2 + $0x68] sm:$0xff] %vm307, %v287
        %321 = vst [vmem:[#allocation2 + $0x70] sm:$0xff] %v288
        %322 = vst.msk [vmem:[#allocation2 + $0x78] sm:$0xff] %vm307, %v289
        %323 = vst [vmem:[#allocation2 + $0x80] sm:$0xff] %v290
        %324 = vst.msk [vmem:[#allocation2 + $0x88] sm:$0xff] %vm307, %v291
        %325 = vst [vmem:[#allocation2 + $0x90] sm:$0xff] %v292
        %326 = vst.msk [vmem:[#allocation2 + $0x98] sm:$0xff] %vm307, %v293
        %327 = vst [vmem:[#allocation2 + $0xa0] sm:$0xff] %v294
        %328 = vst.msk [vmem:[#allocation2 + $0xa8] sm:$0xff] %vm307, %v295
        %329 = vst [vmem:[#allocation2 + $0xb0] sm:$0xff] %v296
        %330 = vst.msk [vmem:[#allocation2 + $0xb8] sm:$0xff] %vm307, %v297
        %331 = vst [vmem:[#allocation2 + $0xc0] sm:$0xff] %v298
        %332 = vst.msk [vmem:[#allocation2 + $0xc8] sm:$0xff] %vm307, %v299
        %333 = vst [vmem:[#allocation2 + $0xd0] sm:$0xff] %v300
        %334 = vst.msk [vmem:[#allocation2 + $0xd8] sm:$0xff] %vm307, %v301
        %335 = vst [vmem:[#allocation2 + $0xe0] sm:$0xff] %v302
        %336 = vst.msk [vmem:[#allocation2 + $0xe8] sm:$0xff] %vm307, %v303
        %337 = vst [vmem:[#allocation2 + $0xf0] sm:$0xff] %v304
        %338 = vst.msk [vmem:[#allocation2 + $0xf8] sm:$0xff] %vm307, %v305
        %v339 = vld [vmem:[#allocation2] sm:$0xff]
        %v340 = vld [vmem:[#allocation2 + $0x8] sm:$0xff]
        %v341 = vld [vmem:[#allocation2 + $0x10] sm:$0xff]
        %v342 = vld [vmem:[#allocation2 + $0x18] sm:$0xff]
        %v343 = vld [vmem:[#allocation2 + $0x20] sm:$0xff]
        %v344 = vld [vmem:[#allocation2 + $0x28] sm:$0xff]
        %v345 = vld [vmem:[#allocation2 + $0x30] sm:$0xff]
        %v346 = vld [vmem:[#allocation2 + $0x38] sm:$0xff]
        %v347 = vld [vmem:[#allocation2 + $0x40] sm:$0xff]
        %v348 = vld [vmem:[#allocation2 + $0x48] sm:$0xff]
        %v349 = vld [vmem:[#allocation2 + $0x50] sm:$0xff]
        %v350 = vld [vmem:[#allocation2 + $0x58] sm:$0xff]
        %v351 = vld [vmem:[#allocation2 + $0x60] sm:$0xff]
        %v352 = vld [vmem:[#allocation2 + $0x68] sm:$0xff]
        %v353 = vld [vmem:[#allocation2 + $0x70] sm:$0xff]
        %v354 = vld [vmem:[#allocation2 + $0x78] sm:$0xff]
        %v355 = vld [vmem:[#allocation2 + $0x80] sm:$0xff]
        %v356 = vld [vmem:[#allocation2 + $0x88] sm:$0xff]
        %v357 = vld [vmem:[#allocation2 + $0x90] sm:$0xff]
        %v358 = vld [vmem:[#allocation2 + $0x98] sm:$0xff]
        %v359 = vld [vmem:[#allocation2 + $0xa0] sm:$0xff]
        %v360 = vld [vmem:[#allocation2 + $0xa8] sm:$0xff]
        %v361 = vld [vmem:[#allocation2 + $0xb0] sm:$0xff]
        %v362 = vld [vmem:[#allocation2 + $0xb8] sm:$0xff]
        %v363 = vld [vmem:[#allocation2 + $0xc0] sm:$0xff]
        %v364 = vld [vmem:[#allocation2 + $0xc8] sm:$0xff]
        %v365 = vld [vmem:[#allocation2 + $0xd0] sm:$0xff]
        %v366 = vld [vmem:[#allocation2 + $0xd8] sm:$0xff]
        %v367 = vld [vmem:[#allocation2 + $0xe0] sm:$0xff]
        %v368 = vld [vmem:[#allocation2 + $0xe8] sm:$0xff]
        %v369 = vld [vmem:[#allocation2 + $0xf0] sm:$0xff]
        %v370 = vld [vmem:[#allocation2 + $0xf8] sm:$0xff]
        %371 = vxpose.xlu0.b32.start [1/16] %v339, 128
        %372 = vxpose.xlu0.b32.cont [2/16] %v341, 128
        %373 = vxpose.xlu0.b32.cont [3/16] %v343, 128
        %374 = vxpose.xlu0.b32.cont [4/16] %v345, 128
        %375 = vxpose.xlu0.b32.cont [5/16] %v347, 128
        %376 = vxpose.xlu0.b32.cont [6/16] %v349, 128
        %377 = vxpose.xlu0.b32.cont [7/16] %v351, 128
        %378 = vxpose.xlu0.b32.cont [8/16] %v353, 128
        %379 = vxpose.xlu0.b32.cont [9/16] %v355, 128
        %380 = vxpose.xlu0.b32.cont [10/16] %v357, 128
        %381 = vxpose.xlu0.b32.cont [11/16] %v359, 128
        %382 = vxpose.xlu0.b32.cont [12/16] %v361, 128
        %383 = vxpose.xlu0.b32.cont [13/16] %v363, 128
        %384 = vxpose.xlu0.b32.cont [14/16] %v365, 128
        %385 = vxpose.xlu0.b32.cont [15/16] %v367, 128
        %386 = vxpose.xlu0.b32.end [16/16] %v369, 128
        %v387 = vpop.trf.xlu0
        %v388 = vpop.trf.xlu0
        %v389 = vpop.trf.xlu0
        %v390 = vpop.trf.xlu0
        %v391 = vpop.trf.xlu0
        %v392 = vpop.trf.xlu0
        %v393 = vpop.trf.xlu0
        %v394 = vpop.trf.xlu0
        %v395 = vpop.trf.xlu0
        %v396 = vpop.trf.xlu0
        %v397 = vpop.trf.xlu0
        %v398 = vpop.trf.xlu0
        %v399 = vpop.trf.xlu0
        %v400 = vpop.trf.xlu0
        %v401 = vpop.trf.xlu0
        %v402 = vpop.trf.xlu0
        %403 = vxpose.xlu0.b32.start [1/16] %v340, 128
        %404 = vxpose.xlu0.b32.cont [2/16] %v342, 128
        %405 = vxpose.xlu0.b32.cont [3/16] %v344, 128
        %406 = vxpose.xlu0.b32.cont [4/16] %v346, 128
        %407 = vxpose.xlu0.b32.cont [5/16] %v348, 128
        %408 = vxpose.xlu0.b32.cont [6/16] %v350, 128
        %409 = vxpose.xlu0.b32.cont [7/16] %v352, 128
        %410 = vxpose.xlu0.b32.cont [8/16] %v354, 128
        %411 = vxpose.xlu0.b32.cont [9/16] %v356, 128
        %412 = vxpose.xlu0.b32.cont [10/16] %v358, 128
        %413 = vxpose.xlu0.b32.cont [11/16] %v360, 128
        %414 = vxpose.xlu0.b32.cont [12/16] %v362, 128
        %415 = vxpose.xlu0.b32.cont [13/16] %v364, 128
        %416 = vxpose.xlu0.b32.cont [14/16] %v366, 128
        %417 = vxpose.xlu0.b32.cont [15/16] %v368, 128
        %418 = vxpose.xlu0.b32.end [16/16] %v370, 128
        %v419 = vpop.trf.xlu0
        %v420 = vpop.trf.xlu0
        %v421 = vpop.trf.xlu0
        %v422 = vpop.trf.xlu0
        %v423 = vpop.trf.xlu0
        %v424 = vpop.trf.xlu0
        %v425 = vpop.trf.xlu0
        %v426 = vpop.trf.xlu0
        %v427 = vpop.trf.xlu0
        %v428 = vpop.trf.xlu0
        %v429 = vpop.trf.xlu0
        %v430 = vpop.trf.xlu0
        %v431 = vpop.trf.xlu0
        %v432 = vpop.trf.xlu0
        %v433 = vpop.trf.xlu0
        %v434 = vpop.trf.xlu0
        %v435 = vld [vmem:[%s230] sm:$0xff]
        %v436 = vld [vmem:[%s230 + $0x8] sm:$0xff]
        %v437 = vld [vmem:[%s230 + $0x10] sm:$0xff]
        %v438 = vld [vmem:[%s230 + $0x18] sm:$0xff]
        %v439 = vld [vmem:[%s230 + $0x20] sm:$0xff]
        %v440 = vld [vmem:[%s230 + $0x28] sm:$0xff]
        %v441 = vld [vmem:[%s230 + $0x30] sm:$0xff]
        %v442 = vld [vmem:[%s230 + $0x38] sm:$0xff]
        %v443 = vld [vmem:[%s230 + $0x40] sm:$0xff]
        %v444 = vld [vmem:[%s230 + $0x48] sm:$0xff]
        %v445 = vld [vmem:[%s230 + $0x50] sm:$0xff]
        %v446 = vld [vmem:[%s230 + $0x58] sm:$0xff]
        %v447 = vld [vmem:[%s230 + $0x60] sm:$0xff]
        %v448 = vld [vmem:[%s230 + $0x68] sm:$0xff]
        %v449 = vld [vmem:[%s230 + $0x70] sm:$0xff]
        %v450 = vld [vmem:[%s230 + $0x78] sm:$0xff]
        %vm451 = vcmask 203776
        %452 = vst.msk [vmem:[#allocation3] sm:$0xff] %vm451, %v435
        %453 = vst.msk [vmem:[#allocation3 + $0x8] sm:$0xff] %vm451, %v436
        %454 = vst.msk [vmem:[#allocation3 + $0x10] sm:$0xff] %vm451, %v437
        %455 = vst.msk [vmem:[#allocation3 + $0x18] sm:$0xff] %vm451, %v438
        %456 = vst.msk [vmem:[#allocation3 + $0x20] sm:$0xff] %vm451, %v439
        %457 = vst.msk [vmem:[#allocation3 + $0x28] sm:$0xff] %vm451, %v440
        %458 = vst.msk [vmem:[#allocation3 + $0x30] sm:$0xff] %vm451, %v441
        %459 = vst.msk [vmem:[#allocation3 + $0x38] sm:$0xff] %vm451, %v442
        %460 = vst.msk [vmem:[#allocation3 + $0x40] sm:$0xff] %vm451, %v443
        %461 = vst.msk [vmem:[#allocation3 + $0x48] sm:$0xff] %vm451, %v444
        %462 = vst.msk [vmem:[#allocation3 + $0x50] sm:$0xff] %vm451, %v445
        %463 = vst.msk [vmem:[#allocation3 + $0x58] sm:$0xff] %vm451, %v446
        %464 = vst.msk [vmem:[#allocation3 + $0x60] sm:$0xff] %vm451, %v447
        %465 = vst.msk [vmem:[#allocation3 + $0x68] sm:$0xff] %vm451, %v448
        %466 = vst.msk [vmem:[#allocation3 + $0x70] sm:$0xff] %vm451, %v449
        %467 = vst.msk [vmem:[#allocation3 + $0x78] sm:$0xff] %vm451, %v450
        %v468 = vld [vmem:[#allocation3] sm:$0xff]
        %v469 = vld [vmem:[#allocation3 + $0x8] sm:$0xff]
        %v470 = vld [vmem:[#allocation3 + $0x10] sm:$0xff]
        %v471 = vld [vmem:[#allocation3 + $0x18] sm:$0xff]
        %v472 = vld [vmem:[#allocation3 + $0x20] sm:$0xff]
        %v473 = vld [vmem:[#allocation3 + $0x28] sm:$0xff]
        %v474 = vld [vmem:[#allocation3 + $0x30] sm:$0xff]
        %v475 = vld [vmem:[#allocation3 + $0x38] sm:$0xff]
        %v476 = vld [vmem:[#allocation3 + $0x40] sm:$0xff]
        %v477 = vld [vmem:[#allocation3 + $0x48] sm:$0xff]
        %v478 = vld [vmem:[#allocation3 + $0x50] sm:$0xff]
        %v479 = vld [vmem:[#allocation3 + $0x58] sm:$0xff]
        %v480 = vld [vmem:[#allocation3 + $0x60] sm:$0xff]
        %v481 = vld [vmem:[#allocation3 + $0x68] sm:$0xff]
        %v482 = vld [vmem:[#allocation3 + $0x70] sm:$0xff]
        %v483 = vld [vmem:[#allocation3 + $0x78] sm:$0xff]
        %484 = vxpose.xlu0.b32.start [1/16] %v468, 128
        %485 = vxpose.xlu0.b32.cont [2/16] %v469, 128
        %486 = vxpose.xlu0.b32.cont [3/16] %v470, 128
        %487 = vxpose.xlu0.b32.cont [4/16] %v471, 128
        %488 = vxpose.xlu0.b32.cont [5/16] %v472, 128
        %489 = vxpose.xlu0.b32.cont [6/16] %v473, 128
        %490 = vxpose.xlu0.b32.cont [7/16] %v474, 128
        %491 = vxpose.xlu0.b32.cont [8/16] %v475, 128
        %492 = vxpose.xlu0.b32.cont [9/16] %v476, 128
        %493 = vxpose.xlu0.b32.cont [10/16] %v477, 128
        %494 = vxpose.xlu0.b32.cont [11/16] %v478, 128
        %495 = vxpose.xlu0.b32.cont [12/16] %v479, 128
        %496 = vxpose.xlu0.b32.cont [13/16] %v480, 128
        %497 = vxpose.xlu0.b32.cont [14/16] %v481, 128
        %498 = vxpose.xlu0.b32.cont [15/16] %v482, 128
        %499 = vxpose.xlu0.b32.end [16/16] %v483, 128
        %v500 = vpop.trf.xlu0
        %v501 = vpop.trf.xlu0
        %v502 = vpop.trf.xlu0
        %v503 = vpop.trf.xlu0
        %v504 = vpop.trf.xlu0
        %v505 = vpop.trf.xlu0
        %v506 = vpop.trf.xlu0
        %v507 = vpop.trf.xlu0
        %v508 = vpop.trf.xlu0
        %v509 = vpop.trf.xlu0
        %v510 = vpop.trf.xlu0
        %v511 = vpop.trf.xlu0
        %v512 = vpop.trf.xlu0
        %v513 = vpop.trf.xlu0
        %v514 = vpop.trf.xlu0
        %v515 = vpop.trf.xlu0
        %v516 = vlaneseq
        %v517 = vshrl.u32 %v516, 7
        %v518 = vadd.s32 %v517, 8
        %v519 = vadd.s32 %v517, 16
        %v520 = vadd.s32 %v517, 24
        %v521 = vadd.s32 %v517, 32
        %v522 = vadd.s32 %v517, 40
        %v523 = vadd.s32 %v517, 48
        %v524 = vadd.s32 %v517, 56
        %v525 = vadd.s32 %v517, 64
        %v526 = vadd.s32 %v517, 72
        %v527 = vadd.s32 %v517, 80
        %v528 = vadd.s32 %v517, 88
        %v529 = vadd.s32 %v517, 96
        %v530 = vadd.s32 %v517, 104
        %v531 = vadd.s32 %v517, 112
        %v532 = vadd.s32 %v517, 120
        %v533 = vadd.s32 %v517, 128
        %v534 = vadd.s32 %v517, 136
        %v535 = vadd.s32 %v517, 144
        %v536 = vadd.s32 %v517, 152
        %v537 = vadd.s32 %v517, 160
        %v538 = vadd.s32 %v517, 168
        %v539 = vadd.s32 %v517, 176
        %v540 = vadd.s32 %v517, 184
        %v541 = vadd.s32 %v517, 192
        %vm542 = vcmp.lt.s32.totalorder %v517, 0
        %v543 = vsub.s32 0, %v517
        %v544 = vsel %vm542, %v543, %v517
        %v545 = vmul.u32.u64.compose %v544, 2454267026
        %v546 = vextract.low.u32 %v545
        %v547 = vextract.high.u32 %v545
        %vm548 = vc.u32 %v546, 2454267026
        %v549 = vsel %vm548, 1, 0
        %v550 = vadd.s32 %v547, %v549
        %v551 = vshrl.u32 %v550, 3
        %v552 = vmul.u32 %v551, 14
        %v553 = vsub.s32 %v544, %v552
        %v554 = vsub.s32 0, %v553
        %v555 = vsel %vm542, %v554, %v553
        %vm556 = vcmp.lt.s32.totalorder %v518, 0
        %v557 = vsub.s32 0, %v518
        %v558 = vsel %vm556, %v557, %v518
        %v559 = vmul.u32.u64.compose %v558, 2454267026
        %v560 = vextract.low.u32 %v559
        %v561 = vextract.high.u32 %v559
        %vm562 = vc.u32 %v560, 2454267026
        %v563 = vsel %vm562, 1, 0
        %v564 = vadd.s32 %v561, %v563
        %v565 = vshrl.u32 %v564, 3
        %v566 = vmul.u32 %v565, 14
        %v567 = vsub.s32 %v558, %v566
        %v568 = vsub.s32 0, %v567
        %v569 = vsel %vm556, %v568, %v567
        %vm570 = vcmp.lt.s32.totalorder %v519, 0
        %v571 = vsub.s32 0, %v519
        %v572 = vsel %vm570, %v571, %v519
        %v573 = vmul.u32.u64.compose %v572, 2454267026
        %v574 = vextract.low.u32 %v573
        %v575 = vextract.high.u32 %v573
        %vm576 = vc.u32 %v574, 2454267026
        %v577 = vsel %vm576, 1, 0
        %v578 = vadd.s32 %v575, %v577
        %v579 = vshrl.u32 %v578, 3
        %v580 = vmul.u32 %v579, 14
        %v581 = vsub.s32 %v572, %v580
        %v582 = vsub.s32 0, %v581
        %v583 = vsel %vm570, %v582, %v581
        %vm584 = vcmp.lt.s32.totalorder %v520, 0
        %v585 = vsub.s32 0, %v520
        %v586 = vsel %vm584, %v585, %v520
        %v587 = vmul.u32.u64.compose %v586, 2454267026
        %v588 = vextract.low.u32 %v587
        %v589 = vextract.high.u32 %v587
        %vm590 = vc.u32 %v588, 2454267026
        %v591 = vsel %vm590, 1, 0
        %v592 = vadd.s32 %v589, %v591
        %v593 = vshrl.u32 %v592, 3
        %v594 = vmul.u32 %v593, 14
        %v595 = vsub.s32 %v586, %v594
        %v596 = vsub.s32 0, %v595
        %v597 = vsel %vm584, %v596, %v595
        %vm598 = vcmp.lt.s32.totalorder %v521, 0
        %v599 = vsub.s32 0, %v521
        %v600 = vsel %vm598, %v599, %v521
        %v601 = vmul.u32.u64.compose %v600, 2454267026
        %v602 = vextract.low.u32 %v601
        %v603 = vextract.high.u32 %v601
        %vm604 = vc.u32 %v602, 2454267026
        %v605 = vsel %vm604, 1, 0
        %v606 = vadd.s32 %v603, %v605
        %v607 = vshrl.u32 %v606, 3
        %v608 = vmul.u32 %v607, 14
        %v609 = vsub.s32 %v600, %v608
        %v610 = vsub.s32 0, %v609
        %v611 = vsel %vm598, %v610, %v609
        %vm612 = vcmp.lt.s32.totalorder %v522, 0
        %v613 = vsub.s32 0, %v522
        %v614 = vsel %vm612, %v613, %v522
        %v615 = vmul.u32.u64.compose %v614, 2454267026
        %v616 = vextract.low.u32 %v615
        %v617 = vextract.high.u32 %v615
        %vm618 = vc.u32 %v616, 2454267026
        %v619 = vsel %vm618, 1, 0
        %v620 = vadd.s32 %v617, %v619
        %v621 = vshrl.u32 %v620, 3
        %v622 = vmul.u32 %v621, 14
        %v623 = vsub.s32 %v614, %v622
        %v624 = vsub.s32 0, %v623
        %v625 = vsel %vm612, %v624, %v623
        %vm626 = vcmp.lt.s32.totalorder %v523, 0
        %v627 = vsub.s32 0, %v523
        %v628 = vsel %vm626, %v627, %v523
        %v629 = vmul.u32.u64.compose %v628, 2454267026
        %v630 = vextract.low.u32 %v629
        %v631 = vextract.high.u32 %v629
        %vm632 = vc.u32 %v630, 2454267026
        %v633 = vsel %vm632, 1, 0
        %v634 = vadd.s32 %v631, %v633
        %v635 = vshrl.u32 %v634, 3
        %v636 = vmul.u32 %v635, 14
        %v637 = vsub.s32 %v628, %v636
        %v638 = vsub.s32 0, %v637
        %v639 = vsel %vm626, %v638, %v637
        %vm640 = vcmp.lt.s32.totalorder %v524, 0
        %v641 = vsub.s32 0, %v524
        %v642 = vsel %vm640, %v641, %v524
        %v643 = vmul.u32.u64.compose %v642, 2454267026
        %v644 = vextract.low.u32 %v643
        %v645 = vextract.high.u32 %v643
        %vm646 = vc.u32 %v644, 2454267026
        %v647 = vsel %vm646, 1, 0
        %v648 = vadd.s32 %v645, %v647
        %v649 = vshrl.u32 %v648, 3
        %v650 = vmul.u32 %v649, 14
        %v651 = vsub.s32 %v642, %v650
        %v652 = vsub.s32 0, %v651
        %v653 = vsel %vm640, %v652, %v651
        %vm654 = vcmp.lt.s32.totalorder %v525, 0
        %v655 = vsub.s32 0, %v525
        %v656 = vsel %vm654, %v655, %v525
        %v657 = vmul.u32.u64.compose %v656, 2454267026
        %v658 = vextract.low.u32 %v657
        %v659 = vextract.high.u32 %v657
        %vm660 = vc.u32 %v658, 2454267026
        %v661 = vsel %vm660, 1, 0
        %v662 = vadd.s32 %v659, %v661
        %v663 = vshrl.u32 %v662, 3
        %v664 = vmul.u32 %v663, 14
        %v665 = vsub.s32 %v656, %v664
        %v666 = vsub.s32 0, %v665
        %v667 = vsel %vm654, %v666, %v665
        %vm668 = vcmp.lt.s32.totalorder %v526, 0
        %v669 = vsub.s32 0, %v526
        %v670 = vsel %vm668, %v669, %v526
        %v671 = vmul.u32.u64.compose %v670, 2454267026
        %v672 = vextract.low.u32 %v671
        %v673 = vextract.high.u32 %v671
        %vm674 = vc.u32 %v672, 2454267026
        %v675 = vsel %vm674, 1, 0
        %v676 = vadd.s32 %v673, %v675
        %v677 = vshrl.u32 %v676, 3
        %v678 = vmul.u32 %v677, 14
        %v679 = vsub.s32 %v670, %v678
        %v680 = vsub.s32 0, %v679
        %v681 = vsel %vm668, %v680, %v679
        %vm682 = vcmp.lt.s32.totalorder %v527, 0
        %v683 = vsub.s32 0, %v527
        %v684 = vsel %vm682, %v683, %v527
        %v685 = vmul.u32.u64.compose %v684, 2454267026
        %v686 = vextract.low.u32 %v685
        %v687 = vextract.high.u32 %v685
        %vm688 = vc.u32 %v686, 2454267026
        %v689 = vsel %vm688, 1, 0
        %v690 = vadd.s32 %v687, %v689
        %v691 = vshrl.u32 %v690, 3
        %v692 = vmul.u32 %v691, 14
        %v693 = vsub.s32 %v684, %v692
        %v694 = vsub.s32 0, %v693
        %v695 = vsel %vm682, %v694, %v693
        %vm696 = vcmp.lt.s32.totalorder %v528, 0
        %v697 = vsub.s32 0, %v528
        %v698 = vsel %vm696, %v697, %v528
        %v699 = vmul.u32.u64.compose %v698, 2454267026
        %v700 = vextract.low.u32 %v699
        %v701 = vextract.high.u32 %v699
        %vm702 = vc.u32 %v700, 2454267026
        %v703 = vsel %vm702, 1, 0
        %v704 = vadd.s32 %v701, %v703
        %v705 = vshrl.u32 %v704, 3
        %v706 = vmul.u32 %v705, 14
        %v707 = vsub.s32 %v698, %v706
        %v708 = vsub.s32 0, %v707
        %v709 = vsel %vm696, %v708, %v707
        %vm710 = vcmp.lt.s32.totalorder %v529, 0
        %v711 = vsub.s32 0, %v529
        %v712 = vsel %vm710, %v711, %v529
        %v713 = vmul.u32.u64.compose %v712, 2454267026
        %v714 = vextract.low.u32 %v713
        %v715 = vextract.high.u32 %v713
        %vm716 = vc.u32 %v714, 2454267026
        %v717 = vsel %vm716, 1, 0
        %v718 = vadd.s32 %v715, %v717
        %v719 = vshrl.u32 %v718, 3
        %v720 = vmul.u32 %v719, 14
        %v721 = vsub.s32 %v712, %v720
        %v722 = vsub.s32 0, %v721
        %v723 = vsel %vm710, %v722, %v721
        %vm724 = vcmp.lt.s32.totalorder %v530, 0
        %v725 = vsub.s32 0, %v530
        %v726 = vsel %vm724, %v725, %v530
        %v727 = vmul.u32.u64.compose %v726, 2454267026
        %v728 = vextract.low.u32 %v727
        %v729 = vextract.high.u32 %v727
        %vm730 = vc.u32 %v728, 2454267026
        %v731 = vsel %vm730, 1, 0
        %v732 = vadd.s32 %v729, %v731
        %v733 = vshrl.u32 %v732, 3
        %v734 = vmul.u32 %v733, 14
        %v735 = vsub.s32 %v726, %v734
        %v736 = vsub.s32 0, %v735
        %v737 = vsel %vm724, %v736, %v735
        %vm738 = vcmp.lt.s32.totalorder %v531, 0
        %v739 = vsub.s32 0, %v531
        %v740 = vsel %vm738, %v739, %v531
        %v741 = vmul.u32.u64.compose %v740, 2454267026
        %v742 = vextract.low.u32 %v741
        %v743 = vextract.high.u32 %v741
        %vm744 = vc.u32 %v742, 2454267026
        %v745 = vsel %vm744, 1, 0
        %v746 = vadd.s32 %v743, %v745
        %v747 = vshrl.u32 %v746, 3
        %v748 = vmul.u32 %v747, 14
        %v749 = vsub.s32 %v740, %v748
        %v750 = vsub.s32 0, %v749
        %v751 = vsel %vm738, %v750, %v749
        %vm752 = vcmp.lt.s32.totalorder %v532, 0
        %v753 = vsub.s32 0, %v532
        %v754 = vsel %vm752, %v753, %v532
        %v755 = vmul.u32.u64.compose %v754, 2454267026
        %v756 = vextract.low.u32 %v755
        %v757 = vextract.high.u32 %v755
        %vm758 = vc.u32 %v756, 2454267026
        %v759 = vsel %vm758, 1, 0
        %v760 = vadd.s32 %v757, %v759
        %v761 = vshrl.u32 %v760, 3
        %v762 = vmul.u32 %v761, 14
        %v763 = vsub.s32 %v754, %v762
        %v764 = vsub.s32 0, %v763
        %v765 = vsel %vm752, %v764, %v763
        %vm766 = vcmp.lt.s32.totalorder %v533, 0
        %v767 = vsub.s32 0, %v533
        %v768 = vsel %vm766, %v767, %v533
        %v769 = vmul.u32.u64.compose %v768, 2454267026
        %v770 = vextract.low.u32 %v769
        %v771 = vextract.high.u32 %v769
        %vm772 = vc.u32 %v770, 2454267026
        %v773 = vsel %vm772, 1, 0
        %v774 = vadd.s32 %v771, %v773
        %v775 = vshrl.u32 %v774, 3
        %v776 = vmul.u32 %v775, 14
        %v777 = vsub.s32 %v768, %v776
        %v778 = vsub.s32 0, %v777
        %v779 = vsel %vm766, %v778, %v777
        %vm780 = vcmp.lt.s32.totalorder %v534, 0
        %v781 = vsub.s32 0, %v534
        %v782 = vsel %vm780, %v781, %v534
        %v783 = vmul.u32.u64.compose %v782, 2454267026
        %v784 = vextract.low.u32 %v783
        %v785 = vextract.high.u32 %v783
        %vm786 = vc.u32 %v784, 2454267026
        %v787 = vsel %vm786, 1, 0
        %v788 = vadd.s32 %v785, %v787
        %v789 = vshrl.u32 %v788, 3
        %v790 = vmul.u32 %v789, 14
        %v791 = vsub.s32 %v782, %v790
        %v792 = vsub.s32 0, %v791
        %v793 = vsel %vm780, %v792, %v791
        %vm794 = vcmp.lt.s32.totalorder %v535, 0
        %v795 = vsub.s32 0, %v535
        %v796 = vsel %vm794, %v795, %v535
        %v797 = vmul.u32.u64.compose %v796, 2454267026
        %v798 = vextract.low.u32 %v797
        %v799 = vextract.high.u32 %v797
        %vm800 = vc.u32 %v798, 2454267026
        %v801 = vsel %vm800, 1, 0
        %v802 = vadd.s32 %v799, %v801
        %v803 = vshrl.u32 %v802, 3
        %v804 = vmul.u32 %v803, 14
        %v805 = vsub.s32 %v796, %v804
        %v806 = vsub.s32 0, %v805
        %v807 = vsel %vm794, %v806, %v805
        %vm808 = vcmp.lt.s32.totalorder %v536, 0
        %v809 = vsub.s32 0, %v536
        %v810 = vsel %vm808, %v809, %v536
        %v811 = vmul.u32.u64.compose %v810, 2454267026
        %v812 = vextract.low.u32 %v811
        %v813 = vextract.high.u32 %v811
        %vm814 = vc.u32 %v812, 2454267026
        %v815 = vsel %vm814, 1, 0
        %v816 = vadd.s32 %v813, %v815
        %v817 = vshrl.u32 %v816, 3
        %v818 = vmul.u32 %v817, 14
        %v819 = vsub.s32 %v810, %v818
        %v820 = vsub.s32 0, %v819
        %v821 = vsel %vm808, %v820, %v819
        %vm822 = vcmp.lt.s32.totalorder %v537, 0
        %v823 = vsub.s32 0, %v537
        %v824 = vsel %vm822, %v823, %v537
        %v825 = vmul.u32.u64.compose %v824, 2454267026
        %v826 = vextract.low.u32 %v825
        %v827 = vextract.high.u32 %v825
        %vm828 = vc.u32 %v826, 2454267026
        %v829 = vsel %vm828, 1, 0
        %v830 = vadd.s32 %v827, %v829
        %v831 = vshrl.u32 %v830, 3
        %v832 = vmul.u32 %v831, 14
        %v833 = vsub.s32 %v824, %v832
        %v834 = vsub.s32 0, %v833
        %v835 = vsel %vm822, %v834, %v833
        %vm836 = vcmp.lt.s32.totalorder %v538, 0
        %v837 = vsub.s32 0, %v538
        %v838 = vsel %vm836, %v837, %v538
        %v839 = vmul.u32.u64.compose %v838, 2454267026
        %v840 = vextract.low.u32 %v839
        %v841 = vextract.high.u32 %v839
        %vm842 = vc.u32 %v840, 2454267026
        %v843 = vsel %vm842, 1, 0
        %v844 = vadd.s32 %v841, %v843
        %v845 = vshrl.u32 %v844, 3
        %v846 = vmul.u32 %v845, 14
        %v847 = vsub.s32 %v838, %v846
        %v848 = vsub.s32 0, %v847
        %v849 = vsel %vm836, %v848, %v847
        %vm850 = vcmp.lt.s32.totalorder %v539, 0
        %v851 = vsub.s32 0, %v539
        %v852 = vsel %vm850, %v851, %v539
        %v853 = vmul.u32.u64.compose %v852, 2454267026
        %v854 = vextract.low.u32 %v853
        %v855 = vextract.high.u32 %v853
        %vm856 = vc.u32 %v854, 2454267026
        %v857 = vsel %vm856, 1, 0
        %v858 = vadd.s32 %v855, %v857
        %v859 = vshrl.u32 %v858, 3
        %v860 = vmul.u32 %v859, 14
        %v861 = vsub.s32 %v852, %v860
        %v862 = vsub.s32 0, %v861
        %v863 = vsel %vm850, %v862, %v861
        %vm864 = vcmp.lt.s32.totalorder %v540, 0
        %v865 = vsub.s32 0, %v540
        %v866 = vsel %vm864, %v865, %v540
        %v867 = vmul.u32.u64.compose %v866, 2454267026
        %v868 = vextract.low.u32 %v867
        %v869 = vextract.high.u32 %v867
        %vm870 = vc.u32 %v868, 2454267026
        %v871 = vsel %vm870, 1, 0
        %v872 = vadd.s32 %v869, %v871
        %v873 = vshrl.u32 %v872, 3
        %v874 = vmul.u32 %v873, 14
        %v875 = vsub.s32 %v866, %v874
        %v876 = vsub.s32 0, %v875
        %v877 = vsel %vm864, %v876, %v875
        %vm878 = vcmp.lt.s32.totalorder %v541, 0
        %v879 = vsub.s32 0, %v541
        %v880 = vsel %vm878, %v879, %v541
        %v881 = vmul.u32.u64.compose %v880, 2454267026
        %v882 = vextract.low.u32 %v881
        %v883 = vextract.high.u32 %v881
        %vm884 = vc.u32 %v882, 2454267026
        %v885 = vsel %vm884, 1, 0
        %v886 = vadd.s32 %v883, %v885
        %v887 = vshrl.u32 %v886, 3
        %v888 = vmul.u32 %v887, 14
        %v889 = vsub.s32 %v880, %v888
        %v890 = vsub.s32 0, %v889
        %v891 = vsel %vm878, %v890, %v889
        %vm892 = vcmp.ne.s32.totalorder %v555, 0
        %vm893 = vcmp.ne.s32.totalorder %v569, 0
        %vm894 = vcmp.ne.s32.totalorder %v583, 0
        %vm895 = vcmp.ne.s32.totalorder %v597, 0
        %vm896 = vcmp.ne.s32.totalorder %v611, 0
        %vm897 = vcmp.ne.s32.totalorder %v625, 0
        %vm898 = vcmp.ne.s32.totalorder %v639, 0
        %vm899 = vcmp.ne.s32.totalorder %v653, 0
        %vm900 = vcmp.ne.s32.totalorder %v667, 0
        %vm901 = vcmp.ne.s32.totalorder %v681, 0
        %vm902 = vcmp.ne.s32.totalorder %v695, 0
        %vm903 = vcmp.ne.s32.totalorder %v709, 0
        %vm904 = vcmp.ne.s32.totalorder %v723, 0
        %vm905 = vcmp.ne.s32.totalorder %v737, 0
        %vm906 = vcmp.ne.s32.totalorder %v751, 0
        %vm907 = vcmp.ne.s32.totalorder %v765, 0
        %vm908 = vcmp.ne.s32.totalorder %v779, 0
        %vm909 = vcmp.ne.s32.totalorder %v793, 0
        %vm910 = vcmp.ne.s32.totalorder %v807, 0
        %vm911 = vcmp.ne.s32.totalorder %v821, 0
        %vm912 = vcmp.ne.s32.totalorder %v835, 0
        %vm913 = vcmp.ne.s32.totalorder %v849, 0
        %vm914 = vcmp.ne.s32.totalorder %v863, 0
        %vm915 = vcmp.ne.s32.totalorder %v877, 0
        %vm916 = vcmp.ne.s32.totalorder %v891, 0
        %vm917 = vcmp.lt.s32.totalorder %v555, 0
        %vm918 = vcmp.lt.s32.totalorder %v569, 0
        %vm919 = vcmp.lt.s32.totalorder %v583, 0
        %vm920 = vcmp.lt.s32.totalorder %v597, 0
        %vm921 = vcmp.lt.s32.totalorder %v611, 0
        %vm922 = vcmp.lt.s32.totalorder %v625, 0
        %vm923 = vcmp.lt.s32.totalorder %v639, 0
        %vm924 = vcmp.lt.s32.totalorder %v653, 0
        %vm925 = vcmp.lt.s32.totalorder %v667, 0
        %vm926 = vcmp.lt.s32.totalorder %v681, 0
        %vm927 = vcmp.lt.s32.totalorder %v695, 0
        %vm928 = vcmp.lt.s32.totalorder %v709, 0
        %vm929 = vcmp.lt.s32.totalorder %v723, 0
        %vm930 = vcmp.lt.s32.totalorder %v737, 0
        %vm931 = vcmp.lt.s32.totalorder %v751, 0
        %vm932 = vcmp.lt.s32.totalorder %v765, 0
        %vm933 = vcmp.lt.s32.totalorder %v779, 0
        %vm934 = vcmp.lt.s32.totalorder %v793, 0
        %vm935 = vcmp.lt.s32.totalorder %v807, 0
        %vm936 = vcmp.lt.s32.totalorder %v821, 0
        %vm937 = vcmp.lt.s32.totalorder %v835, 0
        %vm938 = vcmp.lt.s32.totalorder %v849, 0
        %vm939 = vcmp.lt.s32.totalorder %v863, 0
        %vm940 = vcmp.lt.s32.totalorder %v877, 0
        %vm941 = vcmp.lt.s32.totalorder %v891, 0
        %vm942 = vmand %vm917, %vm892
        %vm943 = vmand %vm918, %vm893
        %vm944 = vmand %vm919, %vm894
        %vm945 = vmand %vm920, %vm895
        %vm946 = vmand %vm921, %vm896
        %vm947 = vmand %vm922, %vm897
        %vm948 = vmand %vm923, %vm898
        %vm949 = vmand %vm924, %vm899
        %vm950 = vmand %vm925, %vm900
        %vm951 = vmand %vm926, %vm901
        %vm952 = vmand %vm927, %vm902
        %vm953 = vmand %vm928, %vm903
        %vm954 = vmand %vm929, %vm904
        %vm955 = vmand %vm930, %vm905
        %vm956 = vmand %vm931, %vm906
        %vm957 = vmand %vm932, %vm907
        %vm958 = vmand %vm933, %vm908
        %vm959 = vmand %vm934, %vm909
        %vm960 = vmand %vm935, %vm910
        %vm961 = vmand %vm936, %vm911
        %vm962 = vmand %vm937, %vm912
        %vm963 = vmand %vm938, %vm913
        %vm964 = vmand %vm939, %vm914
        %vm965 = vmand %vm940, %vm915
        %vm966 = vmand %vm941, %vm916
        %v967 = vadd.s32 %v555, 14
        %v968 = vadd.s32 %v569, 14
        %v969 = vadd.s32 %v583, 14
        %v970 = vadd.s32 %v597, 14
        %v971 = vadd.s32 %v611, 14
        %v972 = vadd.s32 %v625, 14
        %v973 = vadd.s32 %v639, 14
        %v974 = vadd.s32 %v653, 14
        %v975 = vadd.s32 %v667, 14
        %v976 = vadd.s32 %v681, 14
        %v977 = vadd.s32 %v695, 14
        %v978 = vadd.s32 %v709, 14
        %v979 = vadd.s32 %v723, 14
        %v980 = vadd.s32 %v737, 14
        %v981 = vadd.s32 %v751, 14
        %v982 = vadd.s32 %v765, 14
        %v983 = vadd.s32 %v779, 14
        %v984 = vadd.s32 %v793, 14
        %v985 = vadd.s32 %v807, 14
        %v986 = vadd.s32 %v821, 14
        %v987 = vadd.s32 %v835, 14
        %v988 = vadd.s32 %v849, 14
        %v989 = vadd.s32 %v863, 14
        %v990 = vadd.s32 %v877, 14
        %v991 = vadd.s32 %v891, 14
        %v992 = vsel %vm942, %v967, %v555
        %v993 = vsel %vm943, %v968, %v569
        %v994 = vsel %vm944, %v969, %v583
        %v995 = vsel %vm945, %v970, %v597
        %v996 = vsel %vm946, %v971, %v611
        %v997 = vsel %vm947, %v972, %v625
        %v998 = vsel %vm948, %v973, %v639
        %v999 = vsel %vm949, %v974, %v653
        %v1000 = vsel %vm950, %v975, %v667
        %v1001 = vsel %vm951, %v976, %v681
        %v1002 = vsel %vm952, %v977, %v695
        %v1003 = vsel %vm953, %v978, %v709
        %v1004 = vsel %vm954, %v979, %v723
        %v1005 = vsel %vm955, %v980, %v737
        %v1006 = vsel %vm956, %v981, %v751
        %v1007 = vsel %vm957, %v982, %v765
        %v1008 = vsel %vm958, %v983, %v779
        %v1009 = vsel %vm959, %v984, %v793
        %v1010 = vsel %vm960, %v985, %v807
        %v1011 = vsel %vm961, %v986, %v821
        %v1012 = vsel %vm962, %v987, %v835
        %v1013 = vsel %vm963, %v988, %v849
        %v1014 = vsel %vm964, %v989, %v863
        %v1015 = vsel %vm965, %v990, %v877
        %v1016 = vsel %vm966, %v991, %v891
        %1017 = vst [vmem:[#allocation4] sm:$0xff] 0.0
        %1018 = vst [vmem:[#allocation4 + $0x8] sm:$0xff] 0.0
        %1019 = vst [vmem:[#allocation4 + $0x10] sm:$0xff] 0.0
        %1020 = vst [vmem:[#allocation4 + $0x18] sm:$0xff] 0.0
        %1021 = vst [vmem:[#allocation4 + $0xe4] sm:$0xff] 0.0
        %1022 = vst [vmem:[#allocation4 + $0xec] sm:$0xff] 0.0
        %1023 = vst [vmem:[#allocation4 + $0xf4] sm:$0xff] 0.0
        %1024 = vst [vmem:[#allocation4 + $0xfc] sm:$0xff] 0.0
        %1025 = vst [vmem:[#allocation4 + $0x104] sm:$0xf] 0.0
        %vm1026 = vcmp.ge.s32.totalorder %v992, 4294967294
        %vm1027 = vcmp.ge.s32.totalorder %v993, 4294967294
        %vm1028 = vcmp.ge.s32.totalorder %v994, 4294967294
        %vm1029 = vcmp.ge.s32.totalorder %v995, 4294967294
        %vm1030 = vcmp.ge.s32.totalorder %v996, 4294967294
        %vm1031 = vcmp.ge.s32.totalorder %v997, 4294967294
        %vm1032 = vcmp.ge.s32.totalorder %v998, 4294967294
        %vm1033 = vcmp.ge.s32.totalorder %v999, 4294967294
        %vm1034 = vcmp.ge.s32.totalorder %v1000, 4294967294
        %vm1035 = vcmp.ge.s32.totalorder %v1001, 4294967294
        %vm1036 = vcmp.ge.s32.totalorder %v1002, 4294967294
        %vm1037 = vcmp.ge.s32.totalorder %v1003, 4294967294
        %vm1038 = vcmp.ge.s32.totalorder %v1004, 4294967294
        %vm1039 = vcmp.ge.s32.totalorder %v1005, 4294967294
        %vm1040 = vcmp.ge.s32.totalorder %v1006, 4294967294
        %vm1041 = vcmp.ge.s32.totalorder %v1007, 4294967294
        %vm1042 = vcmp.ge.s32.totalorder %v1008, 4294967294
        %vm1043 = vcmp.ge.s32.totalorder %v1009, 4294967294
        %vm1044 = vcmp.ge.s32.totalorder %v1010, 4294967294
        %vm1045 = vcmp.ge.s32.totalorder %v1011, 4294967294
        %vm1046 = vcmp.ge.s32.totalorder %v1012, 4294967294
        %vm1047 = vcmp.ge.s32.totalorder %v1013, 4294967294
        %vm1048 = vcmp.ge.s32.totalorder %v1014, 4294967294
        %vm1049 = vcmp.ge.s32.totalorder %v1015, 4294967294
        %vm1050 = vcmp.ge.s32.totalorder %v1016, 4294967294
        %vm1051 = vcmp.le.s32.totalorder %v992, 11
        %vm1052 = vcmp.le.s32.totalorder %v993, 11
        %vm1053 = vcmp.le.s32.totalorder %v994, 11
        %vm1054 = vcmp.le.s32.totalorder %v995, 11
        %vm1055 = vcmp.le.s32.totalorder %v996, 11
        %vm1056 = vcmp.le.s32.totalorder %v997, 11
        %vm1057 = vcmp.le.s32.totalorder %v998, 11
        %vm1058 = vcmp.le.s32.totalorder %v999, 11
        %vm1059 = vcmp.le.s32.totalorder %v1000, 11
        %vm1060 = vcmp.le.s32.totalorder %v1001, 11
        %vm1061 = vcmp.le.s32.totalorder %v1002, 11
        %vm1062 = vcmp.le.s32.totalorder %v1003, 11
        %vm1063 = vcmp.le.s32.totalorder %v1004, 11
        %vm1064 = vcmp.le.s32.totalorder %v1005, 11
        %vm1065 = vcmp.le.s32.totalorder %v1006, 11
        %vm1066 = vcmp.le.s32.totalorder %v1007, 11
        %vm1067 = vcmp.le.s32.totalorder %v1008, 11
        %vm1068 = vcmp.le.s32.totalorder %v1009, 11
        %vm1069 = vcmp.le.s32.totalorder %v1010, 11
        %vm1070 = vcmp.le.s32.totalorder %v1011, 11
        %vm1071 = vcmp.le.s32.totalorder %v1012, 11
        %vm1072 = vcmp.le.s32.totalorder %v1013, 11
        %vm1073 = vcmp.le.s32.totalorder %v1014, 11
        %vm1074 = vcmp.le.s32.totalorder %v1015, 11
        %vm1075 = vcmp.le.s32.totalorder %v1016, 11
        %vm1076 = vmand %vm1026, %vm1051
        %vm1077 = vmand %vm1027, %vm1052
        %vm1078 = vmand %vm1028, %vm1053
        %vm1079 = vmand %vm1029, %vm1054
        %vm1080 = vmand %vm1030, %vm1055
        %vm1081 = vmand %vm1031, %vm1056
        %vm1082 = vmand %vm1032, %vm1057
        %vm1083 = vmand %vm1033, %vm1058
        %vm1084 = vmand %vm1034, %vm1059
        %vm1085 = vmand %vm1035, %vm1060
        %vm1086 = vmand %vm1036, %vm1061
        %vm1087 = vmand %vm1037, %vm1062
        %vm1088 = vmand %vm1038, %vm1063
        %vm1089 = vmand %vm1039, %vm1064
        %vm1090 = vmand %vm1040, %vm1065
        %vm1091 = vmand %vm1041, %vm1066
        %vm1092 = vmand %vm1042, %vm1067
        %vm1093 = vmand %vm1043, %vm1068
        %vm1094 = vmand %vm1044, %vm1069
        %vm1095 = vmand %vm1045, %vm1070
        %vm1096 = vmand %vm1046, %vm1071
        %vm1097 = vmand %vm1047, %vm1072
        %vm1098 = vmand %vm1048, %vm1073
        %vm1099 = vmand %vm1049, %vm1074
        %vm1100 = vmand %vm1050, %vm1075
        %v1101 = vsel %vm1076, 1, 0
        %v1102 = vsel %vm1077, 1, 0
        %v1103 = vsel %vm1078, 1, 0
        %v1104 = vsel %vm1079, 1, 0
        %v1105 = vsel %vm1080, 1, 0
        %v1106 = vsel %vm1081, 1, 0
        %v1107 = vsel %vm1082, 1, 0
        %v1108 = vsel %vm1083, 1, 0
        %v1109 = vsel %vm1084, 1, 0
        %v1110 = vsel %vm1085, 1, 0
        %v1111 = vsel %vm1086, 1, 0
        %v1112 = vsel %vm1087, 1, 0
        %v1113 = vsel %vm1088, 1, 0
        %v1114 = vsel %vm1089, 1, 0
        %v1115 = vsel %vm1090, 1, 0
        %v1116 = vsel %vm1091, 1, 0
        %v1117 = vsel %vm1092, 1, 0
        %v1118 = vsel %vm1093, 1, 0
        %v1119 = vsel %vm1094, 1, 0
        %v1120 = vsel %vm1095, 1, 0
        %v1121 = vsel %vm1096, 1, 0
        %v1122 = vsel %vm1097, 1, 0
        %v1123 = vsel %vm1098, 1, 0
        %v1124 = vsel %vm1099, 1, 0
        %v1125 = vsel %vm1100, 1, 0
        %vm1126 = vcmp.eq.s32.totalorder %v1101, 1
        %vm1127 = vcmp.eq.s32.totalorder %v1102, 1
        %vm1128 = vcmp.eq.s32.totalorder %v1103, 1
        %vm1129 = vcmp.eq.s32.totalorder %v1104, 1
        %vm1130 = vcmp.eq.s32.totalorder %v1105, 1
        %vm1131 = vcmp.eq.s32.totalorder %v1106, 1
        %vm1132 = vcmp.eq.s32.totalorder %v1107, 1
        %vm1133 = vcmp.eq.s32.totalorder %v1108, 1
        %vm1134 = vcmp.eq.s32.totalorder %v1109, 1
        %vm1135 = vcmp.eq.s32.totalorder %v1110, 1
        %vm1136 = vcmp.eq.s32.totalorder %v1111, 1
        %vm1137 = vcmp.eq.s32.totalorder %v1112, 1
        %vm1138 = vcmp.eq.s32.totalorder %v1113, 1
        %vm1139 = vcmp.eq.s32.totalorder %v1114, 1
        %vm1140 = vcmp.eq.s32.totalorder %v1115, 1
        %vm1141 = vcmp.eq.s32.totalorder %v1116, 1
        %vm1142 = vcmp.eq.s32.totalorder %v1117, 1
        %vm1143 = vcmp.eq.s32.totalorder %v1118, 1
        %vm1144 = vcmp.eq.s32.totalorder %v1119, 1
        %vm1145 = vcmp.eq.s32.totalorder %v1120, 1
        %vm1146 = vcmp.eq.s32.totalorder %v1121, 1
        %vm1147 = vcmp.eq.s32.totalorder %v1122, 1
        %vm1148 = vcmp.eq.s32.totalorder %v1123, 1
        %vm1149 = vcmp.eq.s32.totalorder %v1124, 1
        %vm1150 = vcmp.eq.s32.totalorder %v1125, 1
        %v1151 = vsel %vm1126, %v387, 0.0
        %v1152 = vsel %vm1127, %v388, 0.0
        %v1153 = vsel %vm1128, %v389, 0.0
        %v1154 = vsel %vm1129, %v390, 0.0
        %v1155 = vsel %vm1130, %v391, 0.0
        %v1156 = vsel %vm1131, %v392, 0.0
        %v1157 = vsel %vm1132, %v393, 0.0
        %v1158 = vsel %vm1133, %v394, 0.0
        %v1159 = vsel %vm1134, %v395, 0.0
        %v1160 = vsel %vm1135, %v396, 0.0
        %v1161 = vsel %vm1136, %v397, 0.0
        %v1162 = vsel %vm1137, %v398, 0.0
        %v1163 = vsel %vm1138, %v399, 0.0
        %v1164 = vsel %vm1139, %v400, 0.0
        %v1165 = vsel %vm1140, %v401, 0.0
        %v1166 = vsel %vm1141, %v402, 0.0
        %v1167 = vsel %vm1142, %v419, 0.0
        %v1168 = vsel %vm1143, %v420, 0.0
        %v1169 = vsel %vm1144, %v421, 0.0
        %v1170 = vsel %vm1145, %v422, 0.0
        %v1171 = vsel %vm1146, %v423, 0.0
        %v1172 = vsel %vm1147, %v424, 0.0
        %v1173 = vsel %vm1148, %v425, 0.0
        %v1174 = vsel %vm1149, %v426, 0.0
        %v1175 = vsel %vm1150, %v427, 0.0
        %1176 = vst [vmem:[#allocation4 + $0x20] sm:$0xff] %v1151
        %1177 = vst [vmem:[#allocation4 + $0x28] sm:$0xff] %v1152
        %1178 = vst [vmem:[#allocation4 + $0x30] sm:$0xff] %v1153
        %1179 = vst [vmem:[#allocation4 + $0x38] sm:$0xff] %v1154
        %1180 = vst [vmem:[#allocation4 + $0x40] sm:$0xff] %v1155
        %1181 = vst [vmem:[#allocation4 + $0x48] sm:$0xff] %v1156
        %1182 = vst [vmem:[#allocation4 + $0x50] sm:$0xff] %v1157
        %1183 = vst [vmem:[#allocation4 + $0x58] sm:$0xff] %v1158
        %1184 = vst [vmem:[#allocation4 + $0x60] sm:$0xff] %v1159
        %1185 = vst [vmem:[#allocation4 + $0x68] sm:$0xff] %v1160
        %1186 = vst [vmem:[#allocation4 + $0x70] sm:$0xff] %v1161
        %1187 = vst [vmem:[#allocation4 + $0x78] sm:$0xff] %v1162
        %1188 = vst [vmem:[#allocation4 + $0x80] sm:$0xff] %v1163
        %1189 = vst [vmem:[#allocation4 + $0x88] sm:$0xff] %v1164
        %1190 = vst [vmem:[#allocation4 + $0x90] sm:$0xff] %v1165
        %1191 = vst [vmem:[#allocation4 + $0x98] sm:$0xff] %v1166
        %1192 = vst [vmem:[#allocation4 + $0xa0] sm:$0xff] %v1167
        %1193 = vst [vmem:[#allocation4 + $0xa8] sm:$0xff] %v1168
        %1194 = vst [vmem:[#allocation4 + $0xb0] sm:$0xff] %v1169
        %1195 = vst [vmem:[#allocation4 + $0xb8] sm:$0xff] %v1170
        %1196 = vst [vmem:[#allocation4 + $0xc0] sm:$0xff] %v1171
        %1197 = vst [vmem:[#allocation4 + $0xc8] sm:$0xff] %v1172
        %1198 = vst [vmem:[#allocation4 + $0xd0] sm:$0xff] %v1173
        %1199 = vst [vmem:[#allocation4 + $0xd8] sm:$0xff] %v1174
        %1200 = vst [vmem:[#allocation4 + $0xe0] sm:$0xf] %v1175
        %1201 = vst [vmem:[#allocation5] sm:$0xff] 0.0
        %1202 = vst [vmem:[#allocation5 + $0x8] sm:$0xff] 0.0
        %1203 = vst [vmem:[#allocation5 + $0x10] sm:$0xff] 0.0
        %1204 = vst [vmem:[#allocation5 + $0x18] sm:$0xff] 0.0
        %1205 = vst [vmem:[#allocation5 + $0xe4] sm:$0xff] 0.0
        %1206 = vst [vmem:[#allocation5 + $0xec] sm:$0xff] 0.0
        %1207 = vst [vmem:[#allocation5 + $0xf4] sm:$0xff] 0.0
        %1208 = vst [vmem:[#allocation5 + $0xfc] sm:$0xff] 0.0
        %1209 = vst [vmem:[#allocation5 + $0x104] sm:$0xf] 0.0
        %vm1210 = vcmp.ge.s32.totalorder %v992, 4294967295
        %vm1211 = vcmp.ge.s32.totalorder %v993, 4294967295
        %vm1212 = vcmp.ge.s32.totalorder %v994, 4294967295
        %vm1213 = vcmp.ge.s32.totalorder %v995, 4294967295
        %vm1214 = vcmp.ge.s32.totalorder %v996, 4294967295
        %vm1215 = vcmp.ge.s32.totalorder %v997, 4294967295
        %vm1216 = vcmp.ge.s32.totalorder %v998, 4294967295
        %vm1217 = vcmp.ge.s32.totalorder %v999, 4294967295
        %vm1218 = vcmp.ge.s32.totalorder %v1000, 4294967295
        %vm1219 = vcmp.ge.s32.totalorder %v1001, 4294967295
        %vm1220 = vcmp.ge.s32.totalorder %v1002, 4294967295
        %vm1221 = vcmp.ge.s32.totalorder %v1003, 4294967295
        %vm1222 = vcmp.ge.s32.totalorder %v1004, 4294967295
        %vm1223 = vcmp.ge.s32.totalorder %v1005, 4294967295
        %vm1224 = vcmp.ge.s32.totalorder %v1006, 4294967295
        %vm1225 = vcmp.ge.s32.totalorder %v1007, 4294967295
        %vm1226 = vcmp.ge.s32.totalorder %v1008, 4294967295
        %vm1227 = vcmp.ge.s32.totalorder %v1009, 4294967295
        %vm1228 = vcmp.ge.s32.totalorder %v1010, 4294967295
        %vm1229 = vcmp.ge.s32.totalorder %v1011, 4294967295
        %vm1230 = vcmp.ge.s32.totalorder %v1012, 4294967295
        %vm1231 = vcmp.ge.s32.totalorder %v1013, 4294967295
        %vm1232 = vcmp.ge.s32.totalorder %v1014, 4294967295
        %vm1233 = vcmp.ge.s32.totalorder %v1015, 4294967295
        %vm1234 = vcmp.ge.s32.totalorder %v1016, 4294967295
        %vm1235 = vcmp.le.s32.totalorder %v992, 12
        %vm1236 = vcmp.le.s32.totalorder %v993, 12
        %vm1237 = vcmp.le.s32.totalorder %v994, 12
        %vm1238 = vcmp.le.s32.totalorder %v995, 12
        %vm1239 = vcmp.le.s32.totalorder %v996, 12
        %vm1240 = vcmp.le.s32.totalorder %v997, 12
        %vm1241 = vcmp.le.s32.totalorder %v998, 12
        %vm1242 = vcmp.le.s32.totalorder %v999, 12
        %vm1243 = vcmp.le.s32.totalorder %v1000, 12
        %vm1244 = vcmp.le.s32.totalorder %v1001, 12
        %vm1245 = vcmp.le.s32.totalorder %v1002, 12
        %vm1246 = vcmp.le.s32.totalorder %v1003, 12
        %vm1247 = vcmp.le.s32.totalorder %v1004, 12
        %vm1248 = vcmp.le.s32.totalorder %v1005, 12
        %vm1249 = vcmp.le.s32.totalorder %v1006, 12
        %vm1250 = vcmp.le.s32.totalorder %v1007, 12
        %vm1251 = vcmp.le.s32.totalorder %v1008, 12
        %vm1252 = vcmp.le.s32.totalorder %v1009, 12
        %vm1253 = vcmp.le.s32.totalorder %v1010, 12
        %vm1254 = vcmp.le.s32.totalorder %v1011, 12
        %vm1255 = vcmp.le.s32.totalorder %v1012, 12
        %vm1256 = vcmp.le.s32.totalorder %v1013, 12
        %vm1257 = vcmp.le.s32.totalorder %v1014, 12
        %vm1258 = vcmp.le.s32.totalorder %v1015, 12
        %vm1259 = vcmp.le.s32.totalorder %v1016, 12
        %vm1260 = vmand %vm1210, %vm1235
        %vm1261 = vmand %vm1211, %vm1236
        %vm1262 = vmand %vm1212, %vm1237
        %vm1263 = vmand %vm1213, %vm1238
        %vm1264 = vmand %vm1214, %vm1239
        %vm1265 = vmand %vm1215, %vm1240
        %vm1266 = vmand %vm1216, %vm1241
        %vm1267 = vmand %vm1217, %vm1242
        %vm1268 = vmand %vm1218, %vm1243
        %vm1269 = vmand %vm1219, %vm1244
        %vm1270 = vmand %vm1220, %vm1245
        %vm1271 = vmand %vm1221, %vm1246
        %vm1272 = vmand %vm1222, %vm1247
        %vm1273 = vmand %vm1223, %vm1248
        %vm1274 = vmand %vm1224, %vm1249
        %vm1275 = vmand %vm1225, %vm1250
        %vm1276 = vmand %vm1226, %vm1251
        %vm1277 = vmand %vm1227, %vm1252
        %vm1278 = vmand %vm1228, %vm1253
        %vm1279 = vmand %vm1229, %vm1254
        %vm1280 = vmand %vm1230, %vm1255
        %vm1281 = vmand %vm1231, %vm1256
        %vm1282 = vmand %vm1232, %vm1257
        %vm1283 = vmand %vm1233, %vm1258
        %vm1284 = vmand %vm1234, %vm1259
        %v1285 = vsel %vm1260, 1, 0
        %v1286 = vsel %vm1261, 1, 0
        %v1287 = vsel %vm1262, 1, 0
        %v1288 = vsel %vm1263, 1, 0
        %v1289 = vsel %vm1264, 1, 0
        %v1290 = vsel %vm1265, 1, 0
        %v1291 = vsel %vm1266, 1, 0
        %v1292 = vsel %vm1267, 1, 0
        %v1293 = vsel %vm1268, 1, 0
        %v1294 = vsel %vm1269, 1, 0
        %v1295 = vsel %vm1270, 1, 0
        %v1296 = vsel %vm1271, 1, 0
        %v1297 = vsel %vm1272, 1, 0
        %v1298 = vsel %vm1273, 1, 0
        %v1299 = vsel %vm1274, 1, 0
        %v1300 = vsel %vm1275, 1, 0
        %v1301 = vsel %vm1276, 1, 0
        %v1302 = vsel %vm1277, 1, 0
        %v1303 = vsel %vm1278, 1, 0
        %v1304 = vsel %vm1279, 1, 0
        %v1305 = vsel %vm1280, 1, 0
        %v1306 = vsel %vm1281, 1, 0
        %v1307 = vsel %vm1282, 1, 0
        %v1308 = vsel %vm1283, 1, 0
        %v1309 = vsel %vm1284, 1, 0
        %vm1310 = vcmp.eq.s32.totalorder %v1285, 1
        %vm1311 = vcmp.eq.s32.totalorder %v1286, 1
        %vm1312 = vcmp.eq.s32.totalorder %v1287, 1
        %vm1313 = vcmp.eq.s32.totalorder %v1288, 1
        %vm1314 = vcmp.eq.s32.totalorder %v1289, 1
        %vm1315 = vcmp.eq.s32.totalorder %v1290, 1
        %vm1316 = vcmp.eq.s32.totalorder %v1291, 1
        %vm1317 = vcmp.eq.s32.totalorder %v1292, 1
        %vm1318 = vcmp.eq.s32.totalorder %v1293, 1
        %vm1319 = vcmp.eq.s32.totalorder %v1294, 1
        %vm1320 = vcmp.eq.s32.totalorder %v1295, 1
        %vm1321 = vcmp.eq.s32.totalorder %v1296, 1
        %vm1322 = vcmp.eq.s32.totalorder %v1297, 1
        %vm1323 = vcmp.eq.s32.totalorder %v1298, 1
        %vm1324 = vcmp.eq.s32.totalorder %v1299, 1
        %vm1325 = vcmp.eq.s32.totalorder %v1300, 1
        %vm1326 = vcmp.eq.s32.totalorder %v1301, 1
        %vm1327 = vcmp.eq.s32.totalorder %v1302, 1
        %vm1328 = vcmp.eq.s32.totalorder %v1303, 1
        %vm1329 = vcmp.eq.s32.totalorder %v1304, 1
        %vm1330 = vcmp.eq.s32.totalorder %v1305, 1
        %vm1331 = vcmp.eq.s32.totalorder %v1306, 1
        %vm1332 = vcmp.eq.s32.totalorder %v1307, 1
        %vm1333 = vcmp.eq.s32.totalorder %v1308, 1
        %vm1334 = vcmp.eq.s32.totalorder %v1309, 1
        %v1335 = vsel %vm1310, %v387, 0.0
        %v1336 = vsel %vm1311, %v388, 0.0
        %v1337 = vsel %vm1312, %v389, 0.0
        %v1338 = vsel %vm1313, %v390, 0.0
        %v1339 = vsel %vm1314, %v391, 0.0
        %v1340 = vsel %vm1315, %v392, 0.0
        %v1341 = vsel %vm1316, %v393, 0.0
        %v1342 = vsel %vm1317, %v394, 0.0
        %v1343 = vsel %vm1318, %v395, 0.0
        %v1344 = vsel %vm1319, %v396, 0.0
        %v1345 = vsel %vm1320, %v397, 0.0
        %v1346 = vsel %vm1321, %v398, 0.0
        %v1347 = vsel %vm1322, %v399, 0.0
        %v1348 = vsel %vm1323, %v400, 0.0
        %v1349 = vsel %vm1324, %v401, 0.0
        %v1350 = vsel %vm1325, %v402, 0.0
        %v1351 = vsel %vm1326, %v419, 0.0
        %v1352 = vsel %vm1327, %v420, 0.0
        %v1353 = vsel %vm1328, %v421, 0.0
        %v1354 = vsel %vm1329, %v422, 0.0
        %v1355 = vsel %vm1330, %v423, 0.0
        %v1356 = vsel %vm1331, %v424, 0.0
        %v1357 = vsel %vm1332, %v425, 0.0
        %v1358 = vsel %vm1333, %v426, 0.0
        %v1359 = vsel %vm1334, %v427, 0.0
        %1360 = vst [vmem:[#allocation5 + $0x20] sm:$0xff] %v1335
        %1361 = vst [vmem:[#allocation5 + $0x28] sm:$0xff] %v1336
        %1362 = vst [vmem:[#allocation5 + $0x30] sm:$0xff] %v1337
        %1363 = vst [vmem:[#allocation5 + $0x38] sm:$0xff] %v1338
        %1364 = vst [vmem:[#allocation5 + $0x40] sm:$0xff] %v1339
        %1365 = vst [vmem:[#allocation5 + $0x48] sm:$0xff] %v1340
        %1366 = vst [vmem:[#allocation5 + $0x50] sm:$0xff] %v1341
        %1367 = vst [vmem:[#allocation5 + $0x58] sm:$0xff] %v1342
        %1368 = vst [vmem:[#allocation5 + $0x60] sm:$0xff] %v1343
        %1369 = vst [vmem:[#allocation5 + $0x68] sm:$0xff] %v1344
        %1370 = vst [vmem:[#allocation5 + $0x70] sm:$0xff] %v1345
        %1371 = vst [vmem:[#allocation5 + $0x78] sm:$0xff] %v1346
        %1372 = vst [vmem:[#allocation5 + $0x80] sm:$0xff] %v1347
        %1373 = vst [vmem:[#allocation5 + $0x88] sm:$0xff] %v1348
        %1374 = vst [vmem:[#allocation5 + $0x90] sm:$0xff] %v1349
        %1375 = vst [vmem:[#allocation5 + $0x98] sm:$0xff] %v1350
        %1376 = vst [vmem:[#allocation5 + $0xa0] sm:$0xff] %v1351
        %1377 = vst [vmem:[#allocation5 + $0xa8] sm:$0xff] %v1352
        %1378 = vst [vmem:[#allocation5 + $0xb0] sm:$0xff] %v1353
        %1379 = vst [vmem:[#allocation5 + $0xb8] sm:$0xff] %v1354
        %1380 = vst [vmem:[#allocation5 + $0xc0] sm:$0xff] %v1355
        %1381 = vst [vmem:[#allocation5 + $0xc8] sm:$0xff] %v1356
        %1382 = vst [vmem:[#allocation5 + $0xd0] sm:$0xff] %v1357
        %1383 = vst [vmem:[#allocation5 + $0xd8] sm:$0xff] %v1358
        %1384 = vst [vmem:[#allocation5 + $0xe0] sm:$0xf] %v1359
        %1385 = vst [vmem:[#allocation6] sm:$0xff] 0.0
        %1386 = vst [vmem:[#allocation6 + $0x8] sm:$0xff] 0.0
        %1387 = vst [vmem:[#allocation6 + $0x10] sm:$0xff] 0.0
        %1388 = vst [vmem:[#allocation6 + $0x18] sm:$0xff] 0.0
        %1389 = vst [vmem:[#allocation6 + $0xe4] sm:$0xff] 0.0
        %1390 = vst [vmem:[#allocation6 + $0xec] sm:$0xff] 0.0
        %1391 = vst [vmem:[#allocation6 + $0xf4] sm:$0xff] 0.0
        %1392 = vst [vmem:[#allocation6 + $0xfc] sm:$0xff] 0.0
        %1393 = vst [vmem:[#allocation6 + $0x104] sm:$0xf] 0.0
        %1394 = vst [vmem:[#allocation6 + $0x20] sm:$0xff] %v387
        %1395 = vst [vmem:[#allocation6 + $0x28] sm:$0xff] %v388
        %1396 = vst [vmem:[#allocation6 + $0x30] sm:$0xff] %v389
        %1397 = vst [vmem:[#allocation6 + $0x38] sm:$0xff] %v390
        %1398 = vst [vmem:[#allocation6 + $0x40] sm:$0xff] %v391
        %1399 = vst [vmem:[#allocation6 + $0x48] sm:$0xff] %v392
        %1400 = vst [vmem:[#allocation6 + $0x50] sm:$0xff] %v393
        %1401 = vst [vmem:[#allocation6 + $0x58] sm:$0xff] %v394
        %1402 = vst [vmem:[#allocation6 + $0x60] sm:$0xff] %v395
        %1403 = vst [vmem:[#allocation6 + $0x68] sm:$0xff] %v396
        %1404 = vst [vmem:[#allocation6 + $0x70] sm:$0xff] %v397
        %1405 = vst [vmem:[#allocation6 + $0x78] sm:$0xff] %v398
        %1406 = vst [vmem:[#allocation6 + $0x80] sm:$0xff] %v399
        %1407 = vst [vmem:[#allocation6 + $0x88] sm:$0xff] %v400
        %1408 = vst [vmem:[#allocation6 + $0x90] sm:$0xff] %v401
        %1409 = vst [vmem:[#allocation6 + $0x98] sm:$0xff] %v402
        %1410 = vst [vmem:[#allocation6 + $0xa0] sm:$0xff] %v419
        %1411 = vst [vmem:[#allocation6 + $0xa8] sm:$0xff] %v420
        %1412 = vst [vmem:[#allocation6 + $0xb0] sm:$0xff] %v421
        %1413 = vst [vmem:[#allocation6 + $0xb8] sm:$0xff] %v422
        %1414 = vst [vmem:[#allocation6 + $0xc0] sm:$0xff] %v423
        %1415 = vst [vmem:[#allocation6 + $0xc8] sm:$0xff] %v424
        %1416 = vst [vmem:[#allocation6 + $0xd0] sm:$0xff] %v425
        %1417 = vst [vmem:[#allocation6 + $0xd8] sm:$0xff] %v426
        %1418 = vst [vmem:[#allocation6 + $0xe0] sm:$0xf] %v427
        %1419 = vst [vmem:[#allocation7] sm:$0xff] 0.0
        %1420 = vst [vmem:[#allocation7 + $0x8] sm:$0xff] 0.0
        %1421 = vst [vmem:[#allocation7 + $0x10] sm:$0xff] 0.0
        %1422 = vst [vmem:[#allocation7 + $0x18] sm:$0xff] 0.0
        %1423 = vst [vmem:[#allocation7 + $0xe4] sm:$0xff] 0.0
        %1424 = vst [vmem:[#allocation7 + $0xec] sm:$0xff] 0.0
        %1425 = vst [vmem:[#allocation7 + $0xf4] sm:$0xff] 0.0
        %1426 = vst [vmem:[#allocation7 + $0xfc] sm:$0xff] 0.0
        %1427 = vst [vmem:[#allocation7 + $0x104] sm:$0xf] 0.0
        %vm1428 = vcmp.ge.s32.totalorder %v992, 1
        %vm1429 = vcmp.ge.s32.totalorder %v993, 1
        %vm1430 = vcmp.ge.s32.totalorder %v994, 1
        %vm1431 = vcmp.ge.s32.totalorder %v995, 1
        %vm1432 = vcmp.ge.s32.totalorder %v996, 1
        %vm1433 = vcmp.ge.s32.totalorder %v997, 1
        %vm1434 = vcmp.ge.s32.totalorder %v998, 1
        %vm1435 = vcmp.ge.s32.totalorder %v999, 1
        %vm1436 = vcmp.ge.s32.totalorder %v1000, 1
        %vm1437 = vcmp.ge.s32.totalorder %v1001, 1
        %vm1438 = vcmp.ge.s32.totalorder %v1002, 1
        %vm1439 = vcmp.ge.s32.totalorder %v1003, 1
        %vm1440 = vcmp.ge.s32.totalorder %v1004, 1
        %vm1441 = vcmp.ge.s32.totalorder %v1005, 1
        %vm1442 = vcmp.ge.s32.totalorder %v1006, 1
        %vm1443 = vcmp.ge.s32.totalorder %v1007, 1
        %vm1444 = vcmp.ge.s32.totalorder %v1008, 1
        %vm1445 = vcmp.ge.s32.totalorder %v1009, 1
        %vm1446 = vcmp.ge.s32.totalorder %v1010, 1
        %vm1447 = vcmp.ge.s32.totalorder %v1011, 1
        %vm1448 = vcmp.ge.s32.totalorder %v1012, 1
        %vm1449 = vcmp.ge.s32.totalorder %v1013, 1
        %vm1450 = vcmp.ge.s32.totalorder %v1014, 1
        %vm1451 = vcmp.ge.s32.totalorder %v1015, 1
        %vm1452 = vcmp.ge.s32.totalorder %v1016, 1
        %vm1453 = vcmp.le.s32.totalorder %v992, 14
        %vm1454 = vcmp.le.s32.totalorder %v993, 14
        %vm1455 = vcmp.le.s32.totalorder %v994, 14
        %vm1456 = vcmp.le.s32.totalorder %v995, 14
        %vm1457 = vcmp.le.s32.totalorder %v996, 14
        %vm1458 = vcmp.le.s32.totalorder %v997, 14
        %vm1459 = vcmp.le.s32.totalorder %v998, 14
        %vm1460 = vcmp.le.s32.totalorder %v999, 14
        %vm1461 = vcmp.le.s32.totalorder %v1000, 14
        %vm1462 = vcmp.le.s32.totalorder %v1001, 14
        %vm1463 = vcmp.le.s32.totalorder %v1002, 14
        %vm1464 = vcmp.le.s32.totalorder %v1003, 14
        %vm1465 = vcmp.le.s32.totalorder %v1004, 14
        %vm1466 = vcmp.le.s32.totalorder %v1005, 14
        %vm1467 = vcmp.le.s32.totalorder %v1006, 14
        %vm1468 = vcmp.le.s32.totalorder %v1007, 14
        %vm1469 = vcmp.le.s32.totalorder %v1008, 14
        %vm1470 = vcmp.le.s32.totalorder %v1009, 14
        %vm1471 = vcmp.le.s32.totalorder %v1010, 14
        %vm1472 = vcmp.le.s32.totalorder %v1011, 14
        %vm1473 = vcmp.le.s32.totalorder %v1012, 14
        %vm1474 = vcmp.le.s32.totalorder %v1013, 14
        %vm1475 = vcmp.le.s32.totalorder %v1014, 14
        %vm1476 = vcmp.le.s32.totalorder %v1015, 14
        %vm1477 = vcmp.le.s32.totalorder %v1016, 14
        %vm1478 = vmand %vm1428, %vm1453
        %vm1479 = vmand %vm1429, %vm1454
        %vm1480 = vmand %vm1430, %vm1455
        %vm1481 = vmand %vm1431, %vm1456
        %vm1482 = vmand %vm1432, %vm1457
        %vm1483 = vmand %vm1433, %vm1458
        %vm1484 = vmand %vm1434, %vm1459
        %vm1485 = vmand %vm1435, %vm1460
        %vm1486 = vmand %vm1436, %vm1461
        %vm1487 = vmand %vm1437, %vm1462
        %vm1488 = vmand %vm1438, %vm1463
        %vm1489 = vmand %vm1439, %vm1464
        %vm1490 = vmand %vm1440, %vm1465
        %vm1491 = vmand %vm1441, %vm1466
        %vm1492 = vmand %vm1442, %vm1467
        %vm1493 = vmand %vm1443, %vm1468
        %vm1494 = vmand %vm1444, %vm1469
        %vm1495 = vmand %vm1445, %vm1470
        %vm1496 = vmand %vm1446, %vm1471
        %vm1497 = vmand %vm1447, %vm1472
        %vm1498 = vmand %vm1448, %vm1473
        %vm1499 = vmand %vm1449, %vm1474
        %vm1500 = vmand %vm1450, %vm1475
        %vm1501 = vmand %vm1451, %vm1476
        %vm1502 = vmand %vm1452, %vm1477
        %v1503 = vsel %vm1478, 1, 0
        %v1504 = vsel %vm1479, 1, 0
        %v1505 = vsel %vm1480, 1, 0
        %v1506 = vsel %vm1481, 1, 0
        %v1507 = vsel %vm1482, 1, 0
        %v1508 = vsel %vm1483, 1, 0
        %v1509 = vsel %vm1484, 1, 0
        %v1510 = vsel %vm1485, 1, 0
        %v1511 = vsel %vm1486, 1, 0
        %v1512 = vsel %vm1487, 1, 0
        %v1513 = vsel %vm1488, 1, 0
        %v1514 = vsel %vm1489, 1, 0
        %v1515 = vsel %vm1490, 1, 0
        %v1516 = vsel %vm1491, 1, 0
        %v1517 = vsel %vm1492, 1, 0
        %v1518 = vsel %vm1493, 1, 0
        %v1519 = vsel %vm1494, 1, 0
        %v1520 = vsel %vm1495, 1, 0
        %v1521 = vsel %vm1496, 1, 0
        %v1522 = vsel %vm1497, 1, 0
        %v1523 = vsel %vm1498, 1, 0
        %v1524 = vsel %vm1499, 1, 0
        %v1525 = vsel %vm1500, 1, 0
        %v1526 = vsel %vm1501, 1, 0
        %v1527 = vsel %vm1502, 1, 0
        %vm1528 = vcmp.eq.s32.totalorder %v1503, 1
        %vm1529 = vcmp.eq.s32.totalorder %v1504, 1
        %vm1530 = vcmp.eq.s32.totalorder %v1505, 1
        %vm1531 = vcmp.eq.s32.totalorder %v1506, 1
        %vm1532 = vcmp.eq.s32.totalorder %v1507, 1
        %vm1533 = vcmp.eq.s32.totalorder %v1508, 1
        %vm1534 = vcmp.eq.s32.totalorder %v1509, 1
        %vm1535 = vcmp.eq.s32.totalorder %v1510, 1
        %vm1536 = vcmp.eq.s32.totalorder %v1511, 1
        %vm1537 = vcmp.eq.s32.totalorder %v1512, 1
        %vm1538 = vcmp.eq.s32.totalorder %v1513, 1
        %vm1539 = vcmp.eq.s32.totalorder %v1514, 1
        %vm1540 = vcmp.eq.s32.totalorder %v1515, 1
        %vm1541 = vcmp.eq.s32.totalorder %v1516, 1
        %vm1542 = vcmp.eq.s32.totalorder %v1517, 1
        %vm1543 = vcmp.eq.s32.totalorder %v1518, 1
        %vm1544 = vcmp.eq.s32.totalorder %v1519, 1
        %vm1545 = vcmp.eq.s32.totalorder %v1520, 1
        %vm1546 = vcmp.eq.s32.totalorder %v1521, 1
        %vm1547 = vcmp.eq.s32.totalorder %v1522, 1
        %vm1548 = vcmp.eq.s32.totalorder %v1523, 1
        %vm1549 = vcmp.eq.s32.totalorder %v1524, 1
        %vm1550 = vcmp.eq.s32.totalorder %v1525, 1
        %vm1551 = vcmp.eq.s32.totalorder %v1526, 1
        %vm1552 = vcmp.eq.s32.totalorder %v1527, 1
        %v1553 = vsel %vm1528, %v387, 0.0
        %v1554 = vsel %vm1529, %v388, 0.0
        %v1555 = vsel %vm1530, %v389, 0.0
        %v1556 = vsel %vm1531, %v390, 0.0
        %v1557 = vsel %vm1532, %v391, 0.0
        %v1558 = vsel %vm1533, %v392, 0.0
        %v1559 = vsel %vm1534, %v393, 0.0
        %v1560 = vsel %vm1535, %v394, 0.0
        %v1561 = vsel %vm1536, %v395, 0.0
        %v1562 = vsel %vm1537, %v396, 0.0
        %v1563 = vsel %vm1538, %v397, 0.0
        %v1564 = vsel %vm1539, %v398, 0.0
        %v1565 = vsel %vm1540, %v399, 0.0
        %v1566 = vsel %vm1541, %v400, 0.0
        %v1567 = vsel %vm1542, %v401, 0.0
        %v1568 = vsel %vm1543, %v402, 0.0
        %v1569 = vsel %vm1544, %v419, 0.0
        %v1570 = vsel %vm1545, %v420, 0.0
        %v1571 = vsel %vm1546, %v421, 0.0
        %v1572 = vsel %vm1547, %v422, 0.0
        %v1573 = vsel %vm1548, %v423, 0.0
        %v1574 = vsel %vm1549, %v424, 0.0
        %v1575 = vsel %vm1550, %v425, 0.0
        %v1576 = vsel %vm1551, %v426, 0.0
        %v1577 = vsel %vm1552, %v427, 0.0
        %1578 = vst [vmem:[#allocation7 + $0x20] sm:$0xff] %v1553
        %1579 = vst [vmem:[#allocation7 + $0x28] sm:$0xff] %v1554
        %1580 = vst [vmem:[#allocation7 + $0x30] sm:$0xff] %v1555
        %1581 = vst [vmem:[#allocation7 + $0x38] sm:$0xff] %v1556
        %1582 = vst [vmem:[#allocation7 + $0x40] sm:$0xff] %v1557
        %1583 = vst [vmem:[#allocation7 + $0x48] sm:$0xff] %v1558
        %1584 = vst [vmem:[#allocation7 + $0x50] sm:$0xff] %v1559
        %1585 = vst [vmem:[#allocation7 + $0x58] sm:$0xff] %v1560
        %1586 = vst [vmem:[#allocation7 + $0x60] sm:$0xff] %v1561
        %1587 = vst [vmem:[#allocation7 + $0x68] sm:$0xff] %v1562
        %1588 = vst [vmem:[#allocation7 + $0x70] sm:$0xff] %v1563
        %1589 = vst [vmem:[#allocation7 + $0x78] sm:$0xff] %v1564
        %1590 = vst [vmem:[#allocation7 + $0x80] sm:$0xff] %v1565
        %1591 = vst [vmem:[#allocation7 + $0x88] sm:$0xff] %v1566
        %1592 = vst [vmem:[#allocation7 + $0x90] sm:$0xff] %v1567
        %1593 = vst [vmem:[#allocation7 + $0x98] sm:$0xff] %v1568
        %1594 = vst [vmem:[#allocation7 + $0xa0] sm:$0xff] %v1569
        %1595 = vst [vmem:[#allocation7 + $0xa8] sm:$0xff] %v1570
        %1596 = vst [vmem:[#allocation7 + $0xb0] sm:$0xff] %v1571
        %1597 = vst [vmem:[#allocation7 + $0xb8] sm:$0xff] %v1572
        %1598 = vst [vmem:[#allocation7 + $0xc0] sm:$0xff] %v1573
        %1599 = vst [vmem:[#allocation7 + $0xc8] sm:$0xff] %v1574
        %1600 = vst [vmem:[#allocation7 + $0xd0] sm:$0xff] %v1575
        %1601 = vst [vmem:[#allocation7 + $0xd8] sm:$0xff] %v1576
        %1602 = vst [vmem:[#allocation7 + $0xe0] sm:$0xf] %v1577
        %1603 = vst [vmem:[#allocation8] sm:$0xff] 0.0
        %1604 = vst [vmem:[#allocation8 + $0x8] sm:$0xff] 0.0
        %1605 = vst [vmem:[#allocation8 + $0x10] sm:$0xff] 0.0
        %1606 = vst [vmem:[#allocation8 + $0x18] sm:$0xff] 0.0
        %1607 = vst [vmem:[#allocation8 + $0xe4] sm:$0xff] 0.0
        %1608 = vst [vmem:[#allocation8 + $0xec] sm:$0xff] 0.0
        %1609 = vst [vmem:[#allocation8 + $0xf4] sm:$0xff] 0.0
        %1610 = vst [vmem:[#allocation8 + $0xfc] sm:$0xff] 0.0
        %1611 = vst [vmem:[#allocation8 + $0x104] sm:$0xf] 0.0
        %vm1612 = vcmp.ge.s32.totalorder %v992, 2
        %vm1613 = vcmp.ge.s32.totalorder %v993, 2
        %vm1614 = vcmp.ge.s32.totalorder %v994, 2
        %vm1615 = vcmp.ge.s32.totalorder %v995, 2
        %vm1616 = vcmp.ge.s32.totalorder %v996, 2
        %vm1617 = vcmp.ge.s32.totalorder %v997, 2
        %vm1618 = vcmp.ge.s32.totalorder %v998, 2
        %vm1619 = vcmp.ge.s32.totalorder %v999, 2
        %vm1620 = vcmp.ge.s32.totalorder %v1000, 2
        %vm1621 = vcmp.ge.s32.totalorder %v1001, 2
        %vm1622 = vcmp.ge.s32.totalorder %v1002, 2
        %vm1623 = vcmp.ge.s32.totalorder %v1003, 2
        %vm1624 = vcmp.ge.s32.totalorder %v1004, 2
        %vm1625 = vcmp.ge.s32.totalorder %v1005, 2
        %vm1626 = vcmp.ge.s32.totalorder %v1006, 2
        %vm1627 = vcmp.ge.s32.totalorder %v1007, 2
        %vm1628 = vcmp.ge.s32.totalorder %v1008, 2
        %vm1629 = vcmp.ge.s32.totalorder %v1009, 2
        %vm1630 = vcmp.ge.s32.totalorder %v1010, 2
        %vm1631 = vcmp.ge.s32.totalorder %v1011, 2
        %vm1632 = vcmp.ge.s32.totalorder %v1012, 2
        %vm1633 = vcmp.ge.s32.totalorder %v1013, 2
        %vm1634 = vcmp.ge.s32.totalorder %v1014, 2
        %vm1635 = vcmp.ge.s32.totalorder %v1015, 2
        %vm1636 = vcmp.ge.s32.totalorder %v1016, 2
        %vm1637 = vcmp.le.s32.totalorder %v992, 15
        %vm1638 = vcmp.le.s32.totalorder %v993, 15
        %vm1639 = vcmp.le.s32.totalorder %v994, 15
        %vm1640 = vcmp.le.s32.totalorder %v995, 15
        %vm1641 = vcmp.le.s32.totalorder %v996, 15
        %vm1642 = vcmp.le.s32.totalorder %v997, 15
        %vm1643 = vcmp.le.s32.totalorder %v998, 15
        %vm1644 = vcmp.le.s32.totalorder %v999, 15
        %vm1645 = vcmp.le.s32.totalorder %v1000, 15
        %vm1646 = vcmp.le.s32.totalorder %v1001, 15
        %vm1647 = vcmp.le.s32.totalorder %v1002, 15
        %vm1648 = vcmp.le.s32.totalorder %v1003, 15
        %vm1649 = vcmp.le.s32.totalorder %v1004, 15
        %vm1650 = vcmp.le.s32.totalorder %v1005, 15
        %vm1651 = vcmp.le.s32.totalorder %v1006, 15
        %vm1652 = vcmp.le.s32.totalorder %v1007, 15
        %vm1653 = vcmp.le.s32.totalorder %v1008, 15
        %vm1654 = vcmp.le.s32.totalorder %v1009, 15
        %vm1655 = vcmp.le.s32.totalorder %v1010, 15
        %vm1656 = vcmp.le.s32.totalorder %v1011, 15
        %vm1657 = vcmp.le.s32.totalorder %v1012, 15
        %vm1658 = vcmp.le.s32.totalorder %v1013, 15
        %vm1659 = vcmp.le.s32.totalorder %v1014, 15
        %vm1660 = vcmp.le.s32.totalorder %v1015, 15
        %vm1661 = vcmp.le.s32.totalorder %v1016, 15
        %vm1662 = vmand %vm1612, %vm1637
        %vm1663 = vmand %vm1613, %vm1638
        %vm1664 = vmand %vm1614, %vm1639
        %vm1665 = vmand %vm1615, %vm1640
        %vm1666 = vmand %vm1616, %vm1641
        %vm1667 = vmand %vm1617, %vm1642
        %vm1668 = vmand %vm1618, %vm1643
        %vm1669 = vmand %vm1619, %vm1644
        %vm1670 = vmand %vm1620, %vm1645
        %vm1671 = vmand %vm1621, %vm1646
        %vm1672 = vmand %vm1622, %vm1647
        %vm1673 = vmand %vm1623, %vm1648
        %vm1674 = vmand %vm1624, %vm1649
        %vm1675 = vmand %vm1625, %vm1650
        %vm1676 = vmand %vm1626, %vm1651
        %vm1677 = vmand %vm1627, %vm1652
        %vm1678 = vmand %vm1628, %vm1653
        %vm1679 = vmand %vm1629, %vm1654
        %vm1680 = vmand %vm1630, %vm1655
        %vm1681 = vmand %vm1631, %vm1656
        %vm1682 = vmand %vm1632, %vm1657
        %vm1683 = vmand %vm1633, %vm1658
        %vm1684 = vmand %vm1634, %vm1659
        %vm1685 = vmand %vm1635, %vm1660
        %vm1686 = vmand %vm1636, %vm1661
        %v1687 = vsel %vm1662, 1, 0
        %v1688 = vsel %vm1663, 1, 0
        %v1689 = vsel %vm1664, 1, 0
        %v1690 = vsel %vm1665, 1, 0
        %v1691 = vsel %vm1666, 1, 0
        %v1692 = vsel %vm1667, 1, 0
        %v1693 = vsel %vm1668, 1, 0
        %v1694 = vsel %vm1669, 1, 0
        %v1695 = vsel %vm1670, 1, 0
        %v1696 = vsel %vm1671, 1, 0
        %v1697 = vsel %vm1672, 1, 0
        %v1698 = vsel %vm1673, 1, 0
        %v1699 = vsel %vm1674, 1, 0
        %v1700 = vsel %vm1675, 1, 0
        %v1701 = vsel %vm1676, 1, 0
        %v1702 = vsel %vm1677, 1, 0
        %v1703 = vsel %vm1678, 1, 0
        %v1704 = vsel %vm1679, 1, 0
        %v1705 = vsel %vm1680, 1, 0
        %v1706 = vsel %vm1681, 1, 0
        %v1707 = vsel %vm1682, 1, 0
        %v1708 = vsel %vm1683, 1, 0
        %v1709 = vsel %vm1684, 1, 0
        %v1710 = vsel %vm1685, 1, 0
        %v1711 = vsel %vm1686, 1, 0
        %vm1712 = vcmp.eq.s32.totalorder %v1687, 1
        %vm1713 = vcmp.eq.s32.totalorder %v1688, 1
        %vm1714 = vcmp.eq.s32.totalorder %v1689, 1
        %vm1715 = vcmp.eq.s32.totalorder %v1690, 1
        %vm1716 = vcmp.eq.s32.totalorder %v1691, 1
        %vm1717 = vcmp.eq.s32.totalorder %v1692, 1
        %vm1718 = vcmp.eq.s32.totalorder %v1693, 1
        %vm1719 = vcmp.eq.s32.totalorder %v1694, 1
        %vm1720 = vcmp.eq.s32.totalorder %v1695, 1
        %vm1721 = vcmp.eq.s32.totalorder %v1696, 1
        %vm1722 = vcmp.eq.s32.totalorder %v1697, 1
        %vm1723 = vcmp.eq.s32.totalorder %v1698, 1
        %vm1724 = vcmp.eq.s32.totalorder %v1699, 1
        %vm1725 = vcmp.eq.s32.totalorder %v1700, 1
        %vm1726 = vcmp.eq.s32.totalorder %v1701, 1
        %vm1727 = vcmp.eq.s32.totalorder %v1702, 1
        %vm1728 = vcmp.eq.s32.totalorder %v1703, 1
        %vm1729 = vcmp.eq.s32.totalorder %v1704, 1
        %vm1730 = vcmp.eq.s32.totalorder %v1705, 1
        %vm1731 = vcmp.eq.s32.totalorder %v1706, 1
        %vm1732 = vcmp.eq.s32.totalorder %v1707, 1
        %vm1733 = vcmp.eq.s32.totalorder %v1708, 1
        %vm1734 = vcmp.eq.s32.totalorder %v1709, 1
        %vm1735 = vcmp.eq.s32.totalorder %v1710, 1
        %vm1736 = vcmp.eq.s32.totalorder %v1711, 1
        %v1737 = vsel %vm1712, %v387, 0.0
        %v1738 = vsel %vm1713, %v388, 0.0
        %v1739 = vsel %vm1714, %v389, 0.0
        %v1740 = vsel %vm1715, %v390, 0.0
        %v1741 = vsel %vm1716, %v391, 0.0
        %v1742 = vsel %vm1717, %v392, 0.0
        %v1743 = vsel %vm1718, %v393, 0.0
        %v1744 = vsel %vm1719, %v394, 0.0
        %v1745 = vsel %vm1720, %v395, 0.0
        %v1746 = vsel %vm1721, %v396, 0.0
        %v1747 = vsel %vm1722, %v397, 0.0
        %v1748 = vsel %vm1723, %v398, 0.0
        %v1749 = vsel %vm1724, %v399, 0.0
        %v1750 = vsel %vm1725, %v400, 0.0
        %v1751 = vsel %vm1726, %v401, 0.0
        %v1752 = vsel %vm1727, %v402, 0.0
        %v1753 = vsel %vm1728, %v419, 0.0
        %v1754 = vsel %vm1729, %v420, 0.0
        %v1755 = vsel %vm1730, %v421, 0.0
        %v1756 = vsel %vm1731, %v422, 0.0
        %v1757 = vsel %vm1732, %v423, 0.0
        %v1758 = vsel %vm1733, %v424, 0.0
        %v1759 = vsel %vm1734, %v425, 0.0
        %v1760 = vsel %vm1735, %v426, 0.0
        %v1761 = vsel %vm1736, %v427, 0.0
        %1762 = vst [vmem:[#allocation8 + $0x20] sm:$0xff] %v1737
        %1763 = vst [vmem:[#allocation8 + $0x28] sm:$0xff] %v1738
        %1764 = vst [vmem:[#allocation8 + $0x30] sm:$0xff] %v1739
        %1765 = vst [vmem:[#allocation8 + $0x38] sm:$0xff] %v1740
        %1766 = vst [vmem:[#allocation8 + $0x40] sm:$0xff] %v1741
        %1767 = vst [vmem:[#allocation8 + $0x48] sm:$0xff] %v1742
        %1768 = vst [vmem:[#allocation8 + $0x50] sm:$0xff] %v1743
        %1769 = vst [vmem:[#allocation8 + $0x58] sm:$0xff] %v1744
        %1770 = vst [vmem:[#allocation8 + $0x60] sm:$0xff] %v1745
        %1771 = vst [vmem:[#allocation8 + $0x68] sm:$0xff] %v1746
        %1772 = vst [vmem:[#allocation8 + $0x70] sm:$0xff] %v1747
        %1773 = vst [vmem:[#allocation8 + $0x78] sm:$0xff] %v1748
        %1774 = vst [vmem:[#allocation8 + $0x80] sm:$0xff] %v1749
        %1775 = vst [vmem:[#allocation8 + $0x88] sm:$0xff] %v1750
        %1776 = vst [vmem:[#allocation8 + $0x90] sm:$0xff] %v1751
        %1777 = vst [vmem:[#allocation8 + $0x98] sm:$0xff] %v1752
        %1778 = vst [vmem:[#allocation8 + $0xa0] sm:$0xff] %v1753
        %1779 = vst [vmem:[#allocation8 + $0xa8] sm:$0xff] %v1754
        %1780 = vst [vmem:[#allocation8 + $0xb0] sm:$0xff] %v1755
        %1781 = vst [vmem:[#allocation8 + $0xb8] sm:$0xff] %v1756
        %1782 = vst [vmem:[#allocation8 + $0xc0] sm:$0xff] %v1757
        %1783 = vst [vmem:[#allocation8 + $0xc8] sm:$0xff] %v1758
        %1784 = vst [vmem:[#allocation8 + $0xd0] sm:$0xff] %v1759
        %1785 = vst [vmem:[#allocation8 + $0xd8] sm:$0xff] %v1760
        %1786 = vst [vmem:[#allocation8 + $0xe0] sm:$0xf] %v1761
        %v1787 = vld [vmem:[#allocation4 + $0x2] sm:$0xff]
        %v1788 = vld [vmem:[#allocation4 + $0xa] sm:$0xff]
        %v1789 = vld [vmem:[#allocation4 + $0x12] sm:$0xff]
        %v1790 = vld [vmem:[#allocation4 + $0x1a] sm:$0xff]
        %v1791 = vld [vmem:[#allocation4 + $0x22] sm:$0xff]
        %v1792 = vld [vmem:[#allocation4 + $0x2a] sm:$0xff]
        %v1793 = vld [vmem:[#allocation4 + $0x32] sm:$0xff]
        %v1794 = vld [vmem:[#allocation4 + $0x3a] sm:$0xff]
        %v1795 = vld [vmem:[#allocation4 + $0x42] sm:$0xff]
        %v1796 = vld [vmem:[#allocation4 + $0x4a] sm:$0xff]
        %v1797 = vld [vmem:[#allocation4 + $0x52] sm:$0xff]
        %v1798 = vld [vmem:[#allocation4 + $0x5a] sm:$0xff]
        %v1799 = vld [vmem:[#allocation4 + $0x62] sm:$0xff]
        %v1800 = vld [vmem:[#allocation4 + $0x6a] sm:$0xff]
        %v1801 = vld [vmem:[#allocation4 + $0x72] sm:$0xff]
        %v1802 = vld [vmem:[#allocation4 + $0x7a] sm:$0xff]
        %v1803 = vld [vmem:[#allocation4 + $0x82] sm:$0xff]
        %v1804 = vld [vmem:[#allocation4 + $0x8a] sm:$0xff]
        %v1805 = vld [vmem:[#allocation4 + $0x92] sm:$0xff]
        %v1806 = vld [vmem:[#allocation4 + $0x9a] sm:$0xff]
        %v1807 = vld [vmem:[#allocation4 + $0xa2] sm:$0xff]
        %v1808 = vld [vmem:[#allocation4 + $0xaa] sm:$0xff]
        %v1809 = vld [vmem:[#allocation4 + $0xb2] sm:$0xff]
        %v1810 = vld [vmem:[#allocation4 + $0xba] sm:$0xff]
        %v1811 = vld [vmem:[#allocation4 + $0xc2] sm:$0xff]
        %v1812 = vlaneseq
        %v1813 = vshrl.u32 %v1812, 7
        %v1814 = vsub.s32 0, %v1813
        %v1815 = vrot.slane %v500, %v1814
        %v1816 = vmul.f32 %v1787, %v1815
        %v1817 = vmul.f32 %v1788, %v1815
        %v1818 = vmul.f32 %v1789, %v1815
        %v1819 = vmul.f32 %v1790, %v1815
        %v1820 = vmul.f32 %v1791, %v1815
        %v1821 = vmul.f32 %v1792, %v1815
        %v1822 = vmul.f32 %v1793, %v1815
        %v1823 = vmul.f32 %v1794, %v1815
        %v1824 = vmul.f32 %v1795, %v1815
        %v1825 = vmul.f32 %v1796, %v1815
        %v1826 = vmul.f32 %v1797, %v1815
        %v1827 = vmul.f32 %v1798, %v1815
        %v1828 = vmul.f32 %v1799, %v1815
        %v1829 = vmul.f32 %v1800, %v1815
        %v1830 = vmul.f32 %v1801, %v1815
        %v1831 = vmul.f32 %v1802, %v1815
        %v1832 = vmul.f32 %v1803, %v1815
        %v1833 = vmul.f32 %v1804, %v1815
        %v1834 = vmul.f32 %v1805, %v1815
        %v1835 = vmul.f32 %v1806, %v1815
        %v1836 = vmul.f32 %v1807, %v1815
        %v1837 = vmul.f32 %v1808, %v1815
        %v1838 = vmul.f32 %v1809, %v1815
        %v1839 = vmul.f32 %v1810, %v1815
        %v1840 = vmul.f32 %v1811, %v1815
        %v1841 = vld [vmem:[#allocation5 + $0x3] sm:$0xff]
        %v1842 = vld [vmem:[#allocation5 + $0xb] sm:$0xff]
        %v1843 = vld [vmem:[#allocation5 + $0x13] sm:$0xff]
        %v1844 = vld [vmem:[#allocation5 + $0x1b] sm:$0xff]
        %v1845 = vld [vmem:[#allocation5 + $0x23] sm:$0xff]
        %v1846 = vld [vmem:[#allocation5 + $0x2b] sm:$0xff]
        %v1847 = vld [vmem:[#allocation5 + $0x33] sm:$0xff]
        %v1848 = vld [vmem:[#allocation5 + $0x3b] sm:$0xff]
        %v1849 = vld [vmem:[#allocation5 + $0x43] sm:$0xff]
        %v1850 = vld [vmem:[#allocation5 + $0x4b] sm:$0xff]
        %v1851 = vld [vmem:[#allocation5 + $0x53] sm:$0xff]
        %v1852 = vld [vmem:[#allocation5 + $0x5b] sm:$0xff]
        %v1853 = vld [vmem:[#allocation5 + $0x63] sm:$0xff]
        %v1854 = vld [vmem:[#allocation5 + $0x6b] sm:$0xff]
        %v1855 = vld [vmem:[#allocation5 + $0x73] sm:$0xff]
        %v1856 = vld [vmem:[#allocation5 + $0x7b] sm:$0xff]
        %v1857 = vld [vmem:[#allocation5 + $0x83] sm:$0xff]
        %v1858 = vld [vmem:[#allocation5 + $0x8b] sm:$0xff]
        %v1859 = vld [vmem:[#allocation5 + $0x93] sm:$0xff]
        %v1860 = vld [vmem:[#allocation5 + $0x9b] sm:$0xff]
        %v1861 = vld [vmem:[#allocation5 + $0xa3] sm:$0xff]
        %v1862 = vld [vmem:[#allocation5 + $0xab] sm:$0xff]
        %v1863 = vld [vmem:[#allocation5 + $0xb3] sm:$0xff]
        %v1864 = vld [vmem:[#allocation5 + $0xbb] sm:$0xff]
        %v1865 = vld [vmem:[#allocation5 + $0xc3] sm:$0xff]
        %v1866 = vlaneseq
        %v1867 = vshrl.u32 %v1866, 7
        %v1868 = vsub.s32 1, %v1867
        %v1869 = vrot.slane %v500, %v1868
        %v1870 = vmul.f32 %v1841, %v1869
        %v1871 = vmul.f32 %v1842, %v1869
        %v1872 = vmul.f32 %v1843, %v1869
        %v1873 = vmul.f32 %v1844, %v1869
        %v1874 = vmul.f32 %v1845, %v1869
        %v1875 = vmul.f32 %v1846, %v1869
        %v1876 = vmul.f32 %v1847, %v1869
        %v1877 = vmul.f32 %v1848, %v1869
        %v1878 = vmul.f32 %v1849, %v1869
        %v1879 = vmul.f32 %v1850, %v1869
        %v1880 = vmul.f32 %v1851, %v1869
        %v1881 = vmul.f32 %v1852, %v1869
        %v1882 = vmul.f32 %v1853, %v1869
        %v1883 = vmul.f32 %v1854, %v1869
        %v1884 = vmul.f32 %v1855, %v1869
        %v1885 = vmul.f32 %v1856, %v1869
        %v1886 = vmul.f32 %v1857, %v1869
        %v1887 = vmul.f32 %v1858, %v1869
        %v1888 = vmul.f32 %v1859, %v1869
        %v1889 = vmul.f32 %v1860, %v1869
        %v1890 = vmul.f32 %v1861, %v1869
        %v1891 = vmul.f32 %v1862, %v1869
        %v1892 = vmul.f32 %v1863, %v1869
        %v1893 = vmul.f32 %v1864, %v1869
        %v1894 = vmul.f32 %v1865, %v1869
        %v1895 = vadd.f32 %v1816, %v1870
        %v1896 = vadd.f32 %v1817, %v1871
        %v1897 = vadd.f32 %v1818, %v1872
        %v1898 = vadd.f32 %v1819, %v1873
        %v1899 = vadd.f32 %v1820, %v1874
        %v1900 = vadd.f32 %v1821, %v1875
        %v1901 = vadd.f32 %v1822, %v1876
        %v1902 = vadd.f32 %v1823, %v1877
        %v1903 = vadd.f32 %v1824, %v1878
        %v1904 = vadd.f32 %v1825, %v1879
        %v1905 = vadd.f32 %v1826, %v1880
        %v1906 = vadd.f32 %v1827, %v1881
        %v1907 = vadd.f32 %v1828, %v1882
        %v1908 = vadd.f32 %v1829, %v1883
        %v1909 = vadd.f32 %v1830, %v1884
        %v1910 = vadd.f32 %v1831, %v1885
        %v1911 = vadd.f32 %v1832, %v1886
        %v1912 = vadd.f32 %v1833, %v1887
        %v1913 = vadd.f32 %v1834, %v1888
        %v1914 = vadd.f32 %v1835, %v1889
        %v1915 = vadd.f32 %v1836, %v1890
        %v1916 = vadd.f32 %v1837, %v1891
        %v1917 = vadd.f32 %v1838, %v1892
        %v1918 = vadd.f32 %v1839, %v1893
        %v1919 = vadd.f32 %v1840, %v1894
        %v1920 = vld [vmem:[#allocation6 + $0x4] sm:$0xff]
        %v1921 = vld [vmem:[#allocation6 + $0xc] sm:$0xff]
        %v1922 = vld [vmem:[#allocation6 + $0x14] sm:$0xff]
        %v1923 = vld [vmem:[#allocation6 + $0x1c] sm:$0xff]
        %v1924 = vld [vmem:[#allocation6 + $0x24] sm:$0xff]
        %v1925 = vld [vmem:[#allocation6 + $0x2c] sm:$0xff]
        %v1926 = vld [vmem:[#allocation6 + $0x34] sm:$0xff]
        %v1927 = vld [vmem:[#allocation6 + $0x3c] sm:$0xff]
        %v1928 = vld [vmem:[#allocation6 + $0x44] sm:$0xff]
        %v1929 = vld [vmem:[#allocation6 + $0x4c] sm:$0xff]
        %v1930 = vld [vmem:[#allocation6 + $0x54] sm:$0xff]
        %v1931 = vld [vmem:[#allocation6 + $0x5c] sm:$0xff]
        %v1932 = vld [vmem:[#allocation6 + $0x64] sm:$0xff]
        %v1933 = vld [vmem:[#allocation6 + $0x6c] sm:$0xff]
        %v1934 = vld [vmem:[#allocation6 + $0x74] sm:$0xff]
        %v1935 = vld [vmem:[#allocation6 + $0x7c] sm:$0xff]
        %v1936 = vld [vmem:[#allocation6 + $0x84] sm:$0xff]
        %v1937 = vld [vmem:[#allocation6 + $0x8c] sm:$0xff]
        %v1938 = vld [vmem:[#allocation6 + $0x94] sm:$0xff]
        %v1939 = vld [vmem:[#allocation6 + $0x9c] sm:$0xff]
        %v1940 = vld [vmem:[#allocation6 + $0xa4] sm:$0xff]
        %v1941 = vld [vmem:[#allocation6 + $0xac] sm:$0xff]
        %v1942 = vld [vmem:[#allocation6 + $0xb4] sm:$0xff]
        %v1943 = vld [vmem:[#allocation6 + $0xbc] sm:$0xff]
        %v1944 = vld [vmem:[#allocation6 + $0xc4] sm:$0xff]
        %v1945 = vlaneseq
        %v1946 = vshrl.u32 %v1945, 7
        %v1947 = vsub.s32 2, %v1946
        %v1948 = vrot.slane %v500, %v1947
        %v1949 = vmul.f32 %v1920, %v1948
        %v1950 = vmul.f32 %v1921, %v1948
        %v1951 = vmul.f32 %v1922, %v1948
        %v1952 = vmul.f32 %v1923, %v1948
        %v1953 = vmul.f32 %v1924, %v1948
        %v1954 = vmul.f32 %v1925, %v1948
        %v1955 = vmul.f32 %v1926, %v1948
        %v1956 = vmul.f32 %v1927, %v1948
        %v1957 = vmul.f32 %v1928, %v1948
        %v1958 = vmul.f32 %v1929, %v1948
        %v1959 = vmul.f32 %v1930, %v1948
        %v1960 = vmul.f32 %v1931, %v1948
        %v1961 = vmul.f32 %v1932, %v1948
        %v1962 = vmul.f32 %v1933, %v1948
        %v1963 = vmul.f32 %v1934, %v1948
        %v1964 = vmul.f32 %v1935, %v1948
        %v1965 = vmul.f32 %v1936, %v1948
        %v1966 = vmul.f32 %v1937, %v1948
        %v1967 = vmul.f32 %v1938, %v1948
        %v1968 = vmul.f32 %v1939, %v1948
        %v1969 = vmul.f32 %v1940, %v1948
        %v1970 = vmul.f32 %v1941, %v1948
        %v1971 = vmul.f32 %v1942, %v1948
        %v1972 = vmul.f32 %v1943, %v1948
        %v1973 = vmul.f32 %v1944, %v1948
        %v1974 = vadd.f32 %v1895, %v1949
        %v1975 = vadd.f32 %v1896, %v1950
        %v1976 = vadd.f32 %v1897, %v1951
        %v1977 = vadd.f32 %v1898, %v1952
        %v1978 = vadd.f32 %v1899, %v1953
        %v1979 = vadd.f32 %v1900, %v1954
        %v1980 = vadd.f32 %v1901, %v1955
        %v1981 = vadd.f32 %v1902, %v1956
        %v1982 = vadd.f32 %v1903, %v1957
        %v1983 = vadd.f32 %v1904, %v1958
        %v1984 = vadd.f32 %v1905, %v1959
        %v1985 = vadd.f32 %v1906, %v1960
        %v1986 = vadd.f32 %v1907, %v1961
        %v1987 = vadd.f32 %v1908, %v1962
        %v1988 = vadd.f32 %v1909, %v1963
        %v1989 = vadd.f32 %v1910, %v1964
        %v1990 = vadd.f32 %v1911, %v1965
        %v1991 = vadd.f32 %v1912, %v1966
        %v1992 = vadd.f32 %v1913, %v1967
        %v1993 = vadd.f32 %v1914, %v1968
        %v1994 = vadd.f32 %v1915, %v1969
        %v1995 = vadd.f32 %v1916, %v1970
        %v1996 = vadd.f32 %v1917, %v1971
        %v1997 = vadd.f32 %v1918, %v1972
        %v1998 = vadd.f32 %v1919, %v1973
        %v1999 = vld [vmem:[#allocation7 + $0x5] sm:$0xff]
        %v2000 = vld [vmem:[#allocation7 + $0xd] sm:$0xff]
        %v2001 = vld [vmem:[#allocation7 + $0x15] sm:$0xff]
        %v2002 = vld [vmem:[#allocation7 + $0x1d] sm:$0xff]
        %v2003 = vld [vmem:[#allocation7 + $0x25] sm:$0xff]
        %v2004 = vld [vmem:[#allocation7 + $0x2d] sm:$0xff]
        %v2005 = vld [vmem:[#allocation7 + $0x35] sm:$0xff]
        %v2006 = vld [vmem:[#allocation7 + $0x3d] sm:$0xff]
        %v2007 = vld [vmem:[#allocation7 + $0x45] sm:$0xff]
        %v2008 = vld [vmem:[#allocation7 + $0x4d] sm:$0xff]
        %v2009 = vld [vmem:[#allocation7 + $0x55] sm:$0xff]
        %v2010 = vld [vmem:[#allocation7 + $0x5d] sm:$0xff]
        %v2011 = vld [vmem:[#allocation7 + $0x65] sm:$0xff]
        %v2012 = vld [vmem:[#allocation7 + $0x6d] sm:$0xff]
        %v2013 = vld [vmem:[#allocation7 + $0x75] sm:$0xff]
        %v2014 = vld [vmem:[#allocation7 + $0x7d] sm:$0xff]
        %v2015 = vld [vmem:[#allocation7 + $0x85] sm:$0xff]
        %v2016 = vld [vmem:[#allocation7 + $0x8d] sm:$0xff]
        %v2017 = vld [vmem:[#allocation7 + $0x95] sm:$0xff]
        %v2018 = vld [vmem:[#allocation7 + $0x9d] sm:$0xff]
        %v2019 = vld [vmem:[#allocation7 + $0xa5] sm:$0xff]
        %v2020 = vld [vmem:[#allocation7 + $0xad] sm:$0xff]
        %v2021 = vld [vmem:[#allocation7 + $0xb5] sm:$0xff]
        %v2022 = vld [vmem:[#allocation7 + $0xbd] sm:$0xff]
        %v2023 = vld [vmem:[#allocation7 + $0xc5] sm:$0xff]
        %v2024 = vlaneseq
        %v2025 = vshrl.u32 %v2024, 7
        %v2026 = vsub.s32 3, %v2025
        %v2027 = vrot.slane %v500, %v2026
        %v2028 = vmul.f32 %v1999, %v2027
        %v2029 = vmul.f32 %v2000, %v2027
        %v2030 = vmul.f32 %v2001, %v2027
        %v2031 = vmul.f32 %v2002, %v2027
        %v2032 = vmul.f32 %v2003, %v2027
        %v2033 = vmul.f32 %v2004, %v2027
        %v2034 = vmul.f32 %v2005, %v2027
        %v2035 = vmul.f32 %v2006, %v2027
        %v2036 = vmul.f32 %v2007, %v2027
        %v2037 = vmul.f32 %v2008, %v2027
        %v2038 = vmul.f32 %v2009, %v2027
        %v2039 = vmul.f32 %v2010, %v2027
        %v2040 = vmul.f32 %v2011, %v2027
        %v2041 = vmul.f32 %v2012, %v2027
        %v2042 = vmul.f32 %v2013, %v2027
        %v2043 = vmul.f32 %v2014, %v2027
        %v2044 = vmul.f32 %v2015, %v2027
        %v2045 = vmul.f32 %v2016, %v2027
        %v2046 = vmul.f32 %v2017, %v2027
        %v2047 = vmul.f32 %v2018, %v2027
        %v2048 = vmul.f32 %v2019, %v2027
        %v2049 = vmul.f32 %v2020, %v2027
        %v2050 = vmul.f32 %v2021, %v2027
        %v2051 = vmul.f32 %v2022, %v2027
        %v2052 = vmul.f32 %v2023, %v2027
        %v2053 = vadd.f32 %v1974, %v2028
        %v2054 = vadd.f32 %v1975, %v2029
        %v2055 = vadd.f32 %v1976, %v2030
        %v2056 = vadd.f32 %v1977, %v2031
        %v2057 = vadd.f32 %v1978, %v2032
        %v2058 = vadd.f32 %v1979, %v2033
        %v2059 = vadd.f32 %v1980, %v2034
        %v2060 = vadd.f32 %v1981, %v2035
        %v2061 = vadd.f32 %v1982, %v2036
        %v2062 = vadd.f32 %v1983, %v2037
        %v2063 = vadd.f32 %v1984, %v2038
        %v2064 = vadd.f32 %v1985, %v2039
        %v2065 = vadd.f32 %v1986, %v2040
        %v2066 = vadd.f32 %v1987, %v2041
        %v2067 = vadd.f32 %v1988, %v2042
        %v2068 = vadd.f32 %v1989, %v2043
        %v2069 = vadd.f32 %v1990, %v2044
        %v2070 = vadd.f32 %v1991, %v2045
        %v2071 = vadd.f32 %v1992, %v2046
        %v2072 = vadd.f32 %v1993, %v2047
        %v2073 = vadd.f32 %v1994, %v2048
        %v2074 = vadd.f32 %v1995, %v2049
        %v2075 = vadd.f32 %v1996, %v2050
        %v2076 = vadd.f32 %v1997, %v2051
        %v2077 = vadd.f32 %v1998, %v2052
        %v2078 = vld [vmem:[#allocation8 + $0x6] sm:$0xff]
        %v2079 = vld [vmem:[#allocation8 + $0xe] sm:$0xff]
        %v2080 = vld [vmem:[#allocation8 + $0x16] sm:$0xff]
        %v2081 = vld [vmem:[#allocation8 + $0x1e] sm:$0xff]
        %v2082 = vld [vmem:[#allocation8 + $0x26] sm:$0xff]
        %v2083 = vld [vmem:[#allocation8 + $0x2e] sm:$0xff]
        %v2084 = vld [vmem:[#allocation8 + $0x36] sm:$0xff]
        %v2085 = vld [vmem:[#allocation8 + $0x3e] sm:$0xff]
        %v2086 = vld [vmem:[#allocation8 + $0x46] sm:$0xff]
        %v2087 = vld [vmem:[#allocation8 + $0x4e] sm:$0xff]
        %v2088 = vld [vmem:[#allocation8 + $0x56] sm:$0xff]
        %v2089 = vld [vmem:[#allocation8 + $0x5e] sm:$0xff]
        %v2090 = vld [vmem:[#allocation8 + $0x66] sm:$0xff]
        %v2091 = vld [vmem:[#allocation8 + $0x6e] sm:$0xff]
        %v2092 = vld [vmem:[#allocation8 + $0x76] sm:$0xff]
        %v2093 = vld [vmem:[#allocation8 + $0x7e] sm:$0xff]
        %v2094 = vld [vmem:[#allocation8 + $0x86] sm:$0xff]
        %v2095 = vld [vmem:[#allocation8 + $0x8e] sm:$0xff]
        %v2096 = vld [vmem:[#allocation8 + $0x96] sm:$0xff]
        %v2097 = vld [vmem:[#allocation8 + $0x9e] sm:$0xff]
        %v2098 = vld [vmem:[#allocation8 + $0xa6] sm:$0xff]
        %v2099 = vld [vmem:[#allocation8 + $0xae] sm:$0xff]
        %v2100 = vld [vmem:[#allocation8 + $0xb6] sm:$0xff]
        %v2101 = vld [vmem:[#allocation8 + $0xbe] sm:$0xff]
        %v2102 = vld [vmem:[#allocation8 + $0xc6] sm:$0xff]
        %v2103 = vlaneseq
        %v2104 = vshrl.u32 %v2103, 7
        %v2105 = vsub.s32 4, %v2104
        %v2106 = vrot.slane %v500, %v2105
        %v2107 = vmul.f32 %v2078, %v2106
        %v2108 = vmul.f32 %v2079, %v2106
        %v2109 = vmul.f32 %v2080, %v2106
        %v2110 = vmul.f32 %v2081, %v2106
        %v2111 = vmul.f32 %v2082, %v2106
        %v2112 = vmul.f32 %v2083, %v2106
        %v2113 = vmul.f32 %v2084, %v2106
        %v2114 = vmul.f32 %v2085, %v2106
        %v2115 = vmul.f32 %v2086, %v2106
        %v2116 = vmul.f32 %v2087, %v2106
        %v2117 = vmul.f32 %v2088, %v2106
        %v2118 = vmul.f32 %v2089, %v2106
        %v2119 = vmul.f32 %v2090, %v2106
        %v2120 = vmul.f32 %v2091, %v2106
        %v2121 = vmul.f32 %v2092, %v2106
        %v2122 = vmul.f32 %v2093, %v2106
        %v2123 = vmul.f32 %v2094, %v2106
        %v2124 = vmul.f32 %v2095, %v2106
        %v2125 = vmul.f32 %v2096, %v2106
        %v2126 = vmul.f32 %v2097, %v2106
        %v2127 = vmul.f32 %v2098, %v2106
        %v2128 = vmul.f32 %v2099, %v2106
        %v2129 = vmul.f32 %v2100, %v2106
        %v2130 = vmul.f32 %v2101, %v2106
        %v2131 = vmul.f32 %v2102, %v2106
        %v2132 = vadd.f32 %v2053, %v2107
        %v2133 = vadd.f32 %v2054, %v2108
        %v2134 = vadd.f32 %v2055, %v2109
        %v2135 = vadd.f32 %v2056, %v2110
        %v2136 = vadd.f32 %v2057, %v2111
        %v2137 = vadd.f32 %v2058, %v2112
        %v2138 = vadd.f32 %v2059, %v2113
        %v2139 = vadd.f32 %v2060, %v2114
        %v2140 = vadd.f32 %v2061, %v2115
        %v2141 = vadd.f32 %v2062, %v2116
        %v2142 = vadd.f32 %v2063, %v2117
        %v2143 = vadd.f32 %v2064, %v2118
        %v2144 = vadd.f32 %v2065, %v2119
        %v2145 = vadd.f32 %v2066, %v2120
        %v2146 = vadd.f32 %v2067, %v2121
        %v2147 = vadd.f32 %v2068, %v2122
        %v2148 = vadd.f32 %v2069, %v2123
        %v2149 = vadd.f32 %v2070, %v2124
        %v2150 = vadd.f32 %v2071, %v2125
        %v2151 = vadd.f32 %v2072, %v2126
        %v2152 = vadd.f32 %v2073, %v2127
        %v2153 = vadd.f32 %v2074, %v2128
        %v2154 = vadd.f32 %v2075, %v2129
        %v2155 = vadd.f32 %v2076, %v2130
        %v2156 = vadd.f32 %v2077, %v2131
        %v2157 = vld [vmem:[#allocation4 + $0x10] sm:$0xff]
        %v2158 = vld [vmem:[#allocation4 + $0x18] sm:$0xff]
        %v2159 = vld [vmem:[#allocation4 + $0x20] sm:$0xff]
        %v2160 = vld [vmem:[#allocation4 + $0x28] sm:$0xff]
        %v2161 = vld [vmem:[#allocation4 + $0x30] sm:$0xff]
        %v2162 = vld [vmem:[#allocation4 + $0x38] sm:$0xff]
        %v2163 = vld [vmem:[#allocation4 + $0x40] sm:$0xff]
        %v2164 = vld [vmem:[#allocation4 + $0x48] sm:$0xff]
        %v2165 = vld [vmem:[#allocation4 + $0x50] sm:$0xff]
        %v2166 = vld [vmem:[#allocation4 + $0x58] sm:$0xff]
        %v2167 = vld [vmem:[#allocation4 + $0x60] sm:$0xff]
        %v2168 = vld [vmem:[#allocation4 + $0x68] sm:$0xff]
        %v2169 = vld [vmem:[#allocation4 + $0x70] sm:$0xff]
        %v2170 = vld [vmem:[#allocation4 + $0x78] sm:$0xff]
        %v2171 = vld [vmem:[#allocation4 + $0x80] sm:$0xff]
        %v2172 = vld [vmem:[#allocation4 + $0x88] sm:$0xff]
        %v2173 = vld [vmem:[#allocation4 + $0x90] sm:$0xff]
        %v2174 = vld [vmem:[#allocation4 + $0x98] sm:$0xff]
        %v2175 = vld [vmem:[#allocation4 + $0xa0] sm:$0xff]
        %v2176 = vld [vmem:[#allocation4 + $0xa8] sm:$0xff]
        %v2177 = vld [vmem:[#allocation4 + $0xb0] sm:$0xff]
        %v2178 = vld [vmem:[#allocation4 + $0xb8] sm:$0xff]
        %v2179 = vld [vmem:[#allocation4 + $0xc0] sm:$0xff]
        %v2180 = vld [vmem:[#allocation4 + $0xc8] sm:$0xff]
        %v2181 = vld [vmem:[#allocation4 + $0xd0] sm:$0xff]
        %v2182 = vlaneseq
        %v2183 = vshrl.u32 %v2182, 7
        %v2184 = vsub.s32 5, %v2183
        %v2185 = vrot.slane %v500, %v2184
        %v2186 = vmul.f32 %v2157, %v2185
        %v2187 = vmul.f32 %v2158, %v2185
        %v2188 = vmul.f32 %v2159, %v2185
        %v2189 = vmul.f32 %v2160, %v2185
        %v2190 = vmul.f32 %v2161, %v2185
        %v2191 = vmul.f32 %v2162, %v2185
        %v2192 = vmul.f32 %v2163, %v2185
        %v2193 = vmul.f32 %v2164, %v2185
        %v2194 = vmul.f32 %v2165, %v2185
        %v2195 = vmul.f32 %v2166, %v2185
        %v2196 = vmul.f32 %v2167, %v2185
        %v2197 = vmul.f32 %v2168, %v2185
        %v2198 = vmul.f32 %v2169, %v2185
        %v2199 = vmul.f32 %v2170, %v2185
        %v2200 = vmul.f32 %v2171, %v2185
        %v2201 = vmul.f32 %v2172, %v2185
        %v2202 = vmul.f32 %v2173, %v2185
        %v2203 = vmul.f32 %v2174, %v2185
        %v2204 = vmul.f32 %v2175, %v2185
        %v2205 = vmul.f32 %v2176, %v2185
        %v2206 = vmul.f32 %v2177, %v2185
        %v2207 = vmul.f32 %v2178, %v2185
        %v2208 = vmul.f32 %v2179, %v2185
        %v2209 = vmul.f32 %v2180, %v2185
        %v2210 = vmul.f32 %v2181, %v2185
        %v2211 = vadd.f32 %v2132, %v2186
        %v2212 = vadd.f32 %v2133, %v2187
        %v2213 = vadd.f32 %v2134, %v2188
        %v2214 = vadd.f32 %v2135, %v2189
        %v2215 = vadd.f32 %v2136, %v2190
        %v2216 = vadd.f32 %v2137, %v2191
        %v2217 = vadd.f32 %v2138, %v2192
        %v2218 = vadd.f32 %v2139, %v2193
        %v2219 = vadd.f32 %v2140, %v2194
        %v2220 = vadd.f32 %v2141, %v2195
        %v2221 = vadd.f32 %v2142, %v2196
        %v2222 = vadd.f32 %v2143, %v2197
        %v2223 = vadd.f32 %v2144, %v2198
        %v2224 = vadd.f32 %v2145, %v2199
        %v2225 = vadd.f32 %v2146, %v2200
        %v2226 = vadd.f32 %v2147, %v2201
        %v2227 = vadd.f32 %v2148, %v2202
        %v2228 = vadd.f32 %v2149, %v2203
        %v2229 = vadd.f32 %v2150, %v2204
        %v2230 = vadd.f32 %v2151, %v2205
        %v2231 = vadd.f32 %v2152, %v2206
        %v2232 = vadd.f32 %v2153, %v2207
        %v2233 = vadd.f32 %v2154, %v2208
        %v2234 = vadd.f32 %v2155, %v2209
        %v2235 = vadd.f32 %v2156, %v2210
        %v2236 = vld [vmem:[#allocation5 + $0x11] sm:$0xff]
        %v2237 = vld [vmem:[#allocation5 + $0x19] sm:$0xff]
        %v2238 = vld [vmem:[#allocation5 + $0x21] sm:$0xff]
        %v2239 = vld [vmem:[#allocation5 + $0x29] sm:$0xff]
        %v2240 = vld [vmem:[#allocation5 + $0x31] sm:$0xff]
        %v2241 = vld [vmem:[#allocation5 + $0x39] sm:$0xff]
        %v2242 = vld [vmem:[#allocation5 + $0x41] sm:$0xff]
        %v2243 = vld [vmem:[#allocation5 + $0x49] sm:$0xff]
        %v2244 = vld [vmem:[#allocation5 + $0x51] sm:$0xff]
        %v2245 = vld [vmem:[#allocation5 + $0x59] sm:$0xff]
        %v2246 = vld [vmem:[#allocation5 + $0x61] sm:$0xff]
        %v2247 = vld [vmem:[#allocation5 + $0x69] sm:$0xff]
        %v2248 = vld [vmem:[#allocation5 + $0x71] sm:$0xff]
        %v2249 = vld [vmem:[#allocation5 + $0x79] sm:$0xff]
        %v2250 = vld [vmem:[#allocation5 + $0x81] sm:$0xff]
        %v2251 = vld [vmem:[#allocation5 + $0x89] sm:$0xff]
        %v2252 = vld [vmem:[#allocation5 + $0x91] sm:$0xff]
        %v2253 = vld [vmem:[#allocation5 + $0x99] sm:$0xff]
        %v2254 = vld [vmem:[#allocation5 + $0xa1] sm:$0xff]
        %v2255 = vld [vmem:[#allocation5 + $0xa9] sm:$0xff]
        %v2256 = vld [vmem:[#allocation5 + $0xb1] sm:$0xff]
        %v2257 = vld [vmem:[#allocation5 + $0xb9] sm:$0xff]
        %v2258 = vld [vmem:[#allocation5 + $0xc1] sm:$0xff]
        %v2259 = vld [vmem:[#allocation5 + $0xc9] sm:$0xff]
        %v2260 = vld [vmem:[#allocation5 + $0xd1] sm:$0xff]
        %v2261 = vlaneseq
        %v2262 = vshrl.u32 %v2261, 7
        %v2263 = vsub.s32 6, %v2262
        %v2264 = vrot.slane %v500, %v2263
        %v2265 = vmul.f32 %v2236, %v2264
        %v2266 = vmul.f32 %v2237, %v2264
        %v2267 = vmul.f32 %v2238, %v2264
        %v2268 = vmul.f32 %v2239, %v2264
        %v2269 = vmul.f32 %v2240, %v2264
        %v2270 = vmul.f32 %v2241, %v2264
        %v2271 = vmul.f32 %v2242, %v2264
        %v2272 = vmul.f32 %v2243, %v2264
        %v2273 = vmul.f32 %v2244, %v2264
        %v2274 = vmul.f32 %v2245, %v2264
        %v2275 = vmul.f32 %v2246, %v2264
        %v2276 = vmul.f32 %v2247, %v2264
        %v2277 = vmul.f32 %v2248, %v2264
        %v2278 = vmul.f32 %v2249, %v2264
        %v2279 = vmul.f32 %v2250, %v2264
        %v2280 = vmul.f32 %v2251, %v2264
        %v2281 = vmul.f32 %v2252, %v2264
        %v2282 = vmul.f32 %v2253, %v2264
        %v2283 = vmul.f32 %v2254, %v2264
        %v2284 = vmul.f32 %v2255, %v2264
        %v2285 = vmul.f32 %v2256, %v2264
        %v2286 = vmul.f32 %v2257, %v2264
        %v2287 = vmul.f32 %v2258, %v2264
        %v2288 = vmul.f32 %v2259, %v2264
        %v2289 = vmul.f32 %v2260, %v2264
        %v2290 = vadd.f32 %v2211, %v2265
        %v2291 = vadd.f32 %v2212, %v2266
        %v2292 = vadd.f32 %v2213, %v2267
        %v2293 = vadd.f32 %v2214, %v2268
        %v2294 = vadd.f32 %v2215, %v2269
        %v2295 = vadd.f32 %v2216, %v2270
        %v2296 = vadd.f32 %v2217, %v2271
        %v2297 = vadd.f32 %v2218, %v2272
        %v2298 = vadd.f32 %v2219, %v2273
        %v2299 = vadd.f32 %v2220, %v2274
        %v2300 = vadd.f32 %v2221, %v2275
        %v2301 = vadd.f32 %v2222, %v2276
        %v2302 = vadd.f32 %v2223, %v2277
        %v2303 = vadd.f32 %v2224, %v2278
        %v2304 = vadd.f32 %v2225, %v2279
        %v2305 = vadd.f32 %v2226, %v2280
        %v2306 = vadd.f32 %v2227, %v2281
        %v2307 = vadd.f32 %v2228, %v2282
        %v2308 = vadd.f32 %v2229, %v2283
        %v2309 = vadd.f32 %v2230, %v2284
        %v2310 = vadd.f32 %v2231, %v2285
        %v2311 = vadd.f32 %v2232, %v2286
        %v2312 = vadd.f32 %v2233, %v2287
        %v2313 = vadd.f32 %v2234, %v2288
        %v2314 = vadd.f32 %v2235, %v2289
        %v2315 = vld [vmem:[#allocation6 + $0x12] sm:$0xff]
        %v2316 = vld [vmem:[#allocation6 + $0x1a] sm:$0xff]
        %v2317 = vld [vmem:[#allocation6 + $0x22] sm:$0xff]
        %v2318 = vld [vmem:[#allocation6 + $0x2a] sm:$0xff]
        %v2319 = vld [vmem:[#allocation6 + $0x32] sm:$0xff]
        %v2320 = vld [vmem:[#allocation6 + $0x3a] sm:$0xff]
        %v2321 = vld [vmem:[#allocation6 + $0x42] sm:$0xff]
        %v2322 = vld [vmem:[#allocation6 + $0x4a] sm:$0xff]
        %v2323 = vld [vmem:[#allocation6 + $0x52] sm:$0xff]
        %v2324 = vld [vmem:[#allocation6 + $0x5a] sm:$0xff]
        %v2325 = vld [vmem:[#allocation6 + $0x62] sm:$0xff]
        %v2326 = vld [vmem:[#allocation6 + $0x6a] sm:$0xff]
        %v2327 = vld [vmem:[#allocation6 + $0x72] sm:$0xff]
        %v2328 = vld [vmem:[#allocation6 + $0x7a] sm:$0xff]
        %v2329 = vld [vmem:[#allocation6 + $0x82] sm:$0xff]
        %v2330 = vld [vmem:[#allocation6 + $0x8a] sm:$0xff]
        %v2331 = vld [vmem:[#allocation6 + $0x92] sm:$0xff]
        %v2332 = vld [vmem:[#allocation6 + $0x9a] sm:$0xff]
        %v2333 = vld [vmem:[#allocation6 + $0xa2] sm:$0xff]
        %v2334 = vld [vmem:[#allocation6 + $0xaa] sm:$0xff]
        %v2335 = vld [vmem:[#allocation6 + $0xb2] sm:$0xff]
        %v2336 = vld [vmem:[#allocation6 + $0xba] sm:$0xff]
        %v2337 = vld [vmem:[#allocation6 + $0xc2] sm:$0xff]
        %v2338 = vld [vmem:[#allocation6 + $0xca] sm:$0xff]
        %v2339 = vld [vmem:[#allocation6 + $0xd2] sm:$0xff]
        %v2340 = vlaneseq
        %v2341 = vshrl.u32 %v2340, 7
        %v2342 = vsub.s32 7, %v2341
        %v2343 = vrot.slane %v500, %v2342
        %v2344 = vmul.f32 %v2315, %v2343
        %v2345 = vmul.f32 %v2316, %v2343
        %v2346 = vmul.f32 %v2317, %v2343
        %v2347 = vmul.f32 %v2318, %v2343
        %v2348 = vmul.f32 %v2319, %v2343
        %v2349 = vmul.f32 %v2320, %v2343
        %v2350 = vmul.f32 %v2321, %v2343
        %v2351 = vmul.f32 %v2322, %v2343
        %v2352 = vmul.f32 %v2323, %v2343
        %v2353 = vmul.f32 %v2324, %v2343
        %v2354 = vmul.f32 %v2325, %v2343
        %v2355 = vmul.f32 %v2326, %v2343
        %v2356 = vmul.f32 %v2327, %v2343
        %v2357 = vmul.f32 %v2328, %v2343
        %v2358 = vmul.f32 %v2329, %v2343
        %v2359 = vmul.f32 %v2330, %v2343
        %v2360 = vmul.f32 %v2331, %v2343
        %v2361 = vmul.f32 %v2332, %v2343
        %v2362 = vmul.f32 %v2333, %v2343
        %v2363 = vmul.f32 %v2334, %v2343
        %v2364 = vmul.f32 %v2335, %v2343
        %v2365 = vmul.f32 %v2336, %v2343
        %v2366 = vmul.f32 %v2337, %v2343
        %v2367 = vmul.f32 %v2338, %v2343
        %v2368 = vmul.f32 %v2339, %v2343
        %v2369 = vadd.f32 %v2290, %v2344
        %v2370 = vadd.f32 %v2291, %v2345
        %v2371 = vadd.f32 %v2292, %v2346
        %v2372 = vadd.f32 %v2293, %v2347
        %v2373 = vadd.f32 %v2294, %v2348
        %v2374 = vadd.f32 %v2295, %v2349
        %v2375 = vadd.f32 %v2296, %v2350
        %v2376 = vadd.f32 %v2297, %v2351
        %v2377 = vadd.f32 %v2298, %v2352
        %v2378 = vadd.f32 %v2299, %v2353
        %v2379 = vadd.f32 %v2300, %v2354
        %v2380 = vadd.f32 %v2301, %v2355
        %v2381 = vadd.f32 %v2302, %v2356
        %v2382 = vadd.f32 %v2303, %v2357
        %v2383 = vadd.f32 %v2304, %v2358
        %v2384 = vadd.f32 %v2305, %v2359
        %v2385 = vadd.f32 %v2306, %v2360
        %v2386 = vadd.f32 %v2307, %v2361
        %v2387 = vadd.f32 %v2308, %v2362
        %v2388 = vadd.f32 %v2309, %v2363
        %v2389 = vadd.f32 %v2310, %v2364
        %v2390 = vadd.f32 %v2311, %v2365
        %v2391 = vadd.f32 %v2312, %v2366
        %v2392 = vadd.f32 %v2313, %v2367
        %v2393 = vadd.f32 %v2314, %v2368
        %v2394 = vld [vmem:[#allocation7 + $0x13] sm:$0xff]
        %v2395 = vld [vmem:[#allocation7 + $0x1b] sm:$0xff]
        %v2396 = vld [vmem:[#allocation7 + $0x23] sm:$0xff]
        %v2397 = vld [vmem:[#allocation7 + $0x2b] sm:$0xff]
        %v2398 = vld [vmem:[#allocation7 + $0x33] sm:$0xff]
        %v2399 = vld [vmem:[#allocation7 + $0x3b] sm:$0xff]
        %v2400 = vld [vmem:[#allocation7 + $0x43] sm:$0xff]
        %v2401 = vld [vmem:[#allocation7 + $0x4b] sm:$0xff]
        %v2402 = vld [vmem:[#allocation7 + $0x53] sm:$0xff]
        %v2403 = vld [vmem:[#allocation7 + $0x5b] sm:$0xff]
        %v2404 = vld [vmem:[#allocation7 + $0x63] sm:$0xff]
        %v2405 = vld [vmem:[#allocation7 + $0x6b] sm:$0xff]
        %v2406 = vld [vmem:[#allocation7 + $0x73] sm:$0xff]
        %v2407 = vld [vmem:[#allocation7 + $0x7b] sm:$0xff]
        %v2408 = vld [vmem:[#allocation7 + $0x83] sm:$0xff]
        %v2409 = vld [vmem:[#allocation7 + $0x8b] sm:$0xff]
        %v2410 = vld [vmem:[#allocation7 + $0x93] sm:$0xff]
        %v2411 = vld [vmem:[#allocation7 + $0x9b] sm:$0xff]
        %v2412 = vld [vmem:[#allocation7 + $0xa3] sm:$0xff]
        %v2413 = vld [vmem:[#allocation7 + $0xab] sm:$0xff]
        %v2414 = vld [vmem:[#allocation7 + $0xb3] sm:$0xff]
        %v2415 = vld [vmem:[#allocation7 + $0xbb] sm:$0xff]
        %v2416 = vld [vmem:[#allocation7 + $0xc3] sm:$0xff]
        %v2417 = vld [vmem:[#allocation7 + $0xcb] sm:$0xff]
        %v2418 = vld [vmem:[#allocation7 + $0xd3] sm:$0xff]
        %v2419 = vlaneseq
        %v2420 = vshrl.u32 %v2419, 7
        %v2421 = vsub.s32 0, %v2420
        %v2422 = vrot.slane %v501, %v2421
        %v2423 = vmul.f32 %v2394, %v2422
        %v2424 = vmul.f32 %v2395, %v2422
        %v2425 = vmul.f32 %v2396, %v2422
        %v2426 = vmul.f32 %v2397, %v2422
        %v2427 = vmul.f32 %v2398, %v2422
        %v2428 = vmul.f32 %v2399, %v2422
        %v2429 = vmul.f32 %v2400, %v2422
        %v2430 = vmul.f32 %v2401, %v2422
        %v2431 = vmul.f32 %v2402, %v2422
        %v2432 = vmul.f32 %v2403, %v2422
        %v2433 = vmul.f32 %v2404, %v2422
        %v2434 = vmul.f32 %v2405, %v2422
        %v2435 = vmul.f32 %v2406, %v2422
        %v2436 = vmul.f32 %v2407, %v2422
        %v2437 = vmul.f32 %v2408, %v2422
        %v2438 = vmul.f32 %v2409, %v2422
        %v2439 = vmul.f32 %v2410, %v2422
        %v2440 = vmul.f32 %v2411, %v2422
        %v2441 = vmul.f32 %v2412, %v2422
        %v2442 = vmul.f32 %v2413, %v2422
        %v2443 = vmul.f32 %v2414, %v2422
        %v2444 = vmul.f32 %v2415, %v2422
        %v2445 = vmul.f32 %v2416, %v2422
        %v2446 = vmul.f32 %v2417, %v2422
        %v2447 = vmul.f32 %v2418, %v2422
        %v2448 = vadd.f32 %v2369, %v2423
        %v2449 = vadd.f32 %v2370, %v2424
        %v2450 = vadd.f32 %v2371, %v2425
        %v2451 = vadd.f32 %v2372, %v2426
        %v2452 = vadd.f32 %v2373, %v2427
        %v2453 = vadd.f32 %v2374, %v2428
        %v2454 = vadd.f32 %v2375, %v2429
        %v2455 = vadd.f32 %v2376, %v2430
        %v2456 = vadd.f32 %v2377, %v2431
        %v2457 = vadd.f32 %v2378, %v2432
        %v2458 = vadd.f32 %v2379, %v2433
        %v2459 = vadd.f32 %v2380, %v2434
        %v2460 = vadd.f32 %v2381, %v2435
        %v2461 = vadd.f32 %v2382, %v2436
        %v2462 = vadd.f32 %v2383, %v2437
        %v2463 = vadd.f32 %v2384, %v2438
        %v2464 = vadd.f32 %v2385, %v2439
        %v2465 = vadd.f32 %v2386, %v2440
        %v2466 = vadd.f32 %v2387, %v2441
        %v2467 = vadd.f32 %v2388, %v2442
        %v2468 = vadd.f32 %v2389, %v2443
        %v2469 = vadd.f32 %v2390, %v2444
        %v2470 = vadd.f32 %v2391, %v2445
        %v2471 = vadd.f32 %v2392, %v2446
        %v2472 = vadd.f32 %v2393, %v2447
        %v2473 = vld [vmem:[#allocation8 + $0x14] sm:$0xff]
        %v2474 = vld [vmem:[#allocation8 + $0x1c] sm:$0xff]
        %v2475 = vld [vmem:[#allocation8 + $0x24] sm:$0xff]
        %v2476 = vld [vmem:[#allocation8 + $0x2c] sm:$0xff]
        %v2477 = vld [vmem:[#allocation8 + $0x34] sm:$0xff]
        %v2478 = vld [vmem:[#allocation8 + $0x3c] sm:$0xff]
        %v2479 = vld [vmem:[#allocation8 + $0x44] sm:$0xff]
        %v2480 = vld [vmem:[#allocation8 + $0x4c] sm:$0xff]
        %v2481 = vld [vmem:[#allocation8 + $0x54] sm:$0xff]
        %v2482 = vld [vmem:[#allocation8 + $0x5c] sm:$0xff]
        %v2483 = vld [vmem:[#allocation8 + $0x64] sm:$0xff]
        %v2484 = vld [vmem:[#allocation8 + $0x6c] sm:$0xff]
        %v2485 = vld [vmem:[#allocation8 + $0x74] sm:$0xff]
        %v2486 = vld [vmem:[#allocation8 + $0x7c] sm:$0xff]
        %v2487 = vld [vmem:[#allocation8 + $0x84] sm:$0xff]
        %v2488 = vld [vmem:[#allocation8 + $0x8c] sm:$0xff]
        %v2489 = vld [vmem:[#allocation8 + $0x94] sm:$0xff]
        %v2490 = vld [vmem:[#allocation8 + $0x9c] sm:$0xff]
        %v2491 = vld [vmem:[#allocation8 + $0xa4] sm:$0xff]
        %v2492 = vld [vmem:[#allocation8 + $0xac] sm:$0xff]
        %v2493 = vld [vmem:[#allocation8 + $0xb4] sm:$0xff]
        %v2494 = vld [vmem:[#allocation8 + $0xbc] sm:$0xff]
        %v2495 = vld [vmem:[#allocation8 + $0xc4] sm:$0xff]
        %v2496 = vld [vmem:[#allocation8 + $0xcc] sm:$0xff]
        %v2497 = vld [vmem:[#allocation8 + $0xd4] sm:$0xff]
        %v2498 = vlaneseq
        %v2499 = vshrl.u32 %v2498, 7
        %v2500 = vsub.s32 1, %v2499
        %v2501 = vrot.slane %v501, %v2500
        %v2502 = vmul.f32 %v2473, %v2501
        %v2503 = vmul.f32 %v2474, %v2501
        %v2504 = vmul.f32 %v2475, %v2501
        %v2505 = vmul.f32 %v2476, %v2501
        %v2506 = vmul.f32 %v2477, %v2501
        %v2507 = vmul.f32 %v2478, %v2501
        %v2508 = vmul.f32 %v2479, %v2501
        %v2509 = vmul.f32 %v2480, %v2501
        %v2510 = vmul.f32 %v2481, %v2501
        %v2511 = vmul.f32 %v2482, %v2501
        %v2512 = vmul.f32 %v2483, %v2501
        %v2513 = vmul.f32 %v2484, %v2501
        %v2514 = vmul.f32 %v2485, %v2501
        %v2515 = vmul.f32 %v2486, %v2501
        %v2516 = vmul.f32 %v2487, %v2501
        %v2517 = vmul.f32 %v2488, %v2501
        %v2518 = vmul.f32 %v2489, %v2501
        %v2519 = vmul.f32 %v2490, %v2501
        %v2520 = vmul.f32 %v2491, %v2501
        %v2521 = vmul.f32 %v2492, %v2501
        %v2522 = vmul.f32 %v2493, %v2501
        %v2523 = vmul.f32 %v2494, %v2501
        %v2524 = vmul.f32 %v2495, %v2501
        %v2525 = vmul.f32 %v2496, %v2501
        %v2526 = vmul.f32 %v2497, %v2501
        %v2527 = vadd.f32 %v2448, %v2502
        %v2528 = vadd.f32 %v2449, %v2503
        %v2529 = vadd.f32 %v2450, %v2504
        %v2530 = vadd.f32 %v2451, %v2505
        %v2531 = vadd.f32 %v2452, %v2506
        %v2532 = vadd.f32 %v2453, %v2507
        %v2533 = vadd.f32 %v2454, %v2508
        %v2534 = vadd.f32 %v2455, %v2509
        %v2535 = vadd.f32 %v2456, %v2510
        %v2536 = vadd.f32 %v2457, %v2511
        %v2537 = vadd.f32 %v2458, %v2512
        %v2538 = vadd.f32 %v2459, %v2513
        %v2539 = vadd.f32 %v2460, %v2514
        %v2540 = vadd.f32 %v2461, %v2515
        %v2541 = vadd.f32 %v2462, %v2516
        %v2542 = vadd.f32 %v2463, %v2517
        %v2543 = vadd.f32 %v2464, %v2518
        %v2544 = vadd.f32 %v2465, %v2519
        %v2545 = vadd.f32 %v2466, %v2520
        %v2546 = vadd.f32 %v2467, %v2521
        %v2547 = vadd.f32 %v2468, %v2522
        %v2548 = vadd.f32 %v2469, %v2523
        %v2549 = vadd.f32 %v2470, %v2524
        %v2550 = vadd.f32 %v2471, %v2525
        %v2551 = vadd.f32 %v2472, %v2526
        %v2552 = vld [vmem:[#allocation4 + $0x1e] sm:$0xff]
        %v2553 = vld [vmem:[#allocation4 + $0x26] sm:$0xff]
        %v2554 = vld [vmem:[#allocation4 + $0x2e] sm:$0xff]
        %v2555 = vld [vmem:[#allocation4 + $0x36] sm:$0xff]
        %v2556 = vld [vmem:[#allocation4 + $0x3e] sm:$0xff]
        %v2557 = vld [vmem:[#allocation4 + $0x46] sm:$0xff]
        %v2558 = vld [vmem:[#allocation4 + $0x4e] sm:$0xff]
        %v2559 = vld [vmem:[#allocation4 + $0x56] sm:$0xff]
        %v2560 = vld [vmem:[#allocation4 + $0x5e] sm:$0xff]
        %v2561 = vld [vmem:[#allocation4 + $0x66] sm:$0xff]
        %v2562 = vld [vmem:[#allocation4 + $0x6e] sm:$0xff]
        %v2563 = vld [vmem:[#allocation4 + $0x76] sm:$0xff]
        %v2564 = vld [vmem:[#allocation4 + $0x7e] sm:$0xff]
        %v2565 = vld [vmem:[#allocation4 + $0x86] sm:$0xff]
        %v2566 = vld [vmem:[#allocation4 + $0x8e] sm:$0xff]
        %v2567 = vld [vmem:[#allocation4 + $0x96] sm:$0xff]
        %v2568 = vld [vmem:[#allocation4 + $0x9e] sm:$0xff]
        %v2569 = vld [vmem:[#allocation4 + $0xa6] sm:$0xff]
        %v2570 = vld [vmem:[#allocation4 + $0xae] sm:$0xff]
        %v2571 = vld [vmem:[#allocation4 + $0xb6] sm:$0xff]
        %v2572 = vld [vmem:[#allocation4 + $0xbe] sm:$0xff]
        %v2573 = vld [vmem:[#allocation4 + $0xc6] sm:$0xff]
        %v2574 = vld [vmem:[#allocation4 + $0xce] sm:$0xff]
        %v2575 = vld [vmem:[#allocation4 + $0xd6] sm:$0xff]
        %v2576 = vld [vmem:[#allocation4 + $0xde] sm:$0xff]
        %v2577 = vlaneseq
        %v2578 = vshrl.u32 %v2577, 7
        %v2579 = vsub.s32 2, %v2578
        %v2580 = vrot.slane %v501, %v2579
        %v2581 = vmul.f32 %v2552, %v2580
        %v2582 = vmul.f32 %v2553, %v2580
        %v2583 = vmul.f32 %v2554, %v2580
        %v2584 = vmul.f32 %v2555, %v2580
        %v2585 = vmul.f32 %v2556, %v2580
        %v2586 = vmul.f32 %v2557, %v2580
        %v2587 = vmul.f32 %v2558, %v2580
        %v2588 = vmul.f32 %v2559, %v2580
        %v2589 = vmul.f32 %v2560, %v2580
        %v2590 = vmul.f32 %v2561, %v2580
        %v2591 = vmul.f32 %v2562, %v2580
        %v2592 = vmul.f32 %v2563, %v2580
        %v2593 = vmul.f32 %v2564, %v2580
        %v2594 = vmul.f32 %v2565, %v2580
        %v2595 = vmul.f32 %v2566, %v2580
        %v2596 = vmul.f32 %v2567, %v2580
        %v2597 = vmul.f32 %v2568, %v2580
        %v2598 = vmul.f32 %v2569, %v2580
        %v2599 = vmul.f32 %v2570, %v2580
        %v2600 = vmul.f32 %v2571, %v2580
        %v2601 = vmul.f32 %v2572, %v2580
        %v2602 = vmul.f32 %v2573, %v2580
        %v2603 = vmul.f32 %v2574, %v2580
        %v2604 = vmul.f32 %v2575, %v2580
        %v2605 = vmul.f32 %v2576, %v2580
        %v2606 = vadd.f32 %v2527, %v2581
        %v2607 = vadd.f32 %v2528, %v2582
        %v2608 = vadd.f32 %v2529, %v2583
        %v2609 = vadd.f32 %v2530, %v2584
        %v2610 = vadd.f32 %v2531, %v2585
        %v2611 = vadd.f32 %v2532, %v2586
        %v2612 = vadd.f32 %v2533, %v2587
        %v2613 = vadd.f32 %v2534, %v2588
        %v2614 = vadd.f32 %v2535, %v2589
        %v2615 = vadd.f32 %v2536, %v2590
        %v2616 = vadd.f32 %v2537, %v2591
        %v2617 = vadd.f32 %v2538, %v2592
        %v2618 = vadd.f32 %v2539, %v2593
        %v2619 = vadd.f32 %v2540, %v2594
        %v2620 = vadd.f32 %v2541, %v2595
        %v2621 = vadd.f32 %v2542, %v2596
        %v2622 = vadd.f32 %v2543, %v2597
        %v2623 = vadd.f32 %v2544, %v2598
        %v2624 = vadd.f32 %v2545, %v2599
        %v2625 = vadd.f32 %v2546, %v2600
        %v2626 = vadd.f32 %v2547, %v2601
        %v2627 = vadd.f32 %v2548, %v2602
        %v2628 = vadd.f32 %v2549, %v2603
        %v2629 = vadd.f32 %v2550, %v2604
        %v2630 = vadd.f32 %v2551, %v2605
        %v2631 = vld [vmem:[#allocation5 + $0x1f] sm:$0xff]
        %v2632 = vld [vmem:[#allocation5 + $0x27] sm:$0xff]
        %v2633 = vld [vmem:[#allocation5 + $0x2f] sm:$0xff]
        %v2634 = vld [vmem:[#allocation5 + $0x37] sm:$0xff]
        %v2635 = vld [vmem:[#allocation5 + $0x3f] sm:$0xff]
        %v2636 = vld [vmem:[#allocation5 + $0x47] sm:$0xff]
        %v2637 = vld [vmem:[#allocation5 + $0x4f] sm:$0xff]
        %v2638 = vld [vmem:[#allocation5 + $0x57] sm:$0xff]
        %v2639 = vld [vmem:[#allocation5 + $0x5f] sm:$0xff]
        %v2640 = vld [vmem:[#allocation5 + $0x67] sm:$0xff]
        %v2641 = vld [vmem:[#allocation5 + $0x6f] sm:$0xff]
        %v2642 = vld [vmem:[#allocation5 + $0x77] sm:$0xff]
        %v2643 = vld [vmem:[#allocation5 + $0x7f] sm:$0xff]
        %v2644 = vld [vmem:[#allocation5 + $0x87] sm:$0xff]
        %v2645 = vld [vmem:[#allocation5 + $0x8f] sm:$0xff]
        %v2646 = vld [vmem:[#allocation5 + $0x97] sm:$0xff]
        %v2647 = vld [vmem:[#allocation5 + $0x9f] sm:$0xff]
        %v2648 = vld [vmem:[#allocation5 + $0xa7] sm:$0xff]
        %v2649 = vld [vmem:[#allocation5 + $0xaf] sm:$0xff]
        %v2650 = vld [vmem:[#allocation5 + $0xb7] sm:$0xff]
        %v2651 = vld [vmem:[#allocation5 + $0xbf] sm:$0xff]
        %v2652 = vld [vmem:[#allocation5 + $0xc7] sm:$0xff]
        %v2653 = vld [vmem:[#allocation5 + $0xcf] sm:$0xff]
        %v2654 = vld [vmem:[#allocation5 + $0xd7] sm:$0xff]
        %v2655 = vld [vmem:[#allocation5 + $0xdf] sm:$0xff]
        %v2656 = vlaneseq
        %v2657 = vshrl.u32 %v2656, 7
        %v2658 = vsub.s32 3, %v2657
        %v2659 = vrot.slane %v501, %v2658
        %v2660 = vmul.f32 %v2631, %v2659
        %v2661 = vmul.f32 %v2632, %v2659
        %v2662 = vmul.f32 %v2633, %v2659
        %v2663 = vmul.f32 %v2634, %v2659
        %v2664 = vmul.f32 %v2635, %v2659
        %v2665 = vmul.f32 %v2636, %v2659
        %v2666 = vmul.f32 %v2637, %v2659
        %v2667 = vmul.f32 %v2638, %v2659
        %v2668 = vmul.f32 %v2639, %v2659
        %v2669 = vmul.f32 %v2640, %v2659
        %v2670 = vmul.f32 %v2641, %v2659
        %v2671 = vmul.f32 %v2642, %v2659
        %v2672 = vmul.f32 %v2643, %v2659
        %v2673 = vmul.f32 %v2644, %v2659
        %v2674 = vmul.f32 %v2645, %v2659
        %v2675 = vmul.f32 %v2646, %v2659
        %v2676 = vmul.f32 %v2647, %v2659
        %v2677 = vmul.f32 %v2648, %v2659
        %v2678 = vmul.f32 %v2649, %v2659
        %v2679 = vmul.f32 %v2650, %v2659
        %v2680 = vmul.f32 %v2651, %v2659
        %v2681 = vmul.f32 %v2652, %v2659
        %v2682 = vmul.f32 %v2653, %v2659
        %v2683 = vmul.f32 %v2654, %v2659
        %v2684 = vmul.f32 %v2655, %v2659
        %v2685 = vadd.f32 %v2606, %v2660
        %v2686 = vadd.f32 %v2607, %v2661
        %v2687 = vadd.f32 %v2608, %v2662
        %v2688 = vadd.f32 %v2609, %v2663
        %v2689 = vadd.f32 %v2610, %v2664
        %v2690 = vadd.f32 %v2611, %v2665
        %v2691 = vadd.f32 %v2612, %v2666
        %v2692 = vadd.f32 %v2613, %v2667
        %v2693 = vadd.f32 %v2614, %v2668
        %v2694 = vadd.f32 %v2615, %v2669
        %v2695 = vadd.f32 %v2616, %v2670
        %v2696 = vadd.f32 %v2617, %v2671
        %v2697 = vadd.f32 %v2618, %v2672
        %v2698 = vadd.f32 %v2619, %v2673
        %v2699 = vadd.f32 %v2620, %v2674
        %v2700 = vadd.f32 %v2621, %v2675
        %v2701 = vadd.f32 %v2622, %v2676
        %v2702 = vadd.f32 %v2623, %v2677
        %v2703 = vadd.f32 %v2624, %v2678
        %v2704 = vadd.f32 %v2625, %v2679
        %v2705 = vadd.f32 %v2626, %v2680
        %v2706 = vadd.f32 %v2627, %v2681
        %v2707 = vadd.f32 %v2628, %v2682
        %v2708 = vadd.f32 %v2629, %v2683
        %v2709 = vadd.f32 %v2630, %v2684
        %v2710 = vld [vmem:[#allocation6 + $0x20] sm:$0xff]
        %v2711 = vld [vmem:[#allocation6 + $0x28] sm:$0xff]
        %v2712 = vld [vmem:[#allocation6 + $0x30] sm:$0xff]
        %v2713 = vld [vmem:[#allocation6 + $0x38] sm:$0xff]
        %v2714 = vld [vmem:[#allocation6 + $0x40] sm:$0xff]
        %v2715 = vld [vmem:[#allocation6 + $0x48] sm:$0xff]
        %v2716 = vld [vmem:[#allocation6 + $0x50] sm:$0xff]
        %v2717 = vld [vmem:[#allocation6 + $0x58] sm:$0xff]
        %v2718 = vld [vmem:[#allocation6 + $0x60] sm:$0xff]
        %v2719 = vld [vmem:[#allocation6 + $0x68] sm:$0xff]
        %v2720 = vld [vmem:[#allocation6 + $0x70] sm:$0xff]
        %v2721 = vld [vmem:[#allocation6 + $0x78] sm:$0xff]
        %v2722 = vld [vmem:[#allocation6 + $0x80] sm:$0xff]
        %v2723 = vld [vmem:[#allocation6 + $0x88] sm:$0xff]
        %v2724 = vld [vmem:[#allocation6 + $0x90] sm:$0xff]
        %v2725 = vld [vmem:[#allocation6 + $0x98] sm:$0xff]
        %v2726 = vld [vmem:[#allocation6 + $0xa0] sm:$0xff]
        %v2727 = vld [vmem:[#allocation6 + $0xa8] sm:$0xff]
        %v2728 = vld [vmem:[#allocation6 + $0xb0] sm:$0xff]
        %v2729 = vld [vmem:[#allocation6 + $0xb8] sm:$0xff]
        %v2730 = vld [vmem:[#allocation6 + $0xc0] sm:$0xff]
        %v2731 = vld [vmem:[#allocation6 + $0xc8] sm:$0xff]
        %v2732 = vld [vmem:[#allocation6 + $0xd0] sm:$0xff]
        %v2733 = vld [vmem:[#allocation6 + $0xd8] sm:$0xff]
        %v2734 = vld [vmem:[#allocation6 + $0xe0] sm:$0xff]
        %v2735 = vlaneseq
        %v2736 = vshrl.u32 %v2735, 7
        %v2737 = vsub.s32 4, %v2736
        %v2738 = vrot.slane %v501, %v2737
        %v2739 = vmul.f32 %v2710, %v2738
        %v2740 = vmul.f32 %v2711, %v2738
        %v2741 = vmul.f32 %v2712, %v2738
        %v2742 = vmul.f32 %v2713, %v2738
        %v2743 = vmul.f32 %v2714, %v2738
        %v2744 = vmul.f32 %v2715, %v2738
        %v2745 = vmul.f32 %v2716, %v2738
        %v2746 = vmul.f32 %v2717, %v2738
        %v2747 = vmul.f32 %v2718, %v2738
        %v2748 = vmul.f32 %v2719, %v2738
        %v2749 = vmul.f32 %v2720, %v2738
        %v2750 = vmul.f32 %v2721, %v2738
        %v2751 = vmul.f32 %v2722, %v2738
        %v2752 = vmul.f32 %v2723, %v2738
        %v2753 = vmul.f32 %v2724, %v2738
        %v2754 = vmul.f32 %v2725, %v2738
        %v2755 = vmul.f32 %v2726, %v2738
        %v2756 = vmul.f32 %v2727, %v2738
        %v2757 = vmul.f32 %v2728, %v2738
        %v2758 = vmul.f32 %v2729, %v2738
        %v2759 = vmul.f32 %v2730, %v2738
        %v2760 = vmul.f32 %v2731, %v2738
        %v2761 = vmul.f32 %v2732, %v2738
        %v2762 = vmul.f32 %v2733, %v2738
        %v2763 = vmul.f32 %v2734, %v2738
        %v2764 = vadd.f32 %v2685, %v2739
        %v2765 = vadd.f32 %v2686, %v2740
        %v2766 = vadd.f32 %v2687, %v2741
        %v2767 = vadd.f32 %v2688, %v2742
        %v2768 = vadd.f32 %v2689, %v2743
        %v2769 = vadd.f32 %v2690, %v2744
        %v2770 = vadd.f32 %v2691, %v2745
        %v2771 = vadd.f32 %v2692, %v2746
        %v2772 = vadd.f32 %v2693, %v2747
        %v2773 = vadd.f32 %v2694, %v2748
        %v2774 = vadd.f32 %v2695, %v2749
        %v2775 = vadd.f32 %v2696, %v2750
        %v2776 = vadd.f32 %v2697, %v2751
        %v2777 = vadd.f32 %v2698, %v2752
        %v2778 = vadd.f32 %v2699, %v2753
        %v2779 = vadd.f32 %v2700, %v2754
        %v2780 = vadd.f32 %v2701, %v2755
        %v2781 = vadd.f32 %v2702, %v2756
        %v2782 = vadd.f32 %v2703, %v2757
        %v2783 = vadd.f32 %v2704, %v2758
        %v2784 = vadd.f32 %v2705, %v2759
        %v2785 = vadd.f32 %v2706, %v2760
        %v2786 = vadd.f32 %v2707, %v2761
        %v2787 = vadd.f32 %v2708, %v2762
        %v2788 = vadd.f32 %v2709, %v2763
        %v2789 = vld [vmem:[#allocation7 + $0x21] sm:$0xff]
        %v2790 = vld [vmem:[#allocation7 + $0x29] sm:$0xff]
        %v2791 = vld [vmem:[#allocation7 + $0x31] sm:$0xff]
        %v2792 = vld [vmem:[#allocation7 + $0x39] sm:$0xff]
        %v2793 = vld [vmem:[#allocation7 + $0x41] sm:$0xff]
        %v2794 = vld [vmem:[#allocation7 + $0x49] sm:$0xff]
        %v2795 = vld [vmem:[#allocation7 + $0x51] sm:$0xff]
        %v2796 = vld [vmem:[#allocation7 + $0x59] sm:$0xff]
        %v2797 = vld [vmem:[#allocation7 + $0x61] sm:$0xff]
        %v2798 = vld [vmem:[#allocation7 + $0x69] sm:$0xff]
        %v2799 = vld [vmem:[#allocation7 + $0x71] sm:$0xff]
        %v2800 = vld [vmem:[#allocation7 + $0x79] sm:$0xff]
        %v2801 = vld [vmem:[#allocation7 + $0x81] sm:$0xff]
        %v2802 = vld [vmem:[#allocation7 + $0x89] sm:$0xff]
        %v2803 = vld [vmem:[#allocation7 + $0x91] sm:$0xff]
        %v2804 = vld [vmem:[#allocation7 + $0x99] sm:$0xff]
        %v2805 = vld [vmem:[#allocation7 + $0xa1] sm:$0xff]
        %v2806 = vld [vmem:[#allocation7 + $0xa9] sm:$0xff]
        %v2807 = vld [vmem:[#allocation7 + $0xb1] sm:$0xff]
        %v2808 = vld [vmem:[#allocation7 + $0xb9] sm:$0xff]
        %v2809 = vld [vmem:[#allocation7 + $0xc1] sm:$0xff]
        %v2810 = vld [vmem:[#allocation7 + $0xc9] sm:$0xff]
        %v2811 = vld [vmem:[#allocation7 + $0xd1] sm:$0xff]
        %v2812 = vld [vmem:[#allocation7 + $0xd9] sm:$0xff]
        %v2813 = vld [vmem:[#allocation7 + $0xe1] sm:$0xff]
        %v2814 = vlaneseq
        %v2815 = vshrl.u32 %v2814, 7
        %v2816 = vsub.s32 5, %v2815
        %v2817 = vrot.slane %v501, %v2816
        %v2818 = vmul.f32 %v2789, %v2817
        %v2819 = vmul.f32 %v2790, %v2817
        %v2820 = vmul.f32 %v2791, %v2817
        %v2821 = vmul.f32 %v2792, %v2817
        %v2822 = vmul.f32 %v2793, %v2817
        %v2823 = vmul.f32 %v2794, %v2817
        %v2824 = vmul.f32 %v2795, %v2817
        %v2825 = vmul.f32 %v2796, %v2817
        %v2826 = vmul.f32 %v2797, %v2817
        %v2827 = vmul.f32 %v2798, %v2817
        %v2828 = vmul.f32 %v2799, %v2817
        %v2829 = vmul.f32 %v2800, %v2817
        %v2830 = vmul.f32 %v2801, %v2817
        %v2831 = vmul.f32 %v2802, %v2817
        %v2832 = vmul.f32 %v2803, %v2817
        %v2833 = vmul.f32 %v2804, %v2817
        %v2834 = vmul.f32 %v2805, %v2817
        %v2835 = vmul.f32 %v2806, %v2817
        %v2836 = vmul.f32 %v2807, %v2817
        %v2837 = vmul.f32 %v2808, %v2817
        %v2838 = vmul.f32 %v2809, %v2817
        %v2839 = vmul.f32 %v2810, %v2817
        %v2840 = vmul.f32 %v2811, %v2817
        %v2841 = vmul.f32 %v2812, %v2817
        %v2842 = vmul.f32 %v2813, %v2817
        %v2843 = vadd.f32 %v2764, %v2818
        %v2844 = vadd.f32 %v2765, %v2819
        %v2845 = vadd.f32 %v2766, %v2820
        %v2846 = vadd.f32 %v2767, %v2821
        %v2847 = vadd.f32 %v2768, %v2822
        %v2848 = vadd.f32 %v2769, %v2823
        %v2849 = vadd.f32 %v2770, %v2824
        %v2850 = vadd.f32 %v2771, %v2825
        %v2851 = vadd.f32 %v2772, %v2826
        %v2852 = vadd.f32 %v2773, %v2827
        %v2853 = vadd.f32 %v2774, %v2828
        %v2854 = vadd.f32 %v2775, %v2829
        %v2855 = vadd.f32 %v2776, %v2830
        %v2856 = vadd.f32 %v2777, %v2831
        %v2857 = vadd.f32 %v2778, %v2832
        %v2858 = vadd.f32 %v2779, %v2833
        %v2859 = vadd.f32 %v2780, %v2834
        %v2860 = vadd.f32 %v2781, %v2835
        %v2861 = vadd.f32 %v2782, %v2836
        %v2862 = vadd.f32 %v2783, %v2837
        %v2863 = vadd.f32 %v2784, %v2838
        %v2864 = vadd.f32 %v2785, %v2839
        %v2865 = vadd.f32 %v2786, %v2840
        %v2866 = vadd.f32 %v2787, %v2841
        %v2867 = vadd.f32 %v2788, %v2842
        %v2868 = vld [vmem:[#allocation8 + $0x22] sm:$0xff]
        %v2869 = vld [vmem:[#allocation8 + $0x2a] sm:$0xff]
        %v2870 = vld [vmem:[#allocation8 + $0x32] sm:$0xff]
        %v2871 = vld [vmem:[#allocation8 + $0x3a] sm:$0xff]
        %v2872 = vld [vmem:[#allocation8 + $0x42] sm:$0xff]
        %v2873 = vld [vmem:[#allocation8 + $0x4a] sm:$0xff]
        %v2874 = vld [vmem:[#allocation8 + $0x52] sm:$0xff]
        %v2875 = vld [vmem:[#allocation8 + $0x5a] sm:$0xff]
        %v2876 = vld [vmem:[#allocation8 + $0x62] sm:$0xff]
        %v2877 = vld [vmem:[#allocation8 + $0x6a] sm:$0xff]
        %v2878 = vld [vmem:[#allocation8 + $0x72] sm:$0xff]
        %v2879 = vld [vmem:[#allocation8 + $0x7a] sm:$0xff]
        %v2880 = vld [vmem:[#allocation8 + $0x82] sm:$0xff]
        %v2881 = vld [vmem:[#allocation8 + $0x8a] sm:$0xff]
        %v2882 = vld [vmem:[#allocation8 + $0x92] sm:$0xff]
        %v2883 = vld [vmem:[#allocation8 + $0x9a] sm:$0xff]
        %v2884 = vld [vmem:[#allocation8 + $0xa2] sm:$0xff]
        %v2885 = vld [vmem:[#allocation8 + $0xaa] sm:$0xff]
        %v2886 = vld [vmem:[#allocation8 + $0xb2] sm:$0xff]
        %v2887 = vld [vmem:[#allocation8 + $0xba] sm:$0xff]
        %v2888 = vld [vmem:[#allocation8 + $0xc2] sm:$0xff]
        %v2889 = vld [vmem:[#allocation8 + $0xca] sm:$0xff]
        %v2890 = vld [vmem:[#allocation8 + $0xd2] sm:$0xff]
        %v2891 = vld [vmem:[#allocation8 + $0xda] sm:$0xff]
        %v2892 = vld [vmem:[#allocation8 + $0xe2] sm:$0xff]
        %v2893 = vlaneseq
        %v2894 = vshrl.u32 %v2893, 7
        %v2895 = vsub.s32 6, %v2894
        %v2896 = vrot.slane %v501, %v2895
        %v2897 = vmul.f32 %v2868, %v2896
        %v2898 = vmul.f32 %v2869, %v2896
        %v2899 = vmul.f32 %v2870, %v2896
        %v2900 = vmul.f32 %v2871, %v2896
        %v2901 = vmul.f32 %v2872, %v2896
        %v2902 = vmul.f32 %v2873, %v2896
        %v2903 = vmul.f32 %v2874, %v2896
        %v2904 = vmul.f32 %v2875, %v2896
        %v2905 = vmul.f32 %v2876, %v2896
        %v2906 = vmul.f32 %v2877, %v2896
        %v2907 = vmul.f32 %v2878, %v2896
        %v2908 = vmul.f32 %v2879, %v2896
        %v2909 = vmul.f32 %v2880, %v2896
        %v2910 = vmul.f32 %v2881, %v2896
        %v2911 = vmul.f32 %v2882, %v2896
        %v2912 = vmul.f32 %v2883, %v2896
        %v2913 = vmul.f32 %v2884, %v2896
        %v2914 = vmul.f32 %v2885, %v2896
        %v2915 = vmul.f32 %v2886, %v2896
        %v2916 = vmul.f32 %v2887, %v2896
        %v2917 = vmul.f32 %v2888, %v2896
        %v2918 = vmul.f32 %v2889, %v2896
        %v2919 = vmul.f32 %v2890, %v2896
        %v2920 = vmul.f32 %v2891, %v2896
        %v2921 = vmul.f32 %v2892, %v2896
        %v2922 = vadd.f32 %v2843, %v2897
        %v2923 = vadd.f32 %v2844, %v2898
        %v2924 = vadd.f32 %v2845, %v2899
        %v2925 = vadd.f32 %v2846, %v2900
        %v2926 = vadd.f32 %v2847, %v2901
        %v2927 = vadd.f32 %v2848, %v2902
        %v2928 = vadd.f32 %v2849, %v2903
        %v2929 = vadd.f32 %v2850, %v2904
        %v2930 = vadd.f32 %v2851, %v2905
        %v2931 = vadd.f32 %v2852, %v2906
        %v2932 = vadd.f32 %v2853, %v2907
        %v2933 = vadd.f32 %v2854, %v2908
        %v2934 = vadd.f32 %v2855, %v2909
        %v2935 = vadd.f32 %v2856, %v2910
        %v2936 = vadd.f32 %v2857, %v2911
        %v2937 = vadd.f32 %v2858, %v2912
        %v2938 = vadd.f32 %v2859, %v2913
        %v2939 = vadd.f32 %v2860, %v2914
        %v2940 = vadd.f32 %v2861, %v2915
        %v2941 = vadd.f32 %v2862, %v2916
        %v2942 = vadd.f32 %v2863, %v2917
        %v2943 = vadd.f32 %v2864, %v2918
        %v2944 = vadd.f32 %v2865, %v2919
        %v2945 = vadd.f32 %v2866, %v2920
        %v2946 = vadd.f32 %v2867, %v2921
        %v2947 = vld [vmem:[#allocation4 + $0x2c] sm:$0xff]
        %v2948 = vld [vmem:[#allocation4 + $0x34] sm:$0xff]
        %v2949 = vld [vmem:[#allocation4 + $0x3c] sm:$0xff]
        %v2950 = vld [vmem:[#allocation4 + $0x44] sm:$0xff]
        %v2951 = vld [vmem:[#allocation4 + $0x4c] sm:$0xff]
        %v2952 = vld [vmem:[#allocation4 + $0x54] sm:$0xff]
        %v2953 = vld [vmem:[#allocation4 + $0x5c] sm:$0xff]
        %v2954 = vld [vmem:[#allocation4 + $0x64] sm:$0xff]
        %v2955 = vld [vmem:[#allocation4 + $0x6c] sm:$0xff]
        %v2956 = vld [vmem:[#allocation4 + $0x74] sm:$0xff]
        %v2957 = vld [vmem:[#allocation4 + $0x7c] sm:$0xff]
        %v2958 = vld [vmem:[#allocation4 + $0x84] sm:$0xff]
        %v2959 = vld [vmem:[#allocation4 + $0x8c] sm:$0xff]
        %v2960 = vld [vmem:[#allocation4 + $0x94] sm:$0xff]
        %v2961 = vld [vmem:[#allocation4 + $0x9c] sm:$0xff]
        %v2962 = vld [vmem:[#allocation4 + $0xa4] sm:$0xff]
        %v2963 = vld [vmem:[#allocation4 + $0xac] sm:$0xff]
        %v2964 = vld [vmem:[#allocation4 + $0xb4] sm:$0xff]
        %v2965 = vld [vmem:[#allocation4 + $0xbc] sm:$0xff]
        %v2966 = vld [vmem:[#allocation4 + $0xc4] sm:$0xff]
        %v2967 = vld [vmem:[#allocation4 + $0xcc] sm:$0xff]
        %v2968 = vld [vmem:[#allocation4 + $0xd4] sm:$0xff]
        %v2969 = vld [vmem:[#allocation4 + $0xdc] sm:$0xff]
        %v2970 = vld [vmem:[#allocation4 + $0xe4] sm:$0xff]
        %v2971 = vld [vmem:[#allocation4 + $0xec] sm:$0xff]
        %v2972 = vlaneseq
        %v2973 = vshrl.u32 %v2972, 7
        %v2974 = vsub.s32 7, %v2973
        %v2975 = vrot.slane %v501, %v2974
        %v2976 = vmul.f32 %v2947, %v2975
        %v2977 = vmul.f32 %v2948, %v2975
        %v2978 = vmul.f32 %v2949, %v2975
        %v2979 = vmul.f32 %v2950, %v2975
        %v2980 = vmul.f32 %v2951, %v2975
        %v2981 = vmul.f32 %v2952, %v2975
        %v2982 = vmul.f32 %v2953, %v2975
        %v2983 = vmul.f32 %v2954, %v2975
        %v2984 = vmul.f32 %v2955, %v2975
        %v2985 = vmul.f32 %v2956, %v2975
        %v2986 = vmul.f32 %v2957, %v2975
        %v2987 = vmul.f32 %v2958, %v2975
        %v2988 = vmul.f32 %v2959, %v2975
        %v2989 = vmul.f32 %v2960, %v2975
        %v2990 = vmul.f32 %v2961, %v2975
        %v2991 = vmul.f32 %v2962, %v2975
        %v2992 = vmul.f32 %v2963, %v2975
        %v2993 = vmul.f32 %v2964, %v2975
        %v2994 = vmul.f32 %v2965, %v2975
        %v2995 = vmul.f32 %v2966, %v2975
        %v2996 = vmul.f32 %v2967, %v2975
        %v2997 = vmul.f32 %v2968, %v2975
        %v2998 = vmul.f32 %v2969, %v2975
        %v2999 = vmul.f32 %v2970, %v2975
        %v3000 = vmul.f32 %v2971, %v2975
        %v3001 = vadd.f32 %v2922, %v2976
        %v3002 = vadd.f32 %v2923, %v2977
        %v3003 = vadd.f32 %v2924, %v2978
        %v3004 = vadd.f32 %v2925, %v2979
        %v3005 = vadd.f32 %v2926, %v2980
        %v3006 = vadd.f32 %v2927, %v2981
        %v3007 = vadd.f32 %v2928, %v2982
        %v3008 = vadd.f32 %v2929, %v2983
        %v3009 = vadd.f32 %v2930, %v2984
        %v3010 = vadd.f32 %v2931, %v2985
        %v3011 = vadd.f32 %v2932, %v2986
        %v3012 = vadd.f32 %v2933, %v2987
        %v3013 = vadd.f32 %v2934, %v2988
        %v3014 = vadd.f32 %v2935, %v2989
        %v3015 = vadd.f32 %v2936, %v2990
        %v3016 = vadd.f32 %v2937, %v2991
        %v3017 = vadd.f32 %v2938, %v2992
        %v3018 = vadd.f32 %v2939, %v2993
        %v3019 = vadd.f32 %v2940, %v2994
        %v3020 = vadd.f32 %v2941, %v2995
        %v3021 = vadd.f32 %v2942, %v2996
        %v3022 = vadd.f32 %v2943, %v2997
        %v3023 = vadd.f32 %v2944, %v2998
        %v3024 = vadd.f32 %v2945, %v2999
        %v3025 = vadd.f32 %v2946, %v3000
        %v3026 = vld [vmem:[#allocation5 + $0x2d] sm:$0xff]
        %v3027 = vld [vmem:[#allocation5 + $0x35] sm:$0xff]
        %v3028 = vld [vmem:[#allocation5 + $0x3d] sm:$0xff]
        %v3029 = vld [vmem:[#allocation5 + $0x45] sm:$0xff]
        %v3030 = vld [vmem:[#allocation5 + $0x4d] sm:$0xff]
        %v3031 = vld [vmem:[#allocation5 + $0x55] sm:$0xff]
        %v3032 = vld [vmem:[#allocation5 + $0x5d] sm:$0xff]
        %v3033 = vld [vmem:[#allocation5 + $0x65] sm:$0xff]
        %v3034 = vld [vmem:[#allocation5 + $0x6d] sm:$0xff]
        %v3035 = vld [vmem:[#allocation5 + $0x75] sm:$0xff]
        %v3036 = vld [vmem:[#allocation5 + $0x7d] sm:$0xff]
        %v3037 = vld [vmem:[#allocation5 + $0x85] sm:$0xff]
        %v3038 = vld [vmem:[#allocation5 + $0x8d] sm:$0xff]
        %v3039 = vld [vmem:[#allocation5 + $0x95] sm:$0xff]
        %v3040 = vld [vmem:[#allocation5 + $0x9d] sm:$0xff]
        %v3041 = vld [vmem:[#allocation5 + $0xa5] sm:$0xff]
        %v3042 = vld [vmem:[#allocation5 + $0xad] sm:$0xff]
        %v3043 = vld [vmem:[#allocation5 + $0xb5] sm:$0xff]
        %v3044 = vld [vmem:[#allocation5 + $0xbd] sm:$0xff]
        %v3045 = vld [vmem:[#allocation5 + $0xc5] sm:$0xff]
        %v3046 = vld [vmem:[#allocation5 + $0xcd] sm:$0xff]
        %v3047 = vld [vmem:[#allocation5 + $0xd5] sm:$0xff]
        %v3048 = vld [vmem:[#allocation5 + $0xdd] sm:$0xff]
        %v3049 = vld [vmem:[#allocation5 + $0xe5] sm:$0xff]
        %v3050 = vld [vmem:[#allocation5 + $0xed] sm:$0xff]
        %v3051 = vlaneseq
        %v3052 = vshrl.u32 %v3051, 7
        %v3053 = vsub.s32 0, %v3052
        %v3054 = vrot.slane %v502, %v3053
        %v3055 = vmul.f32 %v3026, %v3054
        %v3056 = vmul.f32 %v3027, %v3054
        %v3057 = vmul.f32 %v3028, %v3054
        %v3058 = vmul.f32 %v3029, %v3054
        %v3059 = vmul.f32 %v3030, %v3054
        %v3060 = vmul.f32 %v3031, %v3054
        %v3061 = vmul.f32 %v3032, %v3054
        %v3062 = vmul.f32 %v3033, %v3054
        %v3063 = vmul.f32 %v3034, %v3054
        %v3064 = vmul.f32 %v3035, %v3054
        %v3065 = vmul.f32 %v3036, %v3054
        %v3066 = vmul.f32 %v3037, %v3054
        %v3067 = vmul.f32 %v3038, %v3054
        %v3068 = vmul.f32 %v3039, %v3054
        %v3069 = vmul.f32 %v3040, %v3054
        %v3070 = vmul.f32 %v3041, %v3054
        %v3071 = vmul.f32 %v3042, %v3054
        %v3072 = vmul.f32 %v3043, %v3054
        %v3073 = vmul.f32 %v3044, %v3054
        %v3074 = vmul.f32 %v3045, %v3054
        %v3075 = vmul.f32 %v3046, %v3054
        %v3076 = vmul.f32 %v3047, %v3054
        %v3077 = vmul.f32 %v3048, %v3054
        %v3078 = vmul.f32 %v3049, %v3054
        %v3079 = vmul.f32 %v3050, %v3054
        %v3080 = vadd.f32 %v3001, %v3055
        %v3081 = vadd.f32 %v3002, %v3056
        %v3082 = vadd.f32 %v3003, %v3057
        %v3083 = vadd.f32 %v3004, %v3058
        %v3084 = vadd.f32 %v3005, %v3059
        %v3085 = vadd.f32 %v3006, %v3060
        %v3086 = vadd.f32 %v3007, %v3061
        %v3087 = vadd.f32 %v3008, %v3062
        %v3088 = vadd.f32 %v3009, %v3063
        %v3089 = vadd.f32 %v3010, %v3064
        %v3090 = vadd.f32 %v3011, %v3065
        %v3091 = vadd.f32 %v3012, %v3066
        %v3092 = vadd.f32 %v3013, %v3067
        %v3093 = vadd.f32 %v3014, %v3068
        %v3094 = vadd.f32 %v3015, %v3069
        %v3095 = vadd.f32 %v3016, %v3070
        %v3096 = vadd.f32 %v3017, %v3071
        %v3097 = vadd.f32 %v3018, %v3072
        %v3098 = vadd.f32 %v3019, %v3073
        %v3099 = vadd.f32 %v3020, %v3074
        %v3100 = vadd.f32 %v3021, %v3075
        %v3101 = vadd.f32 %v3022, %v3076
        %v3102 = vadd.f32 %v3023, %v3077
        %v3103 = vadd.f32 %v3024, %v3078
        %v3104 = vadd.f32 %v3025, %v3079
        %v3105 = vld [vmem:[#allocation6 + $0x2e] sm:$0xff]
        %v3106 = vld [vmem:[#allocation6 + $0x36] sm:$0xff]
        %v3107 = vld [vmem:[#allocation6 + $0x3e] sm:$0xff]
        %v3108 = vld [vmem:[#allocation6 + $0x46] sm:$0xff]
        %v3109 = vld [vmem:[#allocation6 + $0x4e] sm:$0xff]
        %v3110 = vld [vmem:[#allocation6 + $0x56] sm:$0xff]
        %v3111 = vld [vmem:[#allocation6 + $0x5e] sm:$0xff]
        %v3112 = vld [vmem:[#allocation6 + $0x66] sm:$0xff]
        %v3113 = vld [vmem:[#allocation6 + $0x6e] sm:$0xff]
        %v3114 = vld [vmem:[#allocation6 + $0x76] sm:$0xff]
        %v3115 = vld [vmem:[#allocation6 + $0x7e] sm:$0xff]
        %v3116 = vld [vmem:[#allocation6 + $0x86] sm:$0xff]
        %v3117 = vld [vmem:[#allocation6 + $0x8e] sm:$0xff]
        %v3118 = vld [vmem:[#allocation6 + $0x96] sm:$0xff]
        %v3119 = vld [vmem:[#allocation6 + $0x9e] sm:$0xff]
        %v3120 = vld [vmem:[#allocation6 + $0xa6] sm:$0xff]
        %v3121 = vld [vmem:[#allocation6 + $0xae] sm:$0xff]
        %v3122 = vld [vmem:[#allocation6 + $0xb6] sm:$0xff]
        %v3123 = vld [vmem:[#allocation6 + $0xbe] sm:$0xff]
        %v3124 = vld [vmem:[#allocation6 + $0xc6] sm:$0xff]
        %v3125 = vld [vmem:[#allocation6 + $0xce] sm:$0xff]
        %v3126 = vld [vmem:[#allocation6 + $0xd6] sm:$0xff]
        %v3127 = vld [vmem:[#allocation6 + $0xde] sm:$0xff]
        %v3128 = vld [vmem:[#allocation6 + $0xe6] sm:$0xff]
        %v3129 = vld [vmem:[#allocation6 + $0xee] sm:$0xff]
        %v3130 = vlaneseq
        %v3131 = vshrl.u32 %v3130, 7
        %v3132 = vsub.s32 1, %v3131
        %v3133 = vrot.slane %v502, %v3132
        %v3134 = vmul.f32 %v3105, %v3133
        %v3135 = vmul.f32 %v3106, %v3133
        %v3136 = vmul.f32 %v3107, %v3133
        %v3137 = vmul.f32 %v3108, %v3133
        %v3138 = vmul.f32 %v3109, %v3133
        %v3139 = vmul.f32 %v3110, %v3133
        %v3140 = vmul.f32 %v3111, %v3133
        %v3141 = vmul.f32 %v3112, %v3133
        %v3142 = vmul.f32 %v3113, %v3133
        %v3143 = vmul.f32 %v3114, %v3133
        %v3144 = vmul.f32 %v3115, %v3133
        %v3145 = vmul.f32 %v3116, %v3133
        %v3146 = vmul.f32 %v3117, %v3133
        %v3147 = vmul.f32 %v3118, %v3133
        %v3148 = vmul.f32 %v3119, %v3133
        %v3149 = vmul.f32 %v3120, %v3133
        %v3150 = vmul.f32 %v3121, %v3133
        %v3151 = vmul.f32 %v3122, %v3133
        %v3152 = vmul.f32 %v3123, %v3133
        %v3153 = vmul.f32 %v3124, %v3133
        %v3154 = vmul.f32 %v3125, %v3133
        %v3155 = vmul.f32 %v3126, %v3133
        %v3156 = vmul.f32 %v3127, %v3133
        %v3157 = vmul.f32 %v3128, %v3133
        %v3158 = vmul.f32 %v3129, %v3133
        %v3159 = vadd.f32 %v3080, %v3134
        %v3160 = vadd.f32 %v3081, %v3135
        %v3161 = vadd.f32 %v3082, %v3136
        %v3162 = vadd.f32 %v3083, %v3137
        %v3163 = vadd.f32 %v3084, %v3138
        %v3164 = vadd.f32 %v3085, %v3139
        %v3165 = vadd.f32 %v3086, %v3140
        %v3166 = vadd.f32 %v3087, %v3141
        %v3167 = vadd.f32 %v3088, %v3142
        %v3168 = vadd.f32 %v3089, %v3143
        %v3169 = vadd.f32 %v3090, %v3144
        %v3170 = vadd.f32 %v3091, %v3145
        %v3171 = vadd.f32 %v3092, %v3146
        %v3172 = vadd.f32 %v3093, %v3147
        %v3173 = vadd.f32 %v3094, %v3148
        %v3174 = vadd.f32 %v3095, %v3149
        %v3175 = vadd.f32 %v3096, %v3150
        %v3176 = vadd.f32 %v3097, %v3151
        %v3177 = vadd.f32 %v3098, %v3152
        %v3178 = vadd.f32 %v3099, %v3153
        %v3179 = vadd.f32 %v3100, %v3154
        %v3180 = vadd.f32 %v3101, %v3155
        %v3181 = vadd.f32 %v3102, %v3156
        %v3182 = vadd.f32 %v3103, %v3157
        %v3183 = vadd.f32 %v3104, %v3158
        %v3184 = vld [vmem:[#allocation7 + $0x2f] sm:$0xff]
        %v3185 = vld [vmem:[#allocation7 + $0x37] sm:$0xff]
        %v3186 = vld [vmem:[#allocation7 + $0x3f] sm:$0xff]
        %v3187 = vld [vmem:[#allocation7 + $0x47] sm:$0xff]
        %v3188 = vld [vmem:[#allocation7 + $0x4f] sm:$0xff]
        %v3189 = vld [vmem:[#allocation7 + $0x57] sm:$0xff]
        %v3190 = vld [vmem:[#allocation7 + $0x5f] sm:$0xff]
        %v3191 = vld [vmem:[#allocation7 + $0x67] sm:$0xff]
        %v3192 = vld [vmem:[#allocation7 + $0x6f] sm:$0xff]
        %v3193 = vld [vmem:[#allocation7 + $0x77] sm:$0xff]
        %v3194 = vld [vmem:[#allocation7 + $0x7f] sm:$0xff]
        %v3195 = vld [vmem:[#allocation7 + $0x87] sm:$0xff]
        %v3196 = vld [vmem:[#allocation7 + $0x8f] sm:$0xff]
        %v3197 = vld [vmem:[#allocation7 + $0x97] sm:$0xff]
        %v3198 = vld [vmem:[#allocation7 + $0x9f] sm:$0xff]
        %v3199 = vld [vmem:[#allocation7 + $0xa7] sm:$0xff]
        %v3200 = vld [vmem:[#allocation7 + $0xaf] sm:$0xff]
        %v3201 = vld [vmem:[#allocation7 + $0xb7] sm:$0xff]
        %v3202 = vld [vmem:[#allocation7 + $0xbf] sm:$0xff]
        %v3203 = vld [vmem:[#allocation7 + $0xc7] sm:$0xff]
        %v3204 = vld [vmem:[#allocation7 + $0xcf] sm:$0xff]
        %v3205 = vld [vmem:[#allocation7 + $0xd7] sm:$0xff]
        %v3206 = vld [vmem:[#allocation7 + $0xdf] sm:$0xff]
        %v3207 = vld [vmem:[#allocation7 + $0xe7] sm:$0xff]
        %v3208 = vld [vmem:[#allocation7 + $0xef] sm:$0xff]
        %v3209 = vlaneseq
        %v3210 = vshrl.u32 %v3209, 7
        %v3211 = vsub.s32 2, %v3210
        %v3212 = vrot.slane %v502, %v3211
        %v3213 = vmul.f32 %v3184, %v3212
        %v3214 = vmul.f32 %v3185, %v3212
        %v3215 = vmul.f32 %v3186, %v3212
        %v3216 = vmul.f32 %v3187, %v3212
        %v3217 = vmul.f32 %v3188, %v3212
        %v3218 = vmul.f32 %v3189, %v3212
        %v3219 = vmul.f32 %v3190, %v3212
        %v3220 = vmul.f32 %v3191, %v3212
        %v3221 = vmul.f32 %v3192, %v3212
        %v3222 = vmul.f32 %v3193, %v3212
        %v3223 = vmul.f32 %v3194, %v3212
        %v3224 = vmul.f32 %v3195, %v3212
        %v3225 = vmul.f32 %v3196, %v3212
        %v3226 = vmul.f32 %v3197, %v3212
        %v3227 = vmul.f32 %v3198, %v3212
        %v3228 = vmul.f32 %v3199, %v3212
        %v3229 = vmul.f32 %v3200, %v3212
        %v3230 = vmul.f32 %v3201, %v3212
        %v3231 = vmul.f32 %v3202, %v3212
        %v3232 = vmul.f32 %v3203, %v3212
        %v3233 = vmul.f32 %v3204, %v3212
        %v3234 = vmul.f32 %v3205, %v3212
        %v3235 = vmul.f32 %v3206, %v3212
        %v3236 = vmul.f32 %v3207, %v3212
        %v3237 = vmul.f32 %v3208, %v3212
        %v3238 = vadd.f32 %v3159, %v3213
        %v3239 = vadd.f32 %v3160, %v3214
        %v3240 = vadd.f32 %v3161, %v3215
        %v3241 = vadd.f32 %v3162, %v3216
        %v3242 = vadd.f32 %v3163, %v3217
        %v3243 = vadd.f32 %v3164, %v3218
        %v3244 = vadd.f32 %v3165, %v3219
        %v3245 = vadd.f32 %v3166, %v3220
        %v3246 = vadd.f32 %v3167, %v3221
        %v3247 = vadd.f32 %v3168, %v3222
        %v3248 = vadd.f32 %v3169, %v3223
        %v3249 = vadd.f32 %v3170, %v3224
        %v3250 = vadd.f32 %v3171, %v3225
        %v3251 = vadd.f32 %v3172, %v3226
        %v3252 = vadd.f32 %v3173, %v3227
        %v3253 = vadd.f32 %v3174, %v3228
        %v3254 = vadd.f32 %v3175, %v3229
        %v3255 = vadd.f32 %v3176, %v3230
        %v3256 = vadd.f32 %v3177, %v3231
        %v3257 = vadd.f32 %v3178, %v3232
        %v3258 = vadd.f32 %v3179, %v3233
        %v3259 = vadd.f32 %v3180, %v3234
        %v3260 = vadd.f32 %v3181, %v3235
        %v3261 = vadd.f32 %v3182, %v3236
        %v3262 = vadd.f32 %v3183, %v3237
        %v3263 = vld [vmem:[#allocation8 + $0x30] sm:$0xff]
        %v3264 = vld [vmem:[#allocation8 + $0x38] sm:$0xff]
        %v3265 = vld [vmem:[#allocation8 + $0x40] sm:$0xff]
        %v3266 = vld [vmem:[#allocation8 + $0x48] sm:$0xff]
        %v3267 = vld [vmem:[#allocation8 + $0x50] sm:$0xff]
        %v3268 = vld [vmem:[#allocation8 + $0x58] sm:$0xff]
        %v3269 = vld [vmem:[#allocation8 + $0x60] sm:$0xff]
        %v3270 = vld [vmem:[#allocation8 + $0x68] sm:$0xff]
        %v3271 = vld [vmem:[#allocation8 + $0x70] sm:$0xff]
        %v3272 = vld [vmem:[#allocation8 + $0x78] sm:$0xff]
        %v3273 = vld [vmem:[#allocation8 + $0x80] sm:$0xff]
        %v3274 = vld [vmem:[#allocation8 + $0x88] sm:$0xff]
        %v3275 = vld [vmem:[#allocation8 + $0x90] sm:$0xff]
        %v3276 = vld [vmem:[#allocation8 + $0x98] sm:$0xff]
        %v3277 = vld [vmem:[#allocation8 + $0xa0] sm:$0xff]
        %v3278 = vld [vmem:[#allocation8 + $0xa8] sm:$0xff]
        %v3279 = vld [vmem:[#allocation8 + $0xb0] sm:$0xff]
        %v3280 = vld [vmem:[#allocation8 + $0xb8] sm:$0xff]
        %v3281 = vld [vmem:[#allocation8 + $0xc0] sm:$0xff]
        %v3282 = vld [vmem:[#allocation8 + $0xc8] sm:$0xff]
        %v3283 = vld [vmem:[#allocation8 + $0xd0] sm:$0xff]
        %v3284 = vld [vmem:[#allocation8 + $0xd8] sm:$0xff]
        %v3285 = vld [vmem:[#allocation8 + $0xe0] sm:$0xff]
        %v3286 = vld [vmem:[#allocation8 + $0xe8] sm:$0xff]
        %v3287 = vld [vmem:[#allocation8 + $0xf0] sm:$0xff]
        %v3288 = vlaneseq
        %v3289 = vshrl.u32 %v3288, 7
        %v3290 = vsub.s32 3, %v3289
        %v3291 = vrot.slane %v502, %v3290
        %v3292 = vmul.f32 %v3263, %v3291
        %v3293 = vmul.f32 %v3264, %v3291
        %v3294 = vmul.f32 %v3265, %v3291
        %v3295 = vmul.f32 %v3266, %v3291
        %v3296 = vmul.f32 %v3267, %v3291
        %v3297 = vmul.f32 %v3268, %v3291
        %v3298 = vmul.f32 %v3269, %v3291
        %v3299 = vmul.f32 %v3270, %v3291
        %v3300 = vmul.f32 %v3271, %v3291
        %v3301 = vmul.f32 %v3272, %v3291
        %v3302 = vmul.f32 %v3273, %v3291
        %v3303 = vmul.f32 %v3274, %v3291
        %v3304 = vmul.f32 %v3275, %v3291
        %v3305 = vmul.f32 %v3276, %v3291
        %v3306 = vmul.f32 %v3277, %v3291
        %v3307 = vmul.f32 %v3278, %v3291
        %v3308 = vmul.f32 %v3279, %v3291
        %v3309 = vmul.f32 %v3280, %v3291
        %v3310 = vmul.f32 %v3281, %v3291
        %v3311 = vmul.f32 %v3282, %v3291
        %v3312 = vmul.f32 %v3283, %v3291
        %v3313 = vmul.f32 %v3284, %v3291
        %v3314 = vmul.f32 %v3285, %v3291
        %v3315 = vmul.f32 %v3286, %v3291
        %v3316 = vmul.f32 %v3287, %v3291
        %v3317 = vadd.f32 %v3238, %v3292
        %v3318 = vadd.f32 %v3239, %v3293
        %v3319 = vadd.f32 %v3240, %v3294
        %v3320 = vadd.f32 %v3241, %v3295
        %v3321 = vadd.f32 %v3242, %v3296
        %v3322 = vadd.f32 %v3243, %v3297
        %v3323 = vadd.f32 %v3244, %v3298
        %v3324 = vadd.f32 %v3245, %v3299
        %v3325 = vadd.f32 %v3246, %v3300
        %v3326 = vadd.f32 %v3247, %v3301
        %v3327 = vadd.f32 %v3248, %v3302
        %v3328 = vadd.f32 %v3249, %v3303
        %v3329 = vadd.f32 %v3250, %v3304
        %v3330 = vadd.f32 %v3251, %v3305
        %v3331 = vadd.f32 %v3252, %v3306
        %v3332 = vadd.f32 %v3253, %v3307
        %v3333 = vadd.f32 %v3254, %v3308
        %v3334 = vadd.f32 %v3255, %v3309
        %v3335 = vadd.f32 %v3256, %v3310
        %v3336 = vadd.f32 %v3257, %v3311
        %v3337 = vadd.f32 %v3258, %v3312
        %v3338 = vadd.f32 %v3259, %v3313
        %v3339 = vadd.f32 %v3260, %v3314
        %v3340 = vadd.f32 %v3261, %v3315
        %v3341 = vadd.f32 %v3262, %v3316
        %v3342 = vld [vmem:[#allocation4 + $0xca] sm:$0xff]
        %v3343 = vld [vmem:[#allocation4 + $0xd2] sm:$0xff]
        %v3344 = vld [vmem:[#allocation4 + $0xda] sm:$0xff]
        %v3345 = vld [vmem:[#allocation4 + $0xe2] sm:$0xff]
        %v3346 = vld [vmem:[#allocation4 + $0xea] sm:$0xff]
        %v3347 = vld [vmem:[#allocation4 + $0xf2] sm:$0xff]
        %v3348 = vld [vmem:[#allocation4 + $0xfa] sm:$0xff]
        %v3349 = vlaneseq
        %v3350 = vshrl.u32 %v3349, 7
        %v3351 = vsub.s32 4, %v3350
        %v3352 = vrot.slane %v502, %v3351
        %v3353 = vmul.f32 %v1794, %v3352
        %v3354 = vmul.f32 %v1795, %v3352
        %v3355 = vmul.f32 %v1796, %v3352
        %v3356 = vmul.f32 %v1797, %v3352
        %v3357 = vmul.f32 %v1798, %v3352
        %v3358 = vmul.f32 %v1799, %v3352
        %v3359 = vmul.f32 %v1800, %v3352
        %v3360 = vmul.f32 %v1801, %v3352
        %v3361 = vmul.f32 %v1802, %v3352
        %v3362 = vmul.f32 %v1803, %v3352
        %v3363 = vmul.f32 %v1804, %v3352
        %v3364 = vmul.f32 %v1805, %v3352
        %v3365 = vmul.f32 %v1806, %v3352
        %v3366 = vmul.f32 %v1807, %v3352
        %v3367 = vmul.f32 %v1808, %v3352
        %v3368 = vmul.f32 %v1809, %v3352
        %v3369 = vmul.f32 %v1810, %v3352
        %v3370 = vmul.f32 %v1811, %v3352
        %v3371 = vmul.f32 %v3342, %v3352
        %v3372 = vmul.f32 %v3343, %v3352
        %v3373 = vmul.f32 %v3344, %v3352
        %v3374 = vmul.f32 %v3345, %v3352
        %v3375 = vmul.f32 %v3346, %v3352
        %v3376 = vmul.f32 %v3347, %v3352
        %v3377 = vmul.f32 %v3348, %v3352
        %v3378 = vadd.f32 %v3317, %v3353
        %v3379 = vadd.f32 %v3318, %v3354
        %v3380 = vadd.f32 %v3319, %v3355
        %v3381 = vadd.f32 %v3320, %v3356
        %v3382 = vadd.f32 %v3321, %v3357
        %v3383 = vadd.f32 %v3322, %v3358
        %v3384 = vadd.f32 %v3323, %v3359
        %v3385 = vadd.f32 %v3324, %v3360
        %v3386 = vadd.f32 %v3325, %v3361
        %v3387 = vadd.f32 %v3326, %v3362
        %v3388 = vadd.f32 %v3327, %v3363
        %v3389 = vadd.f32 %v3328, %v3364
        %v3390 = vadd.f32 %v3329, %v3365
        %v3391 = vadd.f32 %v3330, %v3366
        %v3392 = vadd.f32 %v3331, %v3367
        %v3393 = vadd.f32 %v3332, %v3368
        %v3394 = vadd.f32 %v3333, %v3369
        %v3395 = vadd.f32 %v3334, %v3370
        %v3396 = vadd.f32 %v3335, %v3371
        %v3397 = vadd.f32 %v3336, %v3372
        %v3398 = vadd.f32 %v3337, %v3373
        %v3399 = vadd.f32 %v3338, %v3374
        %v3400 = vadd.f32 %v3339, %v3375
        %v3401 = vadd.f32 %v3340, %v3376
        %v3402 = vadd.f32 %v3341, %v3377
        %v3403 = vld [vmem:[#allocation5 + $0xcb] sm:$0xff]
        %v3404 = vld [vmem:[#allocation5 + $0xd3] sm:$0xff]
        %v3405 = vld [vmem:[#allocation5 + $0xdb] sm:$0xff]
        %v3406 = vld [vmem:[#allocation5 + $0xe3] sm:$0xff]
        %v3407 = vld [vmem:[#allocation5 + $0xeb] sm:$0xff]
        %v3408 = vld [vmem:[#allocation5 + $0xf3] sm:$0xff]
        %v3409 = vld [vmem:[#allocation5 + $0xfb] sm:$0xff]
        %v3410 = vlaneseq
        %v3411 = vshrl.u32 %v3410, 7
        %v3412 = vsub.s32 5, %v3411
        %v3413 = vrot.slane %v502, %v3412
        %v3414 = vmul.f32 %v1848, %v3413
        %v3415 = vmul.f32 %v1849, %v3413
        %v3416 = vmul.f32 %v1850, %v3413
        %v3417 = vmul.f32 %v1851, %v3413
        %v3418 = vmul.f32 %v1852, %v3413
        %v3419 = vmul.f32 %v1853, %v3413
        %v3420 = vmul.f32 %v1854, %v3413
        %v3421 = vmul.f32 %v1855, %v3413
        %v3422 = vmul.f32 %v1856, %v3413
        %v3423 = vmul.f32 %v1857, %v3413
        %v3424 = vmul.f32 %v1858, %v3413
        %v3425 = vmul.f32 %v1859, %v3413
        %v3426 = vmul.f32 %v1860, %v3413
        %v3427 = vmul.f32 %v1861, %v3413
        %v3428 = vmul.f32 %v1862, %v3413
        %v3429 = vmul.f32 %v1863, %v3413
        %v3430 = vmul.f32 %v1864, %v3413
        %v3431 = vmul.f32 %v1865, %v3413
        %v3432 = vmul.f32 %v3403, %v3413
        %v3433 = vmul.f32 %v3404, %v3413
        %v3434 = vmul.f32 %v3405, %v3413
        %v3435 = vmul.f32 %v3406, %v3413
        %v3436 = vmul.f32 %v3407, %v3413
        %v3437 = vmul.f32 %v3408, %v3413
        %v3438 = vmul.f32 %v3409, %v3413
        %v3439 = vadd.f32 %v3378, %v3414
        %v3440 = vadd.f32 %v3379, %v3415
        %v3441 = vadd.f32 %v3380, %v3416
        %v3442 = vadd.f32 %v3381, %v3417
        %v3443 = vadd.f32 %v3382, %v3418
        %v3444 = vadd.f32 %v3383, %v3419
        %v3445 = vadd.f32 %v3384, %v3420
        %v3446 = vadd.f32 %v3385, %v3421
        %v3447 = vadd.f32 %v3386, %v3422
        %v3448 = vadd.f32 %v3387, %v3423
        %v3449 = vadd.f32 %v3388, %v3424
        %v3450 = vadd.f32 %v3389, %v3425
        %v3451 = vadd.f32 %v3390, %v3426
        %v3452 = vadd.f32 %v3391, %v3427
        %v3453 = vadd.f32 %v3392, %v3428
        %v3454 = vadd.f32 %v3393, %v3429
        %v3455 = vadd.f32 %v3394, %v3430
        %v3456 = vadd.f32 %v3395, %v3431
        %v3457 = vadd.f32 %v3396, %v3432
        %v3458 = vadd.f32 %v3397, %v3433
        %v3459 = vadd.f32 %v3398, %v3434
        %v3460 = vadd.f32 %v3399, %v3435
        %v3461 = vadd.f32 %v3400, %v3436
        %v3462 = vadd.f32 %v3401, %v3437
        %v3463 = vadd.f32 %v3402, %v3438
        %v3464 = vld [vmem:[#allocation6 + $0xcc] sm:$0xff]
        %v3465 = vld [vmem:[#allocation6 + $0xd4] sm:$0xff]
        %v3466 = vld [vmem:[#allocation6 + $0xdc] sm:$0xff]
        %v3467 = vld [vmem:[#allocation6 + $0xe4] sm:$0xff]
        %v3468 = vld [vmem:[#allocation6 + $0xec] sm:$0xff]
        %v3469 = vld [vmem:[#allocation6 + $0xf4] sm:$0xff]
        %v3470 = vld [vmem:[#allocation6 + $0xfc] sm:$0xff]
        %v3471 = vlaneseq
        %v3472 = vshrl.u32 %v3471, 7
        %v3473 = vsub.s32 6, %v3472
        %v3474 = vrot.slane %v502, %v3473
        %v3475 = vmul.f32 %v1927, %v3474
        %v3476 = vmul.f32 %v1928, %v3474
        %v3477 = vmul.f32 %v1929, %v3474
        %v3478 = vmul.f32 %v1930, %v3474
        %v3479 = vmul.f32 %v1931, %v3474
        %v3480 = vmul.f32 %v1932, %v3474
        %v3481 = vmul.f32 %v1933, %v3474
        %v3482 = vmul.f32 %v1934, %v3474
        %v3483 = vmul.f32 %v1935, %v3474
        %v3484 = vmul.f32 %v1936, %v3474
        %v3485 = vmul.f32 %v1937, %v3474
        %v3486 = vmul.f32 %v1938, %v3474
        %v3487 = vmul.f32 %v1939, %v3474
        %v3488 = vmul.f32 %v1940, %v3474
        %v3489 = vmul.f32 %v1941, %v3474
        %v3490 = vmul.f32 %v1942, %v3474
        %v3491 = vmul.f32 %v1943, %v3474
        %v3492 = vmul.f32 %v1944, %v3474
        %v3493 = vmul.f32 %v3464, %v3474
        %v3494 = vmul.f32 %v3465, %v3474
        %v3495 = vmul.f32 %v3466, %v3474
        %v3496 = vmul.f32 %v3467, %v3474
        %v3497 = vmul.f32 %v3468, %v3474
        %v3498 = vmul.f32 %v3469, %v3474
        %v3499 = vmul.f32 %v3470, %v3474
        %v3500 = vadd.f32 %v3439, %v3475
        %v3501 = vadd.f32 %v3440, %v3476
        %v3502 = vadd.f32 %v3441, %v3477
        %v3503 = vadd.f32 %v3442, %v3478
        %v3504 = vadd.f32 %v3443, %v3479
        %v3505 = vadd.f32 %v3444, %v3480
        %v3506 = vadd.f32 %v3445, %v3481
        %v3507 = vadd.f32 %v3446, %v3482
        %v3508 = vadd.f32 %v3447, %v3483
        %v3509 = vadd.f32 %v3448, %v3484
        %v3510 = vadd.f32 %v3449, %v3485
        %v3511 = vadd.f32 %v3450, %v3486
        %v3512 = vadd.f32 %v3451, %v3487
        %v3513 = vadd.f32 %v3452, %v3488
        %v3514 = vadd.f32 %v3453, %v3489
        %v3515 = vadd.f32 %v3454, %v3490
        %v3516 = vadd.f32 %v3455, %v3491
        %v3517 = vadd.f32 %v3456, %v3492
        %v3518 = vadd.f32 %v3457, %v3493
        %v3519 = vadd.f32 %v3458, %v3494
        %v3520 = vadd.f32 %v3459, %v3495
        %v3521 = vadd.f32 %v3460, %v3496
        %v3522 = vadd.f32 %v3461, %v3497
        %v3523 = vadd.f32 %v3462, %v3498
        %v3524 = vadd.f32 %v3463, %v3499
        %v3525 = vld [vmem:[#allocation7 + $0xcd] sm:$0xff]
        %v3526 = vld [vmem:[#allocation7 + $0xd5] sm:$0xff]
        %v3527 = vld [vmem:[#allocation7 + $0xdd] sm:$0xff]
        %v3528 = vld [vmem:[#allocation7 + $0xe5] sm:$0xff]
        %v3529 = vld [vmem:[#allocation7 + $0xed] sm:$0xff]
        %v3530 = vld [vmem:[#allocation7 + $0xf5] sm:$0xff]
        %v3531 = vld [vmem:[#allocation7 + $0xfd] sm:$0xff]
        %v3532 = vlaneseq
        %v3533 = vshrl.u32 %v3532, 7
        %v3534 = vsub.s32 7, %v3533
        %v3535 = vrot.slane %v502, %v3534
        %v3536 = vmul.f32 %v2006, %v3535
        %v3537 = vmul.f32 %v2007, %v3535
        %v3538 = vmul.f32 %v2008, %v3535
        %v3539 = vmul.f32 %v2009, %v3535
        %v3540 = vmul.f32 %v2010, %v3535
        %v3541 = vmul.f32 %v2011, %v3535
        %v3542 = vmul.f32 %v2012, %v3535
        %v3543 = vmul.f32 %v2013, %v3535
        %v3544 = vmul.f32 %v2014, %v3535
        %v3545 = vmul.f32 %v2015, %v3535
        %v3546 = vmul.f32 %v2016, %v3535
        %v3547 = vmul.f32 %v2017, %v3535
        %v3548 = vmul.f32 %v2018, %v3535
        %v3549 = vmul.f32 %v2019, %v3535
        %v3550 = vmul.f32 %v2020, %v3535
        %v3551 = vmul.f32 %v2021, %v3535
        %v3552 = vmul.f32 %v2022, %v3535
        %v3553 = vmul.f32 %v2023, %v3535
        %v3554 = vmul.f32 %v3525, %v3535
        %v3555 = vmul.f32 %v3526, %v3535
        %v3556 = vmul.f32 %v3527, %v3535
        %v3557 = vmul.f32 %v3528, %v3535
        %v3558 = vmul.f32 %v3529, %v3535
        %v3559 = vmul.f32 %v3530, %v3535
        %v3560 = vmul.f32 %v3531, %v3535
        %v3561 = vadd.f32 %v3500, %v3536
        %v3562 = vadd.f32 %v3501, %v3537
        %v3563 = vadd.f32 %v3502, %v3538
        %v3564 = vadd.f32 %v3503, %v3539
        %v3565 = vadd.f32 %v3504, %v3540
        %v3566 = vadd.f32 %v3505, %v3541
        %v3567 = vadd.f32 %v3506, %v3542
        %v3568 = vadd.f32 %v3507, %v3543
        %v3569 = vadd.f32 %v3508, %v3544
        %v3570 = vadd.f32 %v3509, %v3545
        %v3571 = vadd.f32 %v3510, %v3546
        %v3572 = vadd.f32 %v3511, %v3547
        %v3573 = vadd.f32 %v3512, %v3548
        %v3574 = vadd.f32 %v3513, %v3549
        %v3575 = vadd.f32 %v3514, %v3550
        %v3576 = vadd.f32 %v3515, %v3551
        %v3577 = vadd.f32 %v3516, %v3552
        %v3578 = vadd.f32 %v3517, %v3553
        %v3579 = vadd.f32 %v3518, %v3554
        %v3580 = vadd.f32 %v3519, %v3555
        %v3581 = vadd.f32 %v3520, %v3556
        %v3582 = vadd.f32 %v3521, %v3557
        %v3583 = vadd.f32 %v3522, %v3558
        %v3584 = vadd.f32 %v3523, %v3559
        %v3585 = vadd.f32 %v3524, %v3560
        %v3586 = vld [vmem:[#allocation8 + $0xce] sm:$0xff]
        %v3587 = vld [vmem:[#allocation8 + $0xd6] sm:$0xff]
        %v3588 = vld [vmem:[#allocation8 + $0xde] sm:$0xff]
        %v3589 = vld [vmem:[#allocation8 + $0xe6] sm:$0xff]
        %v3590 = vld [vmem:[#allocation8 + $0xee] sm:$0xff]
        %v3591 = vld [vmem:[#allocation8 + $0xf6] sm:$0xff]
        %v3592 = vld [vmem:[#allocation8 + $0xfe] sm:$0xff]
        %v3593 = vlaneseq
        %v3594 = vshrl.u32 %v3593, 7
        %v3595 = vsub.s32 0, %v3594
        %v3596 = vrot.slane %v503, %v3595
        %v3597 = vmul.f32 %v2085, %v3596
        %v3598 = vmul.f32 %v2086, %v3596
        %v3599 = vmul.f32 %v2087, %v3596
        %v3600 = vmul.f32 %v2088, %v3596
        %v3601 = vmul.f32 %v2089, %v3596
        %v3602 = vmul.f32 %v2090, %v3596
        %v3603 = vmul.f32 %v2091, %v3596
        %v3604 = vmul.f32 %v2092, %v3596
        %v3605 = vmul.f32 %v2093, %v3596
        %v3606 = vmul.f32 %v2094, %v3596
        %v3607 = vmul.f32 %v2095, %v3596
        %v3608 = vmul.f32 %v2096, %v3596
        %v3609 = vmul.f32 %v2097, %v3596
        %v3610 = vmul.f32 %v2098, %v3596
        %v3611 = vmul.f32 %v2099, %v3596
        %v3612 = vmul.f32 %v2100, %v3596
        %v3613 = vmul.f32 %v2101, %v3596
        %v3614 = vmul.f32 %v2102, %v3596
        %v3615 = vmul.f32 %v3586, %v3596
        %v3616 = vmul.f32 %v3587, %v3596
        %v3617 = vmul.f32 %v3588, %v3596
        %v3618 = vmul.f32 %v3589, %v3596
        %v3619 = vmul.f32 %v3590, %v3596
        %v3620 = vmul.f32 %v3591, %v3596
        %v3621 = vmul.f32 %v3592, %v3596
        %v3622 = vadd.f32 %v3561, %v3597
        %v3623 = vadd.f32 %v3562, %v3598
        %v3624 = vadd.f32 %v3563, %v3599
        %v3625 = vadd.f32 %v3564, %v3600
        %v3626 = vadd.f32 %v3565, %v3601
        %v3627 = vadd.f32 %v3566, %v3602
        %v3628 = vadd.f32 %v3567, %v3603
        %v3629 = vadd.f32 %v3568, %v3604
        %v3630 = vadd.f32 %v3569, %v3605
        %v3631 = vadd.f32 %v3570, %v3606
        %v3632 = vadd.f32 %v3571, %v3607
        %v3633 = vadd.f32 %v3572, %v3608
        %v3634 = vadd.f32 %v3573, %v3609
        %v3635 = vadd.f32 %v3574, %v3610
        %v3636 = vadd.f32 %v3575, %v3611
        %v3637 = vadd.f32 %v3576, %v3612
        %v3638 = vadd.f32 %v3577, %v3613
        %v3639 = vadd.f32 %v3578, %v3614
        %v3640 = vadd.f32 %v3579, %v3615
        %v3641 = vadd.f32 %v3580, %v3616
        %v3642 = vadd.f32 %v3581, %v3617
        %v3643 = vadd.f32 %v3582, %v3618
        %v3644 = vadd.f32 %v3583, %v3619
        %v3645 = vadd.f32 %v3584, %v3620
        %v3646 = vadd.f32 %v3585, %v3621
        %3647 = vxpose.xlu0.b32.start [1/16] %v3622, 128
        %3648 = vxpose.xlu0.b32.cont [2/16] %v3623, 128
        %3649 = vxpose.xlu0.b32.cont [3/16] %v3624, 128
        %3650 = vxpose.xlu0.b32.cont [4/16] %v3625, 128
        %3651 = vxpose.xlu0.b32.cont [5/16] %v3626, 128
        %3652 = vxpose.xlu0.b32.cont [6/16] %v3627, 128
        %3653 = vxpose.xlu0.b32.cont [7/16] %v3628, 128
        %3654 = vxpose.xlu0.b32.cont [8/16] %v3629, 128
        %3655 = vxpose.xlu0.b32.cont [9/16] %v3630, 128
        %3656 = vxpose.xlu0.b32.cont [10/16] %v3631, 128
        %3657 = vxpose.xlu0.b32.cont [11/16] %v3632, 128
        %3658 = vxpose.xlu0.b32.cont [12/16] %v3633, 128
        %3659 = vxpose.xlu0.b32.cont [13/16] %v3634, 128
        %3660 = vxpose.xlu0.b32.cont [14/16] %v3635, 128
        %3661 = vxpose.xlu0.b32.cont [15/16] %v3636, 128
        %3662 = vxpose.xlu0.b32.end [16/16] %v3637, 128
        %v3663 = vpop.trf.xlu0
        %v3664 = vpop.trf.xlu0
        %v3665 = vpop.trf.xlu0
        %v3666 = vpop.trf.xlu0
        %v3667 = vpop.trf.xlu0
        %v3668 = vpop.trf.xlu0
        %v3669 = vpop.trf.xlu0
        %v3670 = vpop.trf.xlu0
        %v3671 = vpop.trf.xlu0
        %v3672 = vpop.trf.xlu0
        %v3673 = vpop.trf.xlu0
        %v3674 = vpop.trf.xlu0
        %v3675 = vpop.trf.xlu0
        %v3676 = vpop.trf.xlu0
        %v3677 = vpop.trf.xlu0
        %v3678 = vpop.trf.xlu0
        %3679 = vxpose.xlu0.b32.start [1/16] %v3638, 128
        %3680 = vxpose.xlu0.b32.cont [2/16] %v3639, 128
        %3681 = vxpose.xlu0.b32.cont [3/16] %v3640, 128
        %3682 = vxpose.xlu0.b32.cont [4/16] %v3641, 128
        %3683 = vxpose.xlu0.b32.cont [5/16] %v3642, 128
        %3684 = vxpose.xlu0.b32.cont [6/16] %v3643, 128
        %3685 = vxpose.xlu0.b32.cont [7/16] %v3644, 128
        %3686 = vxpose.xlu0.b32.cont [8/16] %v3645, 128
        %3687 = vxpose.xlu0.b32.cont [9/16] %v3646, 128
        %3688 = vxpose.xlu0.b32.cont [10/16] 0.0, 128
        %3689 = vxpose.xlu0.b32.cont [11/16] 0.0, 128
        %3690 = vxpose.xlu0.b32.cont [12/16] 0.0, 128
        %3691 = vxpose.xlu0.b32.cont [13/16] 0.0, 128
        %3692 = vxpose.xlu0.b32.cont [14/16] 0.0, 128
        %3693 = vxpose.xlu0.b32.cont [15/16] 0.0, 128
        %3694 = vxpose.xlu0.b32.end [16/16] 0.0, 128
        %v3695 = vpop.trf.xlu0
        %v3696 = vpop.trf.xlu0
        %v3697 = vpop.trf.xlu0
        %v3698 = vpop.trf.xlu0
        %v3699 = vpop.trf.xlu0
        %v3700 = vpop.trf.xlu0
        %v3701 = vpop.trf.xlu0
        %v3702 = vpop.trf.xlu0
        %v3703 = vpop.trf.xlu0
        %v3704 = vpop.trf.xlu0
        %v3705 = vpop.trf.xlu0
        %v3706 = vpop.trf.xlu0
        %v3707 = vpop.trf.xlu0
        %v3708 = vpop.trf.xlu0
        %v3709 = vpop.trf.xlu0
        %v3710 = vpop.trf.xlu0
        %3711 = vst [vmem:[%s215] sm:$0xff] %v3663
        %3712 = vst.msk [vmem:[%s215 + $0x8] sm:$0xff] %vm307, %v3695
        %3713 = vst [vmem:[%s215 + $0x10] sm:$0xff] %v3664
        %3714 = vst.msk [vmem:[%s215 + $0x18] sm:$0xff] %vm307, %v3696
        %3715 = vst [vmem:[%s215 + $0x20] sm:$0xff] %v3665
        %3716 = vst.msk [vmem:[%s215 + $0x28] sm:$0xff] %vm307, %v3697
        %3717 = vst [vmem:[%s215 + $0x30] sm:$0xff] %v3666
        %3718 = vst.msk [vmem:[%s215 + $0x38] sm:$0xff] %vm307, %v3698
        %3719 = vst [vmem:[%s215 + $0x40] sm:$0xff] %v3667
        %3720 = vst.msk [vmem:[%s215 + $0x48] sm:$0xff] %vm307, %v3699
        %3721 = vst [vmem:[%s215 + $0x50] sm:$0xff] %v3668
        %3722 = vst.msk [vmem:[%s215 + $0x58] sm:$0xff] %vm307, %v3700
        %3723 = vst [vmem:[%s215 + $0x60] sm:$0xff] %v3669
        %3724 = vst.msk [vmem:[%s215 + $0x68] sm:$0xff] %vm307, %v3701
        %3725 = vst [vmem:[%s215 + $0x70] sm:$0xff] %v3670
        %3726 = vst.msk [vmem:[%s215 + $0x78] sm:$0xff] %vm307, %v3702
        %3727 = vst [vmem:[%s215 + $0x80] sm:$0xff] %v3671
        %3728 = vst.msk [vmem:[%s215 + $0x88] sm:$0xff] %vm307, %v3703
        %3729 = vst [vmem:[%s215 + $0x90] sm:$0xff] %v3672
        %3730 = vst.msk [vmem:[%s215 + $0x98] sm:$0xff] %vm307, %v3704
        %3731 = vst [vmem:[%s215 + $0xa0] sm:$0xff] %v3673
        %3732 = vst.msk [vmem:[%s215 + $0xa8] sm:$0xff] %vm307, %v3705
        %3733 = vst [vmem:[%s215 + $0xb0] sm:$0xff] %v3674
        %3734 = vst.msk [vmem:[%s215 + $0xb8] sm:$0xff] %vm307, %v3706
        %3735 = vst [vmem:[%s215 + $0xc0] sm:$0xff] %v3675
        %3736 = vst.msk [vmem:[%s215 + $0xc8] sm:$0xff] %vm307, %v3707
        %3737 = vst [vmem:[%s215 + $0xd0] sm:$0xff] %v3676
        %3738 = vst.msk [vmem:[%s215 + $0xd8] sm:$0xff] %vm307, %v3708
        %3739 = vst [vmem:[%s215 + $0xe0] sm:$0xff] %v3677
        %3740 = vst.msk [vmem:[%s215 + $0xe8] sm:$0xff] %vm307, %v3709
        %3741 = vst [vmem:[%s215 + $0xf0] sm:$0xff] %v3678
        %3742 = vst.msk [vmem:[%s215 + $0xf8] sm:$0xff] %vm307, %v3710
        %s3743 = sand.u32 %s95, 1
        %s3744 = scalar_lea.sflag [#allocation11], %s3743
        %s3745 = sand.u32 %s95, 1
        %s3746 = smul.addr %s3745, 256
        %s3747 = scalar_lea.vmem [#allocation12], %s3746
        // Predicated region
        $region33: #{tpu_custom_call.1} parent=27 // pred_check
          %p3748 = pneg %p105
        $region34: #{tpu_custom_call.1} parent=27 // pred_check_branch
          %3750 = sbr.rel (%p3748) target = $region36
        $region35: #{tpu_custom_call.1} parent=27 // pred_region
          %s3751 = smul.u32 16, %s24
          %s3752 = ssub.s32 36, %s3751
          %p3753 = scmp.lt.s32.totalorder %s3752, 16
          %s3754 = scalar_select %p3753, %s3752, 16
          %s3755 = smul.u32 128, %s3754
          %s3756 = smul.u32 %s3755, 2
          %s3758 = ssub.s32 4096, %s3756
          %3759 = vsyncadd %s3744, %s3758
          %p3760 = scmp.ne.s32.totalorder 0, %s3756
          %s3761 = smul.addr %s3751, 2
          %s3762 = smul.addr %s23, 72
          %s3763 = sadd.s32 %s3761, %s3762
          %s3764 = smul.addr %s3763, 128
          %s3765 = scalar_lea.hbm %s2, %s3764
          %s3766 = smul.u32 16, %s3754
          %s3767 = sshll.u32 %s3747, 4
          %s3768 = int_to_ptr.vmem [resolvable:$true] %s3767
          %s3769 = sshll.u32 %s3766, 4
          %3773 = dma.vmem_to_hbm [thread:$0]  (%p3760), %s3768, %s3769, %s3765, %s3744, 256, 256, 16
        $region36: #{tpu_custom_call.1} parent=27 // pred_fallthru
          _
      $region28: #{tpu_custom_call.1} parent=5 // pred_fallthru
        _
      %p3774 = scmp.le.s32.totalorder 2, %s14
      // Predicated region
      $region37: #{tpu_custom_call.1} parent=5 // pred_check
        %p3775 = pneg %p3774
      $region38: #{tpu_custom_call.1} parent=5 // pred_check_branch
        %3777 = sbr.rel (%p3775) target = $region40
      $region39: #{tpu_custom_call.1} parent=5 // pred_region
        %s3778 = ssub.s32 %s14, 2
        // Predicated region
        $region41: #{tpu_custom_call.1} parent=39 // pred_check
          %p3779 = pneg %p111
        $region42: #{tpu_custom_call.1} parent=39 // pred_check_branch
          %3781 = sbr.rel (%p3779) target = $region44
        $region43: #{tpu_custom_call.1} parent=39 // pred_region
          %s3782 = sand.u32 %s96, 1
          %s3783 = scalar_lea.sflag [#allocation11], %s3782
          %s3784 = sand.u32 %s96, 1
          %s3785 = smul.addr %s3784, 256
          %s3786 = scalar_lea.vmem [#allocation12], %s3785
          %3787 = dma.done %s3783, 4096
        $region44: #{tpu_custom_call.1} parent=39 // pred_fallthru
          _
      $region40: #{tpu_custom_call.1} parent=5 // pred_fallthru
        _
    $region6: #{tpu_custom_call.1} parent=1 // loop_footer
      %s18 = sadd.s32 1, %s14
    $region7: #{tpu_custom_call.1} parent=1 // loop_footer_branch
      %13 = sbr.rel target = $region3
    $region8: #{tpu_custom_call.1} parent=1 // loop_exit
      _
    %3788 = vsyncpa [#allocation10], 1
    %s3789 = scalar_lea.sflag [#allocation10], 1
    %3790 = vsyncpa %s3789, 1
    %3791 = vsyncpa [#allocation11], 1
    %s3792 = scalar_lea.sflag [#allocation11], 1
    %3793 = vsyncpa %s3792, 1

</llo_original>
